<compile_context>
chip_gen: v5e
topology: v5e:2x2
jax: 0.10.0
libtpu: 0.0.40
codegen_flags: <defaults>
</compile_context>

<pallas_src>
import math

import jax
import jax.numpy as jnp
from jax.experimental import pallas as pl
from jax.experimental.pallas import tpu as pltpu

# ----------------------------- model config ---------------------------------
D_MODEL = 32
N_HEADS = 4
HEAD_DIM = D_MODEL // N_HEADS
FFN_DIM = 64
N_LAYERS = 2
VOCAB = 50
MAX_POS = 64
PAD_ID = 1
LN_EPS = 1e-5

NEG = float(jnp.finfo(jnp.float32).min)
GELU_C = math.sqrt(2.0 / math.pi)


# ------------------------------ fused kernel ---------------------------------
def fused_decoder_kernel(
        # activations / masks
        emb_ref, trih_ref, arth_ref,
        selfm_ref, trim_ref, artm_ref,
        # embedding LayerNorm
        embg_ref, embb_ref,
        # stacked per-layer attention params: (L, 3, ...) with block order
        #   0 = self-attn, 1 = triple cross-attn, 2 = article cross-attn
        wqkv_ref, bqkv_ref, wo_ref, bo_ref, alng_ref, alnb_ref,
        # stacked per-layer FFN params
        w1_ref, b1_ref, w2_ref, b2_ref, flng_ref, flnb_ref,
        # outputs
        hid_ref, selfk_ref, selfv_ref, trik_ref, triv_ref, artk_ref, artv_ref):
    D = D_MODEL

    def layer_norm(x, g, b):
        mu = jnp.mean(x, axis=-1, keepdims=True)
        var = jnp.mean(jnp.square(x - mu), axis=-1, keepdims=True)
        return (x - mu) * jax.lax.rsqrt(var + LN_EPS) * g + b

    def gelu(x):
        # exact tanh formula from the reference; x*x*x instead of pow
        return 0.5 * x * (1.0 + jnp.tanh(GELU_C * (x + 0.044715 * (x * x * x))))

    def mha(x, kv_src, mask, wqkv, bqkv, wo, bo, is_self):
        """x: (Nq, D); kv_src: (Nk, D) or None; mask: (Nq, Nk) block-diagonal.
        Returns (attn_out (Nq, D), k (Nk, D), v (Nk, D)). No 1/sqrt(d) scale,
        matching FactBartMutilHeadAttention."""
        if is_self:
            qkv = jnp.dot(x, wqkv, preferred_element_type=jnp.float32) + bqkv
            q = qkv[:, :D]
            k = qkv[:, D:2 * D]
            v = qkv[:, 2 * D:]
        else:
            q = jnp.dot(x, wqkv[:, :D],
                        preferred_element_type=jnp.float32) + bqkv[:, :D]
            kv = jnp.dot(kv_src, wqkv[:, D:],
                         preferred_element_type=jnp.float32) + bqkv[:, D:]
            k = kv[:, :D]
            v = kv[:, D:]

        acc = None
        for h in range(N_HEADS):           # unrolled; heads stay in lanes
            lo = h * HEAD_DIM
            hi = lo + HEAD_DIM
            qh = q[:, lo:hi]
            kh = k[:, lo:hi]
            vh = v[:, lo:hi]
            # contract over head_dim directly (no kh.T materialisation)
            s = jax.lax.dot_general(qh, kh, (((1,), (1,)), ((), ())),
                                    preferred_element_type=jnp.float32)
            s = s + mask
            s = s - jnp.max(s, axis=-1, keepdims=True)
            p = jnp.exp(s)
            inv_l = pl.reciprocal(jnp.sum(p, axis=-1, keepdims=True),
                                  approx=True)
            # normalise AFTER the PV matmul: (Nq, Dh) muls instead of (Nq, Nk)
            ctx = jnp.dot(p, vh, preferred_element_type=jnp.float32) * inv_l
            # fold the per-head slice of the output projection in directly;
            # summing the partial products == concat(heads) @ wo
            part = jnp.dot(ctx, wo[lo:hi, :],
                           preferred_element_type=jnp.float32)
            acc = part if acc is None else acc + part
        return acc + bo, k, v

    # embedding gather/add was done in glue; apply the embedding LayerNorm here
    hidden = layer_norm(emb_ref[...], embg_ref[...], embb_ref[...])
    tri_h = trih_ref[...]
    art_h = arth_ref[...]
    self_m = selfm_ref[...]
    tri_m = trim_ref[...]
    art_m = artm_ref[...]

    for l in range(N_LAYERS):              # fully unrolled (2 layers)
        # ---- masked causal self-attention ----
        attn_out, k, v = mha(hidden, None, self_m,
                             wqkv_ref[l, 0], bqkv_ref[l, 0],
                             wo_ref[l, 0], bo_ref[l, 0], is_self=True)
        selfk_ref[l] = k
        selfv_ref[l] = v
        hidden = layer_norm(attn_out + hidden, alng_ref[l, 0], alnb_ref[l, 0])

        # ---- triples cross-attention ----
        attn_out, k, v = mha(hidden, tri_h, tri_m,
                             wqkv_ref[l, 1], bqkv_ref[l, 1],
                             wo_ref[l, 1], bo_ref[l, 1], is_self=False)
        trik_ref[l] = k
        triv_ref[l] = v
        hidden = layer_norm(attn_out + hidden, alng_ref[l, 1], alnb_ref[l, 1])

        # ---- article cross-attention ----
        attn_out, k, v = mha(hidden, art_h, art_m,
                             wqkv_ref[l, 2], bqkv_ref[l, 2],
                             wo_ref[l, 2], bo_ref[l, 2], is_self=False)
        artk_ref[l] = k
        artv_ref[l] = v
        hidden = layer_norm(attn_out + hidden, alng_ref[l, 2], alnb_ref[l, 2])

        # ---- feed-forward ----
        ff = gelu(jnp.dot(hidden, w1_ref[l],
                          preferred_element_type=jnp.float32) + b1_ref[l])
        ff = jnp.dot(ff, w2_ref[l],
                     preferred_element_type=jnp.float32) + b2_ref[l]
        hidden = layer_norm(ff + hidden, flng_ref[l], flnb_ref[l])

    hid_ref[...] = hidden


# --------------------------- mask construction (glue) ------------------------
def _expand_mask_pb(mask2d, tgt_len):
    """(B, S) {0,1} mask -> additive (B, tgt_len, S) mask (0 keep / NEG drop)."""
    B, S = mask2d.shape
    expanded = jnp.broadcast_to(mask2d[:, None, :].astype(jnp.float32),
                                (B, tgt_len, S))
    inverted = 1.0 - expanded
    return jnp.where(inverted != 0.0, NEG, inverted)


def _causal_pb(B, T):
    i = jnp.arange(T)[:, None]
    j = jnp.arange(T)[None, :]
    m = jnp.where(j <= i, 0.0, NEG).astype(jnp.float32)
    return jnp.broadcast_to(m[None], (B, T, T))


def _block_diag(per_batch):
    """(B, T, S) per-batch additive mask -> (B*T, B*S) block-diagonal mask
    with NEG on cross-batch entries (batch folded into rows/cols)."""
    B, T, S = per_batch.shape
    same = jnp.arange(B)[:, None] == jnp.arange(B)[None, :]          # (B, B)
    big = jnp.where(same[:, None, :, None], per_batch[:, :, None, :], NEG)
    return big.reshape(B * T, B * S)


# ------------------------------ forward (wrapper) -----------------------------
def fact_bart_decoder_forward(params, input_ids, attention_mask,
                              article_hidden_states, article_attention_mask,
                              triples_hidden_states, triples_attention_mask):
    B, T = input_ids.shape
    S_art = article_hidden_states.shape[1]
    S_tri = triples_hidden_states.shape[1]
    embed_scale = math.sqrt(D_MODEL)

    # TODO(synk): embedding gather + position add stays in XLA (no clean Pallas
    # gather at this size); the embedding LayerNorm runs inside the fused kernel.
    emb = params["embed_tokens"][input_ids] * embed_scale
    emb = emb + params["embed_positions"][:T][None]
    emb = emb.reshape(B * T, D_MODEL)

    # additive masks (clamped so doubly-masked rows can't overflow to -inf)
    self_pb = jnp.maximum(_expand_mask_pb(attention_mask, T) + _causal_pb(B, T),
                          NEG)
    tri_pb = _expand_mask_pb(triples_attention_mask, T)
    art_pb = _expand_mask_pb(article_attention_mask, T)

    self_flat = _block_diag(self_pb)      # (B*T, B*T)
    tri_flat = _block_diag(tri_pb)        # (B*T, B*S_tri)
    art_flat = _block_diag(art_pb)        # (B*T, B*S_art)

    out_shapes = (
        jax.ShapeDtypeStruct((B * T, D_MODEL), jnp.float32),                # hidden
        jax.ShapeDtypeStruct((N_LAYERS, B * T, D_MODEL), jnp.float32),      # self k
        jax.ShapeDtypeStruct((N_LAYERS, B * T, D_MODEL), jnp.float32),      # self v
        jax.ShapeDtypeStruct((N_LAYERS, B * S_tri, D_MODEL), jnp.float32),  # tri k
        jax.ShapeDtypeStruct((N_LAYERS, B * S_tri, D_MODEL), jnp.float32),  # tri v
        jax.ShapeDtypeStruct((N_LAYERS, B * S_art, D_MODEL), jnp.float32),  # art k
        jax.ShapeDtypeStruct((N_LAYERS, B * S_art, D_MODEL), jnp.float32),  # art v
    )

    outs = pl.pallas_call(
        fused_decoder_kernel,
        out_shape=out_shapes,
        compiler_params=pltpu.CompilerParams(vmem_limit_bytes=8 * 1024 * 1024),
    )(emb,
      triples_hidden_states.reshape(B * S_tri, D_MODEL),
      article_hidden_states.reshape(B * S_art, D_MODEL),
      self_flat, tri_flat, art_flat,
      params["emb_ln_g"], params["emb_ln_b"],
      params["attn_wqkv"], params["attn_bqkv"],
      params["attn_wo"], params["attn_bo"],
      params["attn_ln_g"], params["attn_ln_b"],
      params["ffn_w1"], params["ffn_b1"],
      params["ffn_w2"], params["ffn_b2"],
      params["final_ln_g"], params["final_ln_b"])

    hidden_flat, self_k, self_v, tri_k, tri_v, art_k, art_v = outs
    hidden = hidden_flat.reshape(B, T, D_MODEL)

    # reshape lane-dense caches to the reference (B, H, S, Dh) layout (XLA glue)
    def to_bhsd(x, S):
        return x.reshape(N_LAYERS, B, S, N_HEADS, HEAD_DIM).transpose(0, 1, 3, 2, 4)

    self_k = to_bhsd(self_k, T)
    self_v = to_bhsd(self_v, T)
    tri_k = to_bhsd(tri_k, S_tri)
    tri_v = to_bhsd(tri_v, S_tri)
    art_k = to_bhsd(art_k, S_art)
    art_v = to_bhsd(art_v, S_art)

    next_decoder_cache = tuple(
        (self_k[l], self_v[l], tri_k[l], tri_v[l], art_k[l], art_v[l])
        for l in range(N_LAYERS))
    return hidden, next_decoder_cache


# ------------------------------ init & main -----------------------------------
def init_params(key):
    keys = list(jax.random.split(key, 64))
    kit = iter(keys)

    def w(shape, scale=0.02):
        return jax.random.normal(next(kit), shape, jnp.float32) * scale

    embed_tokens = w((VOCAB, D_MODEL))
    embed_tokens = embed_tokens.at[PAD_ID].set(0.0)   # padding_idx row is zero

    L, D, F = N_LAYERS, D_MODEL, FFN_DIM
    return dict(
        embed_tokens=embed_tokens,
        embed_positions=w((MAX_POS, D)),
        emb_ln_g=jnp.ones((1, D), jnp.float32),
        emb_ln_b=jnp.zeros((1, D), jnp.float32),
        # attention blocks stacked: axis0 = layer, axis1 = {self, triple, article}
        attn_wqkv=w((L, 3, D, 3 * D)),                 # wq | wk | wv fused
        attn_bqkv=jnp.zeros((L, 3, 1, 3 * D), jnp.float32),
        attn_wo=w((L, 3, D, D)),
        attn_bo=jnp.zeros((L, 3, 1, D), jnp.float32),
        attn_ln_g=jnp.ones((L, 3, 1, D), jnp.float32),
        attn_ln_b=jnp.zeros((L, 3, 1, D), jnp.float32),
        ffn_w1=w((L, D, F)),
        ffn_b1=jnp.zeros((L, 1, F), jnp.float32),
        ffn_w2=w((L, F, D)),
        ffn_b2=jnp.zeros((L, 1, D), jnp.float32),
        final_ln_g=jnp.ones((L, 1, D), jnp.float32),
        final_ln_b=jnp.zeros((L, 1, D), jnp.float32),
    )


if __name__ == "__main__":
    key = jax.random.PRNGKey(0)
    k_param, k_ids, k_art, k_tri = jax.random.split(key, 4)

    B, T = 2, 8        # target (decoder) sequence
    S_ART = 16         # article encoder length
    S_TRI = 8          # triples encoder length

    params = init_params(k_param)

    input_ids = jax.random.randint(k_ids, (B, T), 2, VOCAB, dtype=jnp.int32)
    attention_mask = jnp.ones((B, T), jnp.float32)

    article_hidden_states = jax.random.normal(k_art, (B, S_ART, D_MODEL), jnp.float32)
    article_attention_mask = jnp.ones((B, S_ART), jnp.float32).at[1, -3:].set(0.0)

    triples_hidden_states = jax.random.normal(k_tri, (B, S_TRI, D_MODEL), jnp.float32)
    triples_attention_mask = jnp.ones((B, S_TRI), jnp.float32).at[0, -1].set(0.0)

    forward = jax.jit(fact_bart_decoder_forward)
    hidden, cache = forward(
        params, input_ids, attention_mask,
        article_hidden_states, article_attention_mask,
        triples_hidden_states, triples_attention_mask)

    hidden = jax.block_until_ready(hidden)
    jax.block_until_ready(cache)

    assert hidden.shape == (B, T, D_MODEL)
    assert jnp.all(jnp.isfinite(hidden))
    assert len(cache) == N_LAYERS and len(cache[0]) == 6
    assert cache[0][0].shape == (B, N_HEADS, T, HEAD_DIM)
    print("KERNEL_OK")
</pallas_src>

<mosaic_0001>
module attributes {stable_mosaic.version = 11 : i64} {
  func.func @fused_decoder_kernel(%arg0: memref<16x32xf32, #tpu.memory_space<vmem>>, %arg1: memref<16x32xf32, #tpu.memory_space<vmem>>, %arg2: memref<32x32xf32, #tpu.memory_space<vmem>>, %arg3: memref<16x16xf32, #tpu.memory_space<vmem>>, %arg4: memref<16x16xf32, #tpu.memory_space<vmem>>, %arg5: memref<16x32xf32, #tpu.memory_space<vmem>>, %arg6: memref<1x32xf32, #tpu.memory_space<vmem>>, %arg7: memref<1x32xf32, #tpu.memory_space<vmem>>, %arg8: memref<2x3x32x96xf32, #tpu.memory_space<vmem>>, %arg9: memref<2x3x1x96xf32, #tpu.memory_space<vmem>>, %arg10: memref<2x3x32x32xf32, #tpu.memory_space<vmem>>, %arg11: memref<2x3x1x32xf32, #tpu.memory_space<vmem>>, %arg12: memref<2x3x1x32xf32, #tpu.memory_space<vmem>>, %arg13: memref<2x3x1x32xf32, #tpu.memory_space<vmem>>, %arg14: memref<2x32x64xf32, #tpu.memory_space<vmem>>, %arg15: memref<2x1x64xf32, #tpu.memory_space<vmem>>, %arg16: memref<2x64x32xf32, #tpu.memory_space<vmem>>, %arg17: memref<2x1x32xf32, #tpu.memory_space<vmem>>, %arg18: memref<2x1x32xf32, #tpu.memory_space<vmem>>, %arg19: memref<2x1x32xf32, #tpu.memory_space<vmem>>, %arg20: memref<16x32xf32, #tpu.memory_space<vmem>>, %arg21: memref<2x16x32xf32, #tpu.memory_space<vmem>>, %arg22: memref<2x16x32xf32, #tpu.memory_space<vmem>>, %arg23: memref<2x16x32xf32, #tpu.memory_space<vmem>>, %arg24: memref<2x16x32xf32, #tpu.memory_space<vmem>>, %arg25: memref<2x32x32xf32, #tpu.memory_space<vmem>>, %arg26: memref<2x32x32xf32, #tpu.memory_space<vmem>>) attributes {dimension_semantics = [], scalar_prefetch = 0 : i64, scratch_operands = 0 : i64, tpu.core_type = #tpu.core_type<tc>} {
    %c0 = arith.constant 0 : index
    %c0_0 = arith.constant 0 : index
    %0 = vector.load %arg0[%c0, %c0_0] : memref<16x32xf32, #tpu.memory_space<vmem>>, vector<16x32xf32>
    %c0_1 = arith.constant 0 : index
    %c0_2 = arith.constant 0 : index
    %1 = vector.load %arg6[%c0_1, %c0_2] : memref<1x32xf32, #tpu.memory_space<vmem>>, vector<1x32xf32>
    %c0_3 = arith.constant 0 : index
    %c0_4 = arith.constant 0 : index
    %2 = vector.load %arg7[%c0_3, %c0_4] : memref<1x32xf32, #tpu.memory_space<vmem>>, vector<1x32xf32>
    %cst = arith.constant dense<0.000000e+00> : vector<16xf32>
    %3 = vector.multi_reduction <add>, %0, %cst [1] : vector<16x32xf32> to vector<16xf32>
    %4 = vector.shape_cast %3 : vector<16xf32> to vector<16x1xf32>
    %cst_5 = arith.constant 3.200000e+01 : f32
    %5 = vector.broadcast %cst_5 : f32 to vector<16x1xf32>
    %6 = arith.divf %4, %5 : vector<16x1xf32>
    %7 = vector.broadcast %6 : vector<16x1xf32> to vector<16x32xf32>
    %8 = arith.subf %0, %7 : vector<16x32xf32>
    %9 = arith.mulf %8, %8 : vector<16x32xf32>
    %cst_6 = arith.constant dense<0.000000e+00> : vector<16xf32>
    %10 = vector.multi_reduction <add>, %9, %cst_6 [1] : vector<16x32xf32> to vector<16xf32>
    %11 = vector.shape_cast %10 : vector<16xf32> to vector<16x1xf32>
    %cst_7 = arith.constant 3.200000e+01 : f32
    %12 = vector.broadcast %cst_7 : f32 to vector<16x1xf32>
    %13 = arith.divf %11, %12 : vector<16x1xf32>
    %14 = vector.broadcast %6 : vector<16x1xf32> to vector<16x32xf32>
    %15 = arith.subf %0, %14 : vector<16x32xf32>
    %cst_8 = arith.constant 9.99999974E-6 : f32
    %16 = vector.broadcast %cst_8 : f32 to vector<16x1xf32>
    %17 = arith.addf %13, %16 : vector<16x1xf32>
    %18 = math.rsqrt %17 : vector<16x1xf32>
    %19 = vector.broadcast %18 : vector<16x1xf32> to vector<16x32xf32>
    %20 = arith.mulf %15, %19 : vector<16x32xf32>
    %21 = vector.broadcast %1 : vector<1x32xf32> to vector<16x32xf32>
    %22 = arith.mulf %20, %21 : vector<16x32xf32>
    %23 = vector.broadcast %2 : vector<1x32xf32> to vector<16x32xf32>
    %24 = arith.addf %22, %23 : vector<16x32xf32>
    %c0_9 = arith.constant 0 : index
    %c0_10 = arith.constant 0 : index
    %25 = vector.load %arg1[%c0_9, %c0_10] : memref<16x32xf32, #tpu.memory_space<vmem>>, vector<16x32xf32>
    %c0_11 = arith.constant 0 : index
    %c0_12 = arith.constant 0 : index
    %26 = vector.load %arg2[%c0_11, %c0_12] : memref<32x32xf32, #tpu.memory_space<vmem>>, vector<32x32xf32>
    %c0_13 = arith.constant 0 : index
    %c0_14 = arith.constant 0 : index
    %27 = vector.load %arg3[%c0_13, %c0_14] : memref<16x16xf32, #tpu.memory_space<vmem>>, vector<16x16xf32>
    %c0_15 = arith.constant 0 : index
    %c0_16 = arith.constant 0 : index
    %28 = vector.load %arg4[%c0_15, %c0_16] : memref<16x16xf32, #tpu.memory_space<vmem>>, vector<16x16xf32>
    %c0_17 = arith.constant 0 : index
    %c0_18 = arith.constant 0 : index
    %29 = vector.load %arg5[%c0_17, %c0_18] : memref<16x32xf32, #tpu.memory_space<vmem>>, vector<16x32xf32>
    %c0_19 = arith.constant 0 : index
    %c0_20 = arith.constant 0 : index
    %c0_21 = arith.constant 0 : index
    %c0_22 = arith.constant 0 : index
    %30 = vector.load %arg8[%c0_19, %c0_20, %c0_21, %c0_22] : memref<2x3x32x96xf32, #tpu.memory_space<vmem>>, vector<1x1x32x96xf32>
    %31 = vector.shape_cast %30 : vector<1x1x32x96xf32> to vector<32x96xf32>
    %c0_23 = arith.constant 0 : index
    %c0_24 = arith.constant 0 : index
    %c0_25 = arith.constant 0 : index
    %c0_26 = arith.constant 0 : index
    %32 = vector.load %arg9[%c0_23, %c0_24, %c0_25, %c0_26] : memref<2x3x1x96xf32, #tpu.memory_space<vmem>>, vector<1x1x1x96xf32>
    %33 = vector.shape_cast %32 : vector<1x1x1x96xf32> to vector<1x96xf32>
    %c0_27 = arith.constant 0 : index
    %c0_28 = arith.constant 0 : index
    %c0_29 = arith.constant 0 : index
    %c0_30 = arith.constant 0 : index
    %34 = vector.load %arg10[%c0_27, %c0_28, %c0_29, %c0_30] : memref<2x3x32x32xf32, #tpu.memory_space<vmem>>, vector<1x1x32x32xf32>
    %35 = vector.shape_cast %34 : vector<1x1x32x32xf32> to vector<32x32xf32>
    %c0_31 = arith.constant 0 : index
    %c0_32 = arith.constant 0 : index
    %c0_33 = arith.constant 0 : index
    %c0_34 = arith.constant 0 : index
    %36 = vector.load %arg11[%c0_31, %c0_32, %c0_33, %c0_34] : memref<2x3x1x32xf32, #tpu.memory_space<vmem>>, vector<1x1x1x32xf32>
    %37 = vector.shape_cast %36 : vector<1x1x1x32xf32> to vector<1x32xf32>
    %cst_35 = arith.constant dense<0.000000e+00> : vector<16x96xf32>
    %38 = tpu.matmul %24, %31, %cst_35 {dimension_numbers = #tpu.dot_dimension_numbers<[1], [0], [0], [1], [0, 0, 1, 1], [], []>} : vector<16x32xf32>, vector<32x96xf32>, vector<16x96xf32> -> vector<16x96xf32>
    %39 = vector.broadcast %33 : vector<1x96xf32> to vector<16x96xf32>
    %40 = arith.addf %38, %39 : vector<16x96xf32>
    %41 = vector.extract_strided_slice %40 {offsets = [0, 0], sizes = [16, 32], strides = [1, 1]} : vector<16x96xf32> to vector<16x32xf32>
    %42 = vector.extract_strided_slice %40 {offsets = [0, 32], sizes = [16, 32], strides = [1, 1]} : vector<16x96xf32> to vector<16x32xf32>
    %43 = vector.extract_strided_slice %40 {offsets = [0, 64], sizes = [16, 32], strides = [1, 1]} : vector<16x96xf32> to vector<16x32xf32>
    %44 = vector.extract_strided_slice %41 {offsets = [0, 0], sizes = [16, 8], strides = [1, 1]} : vector<16x32xf32> to vector<16x8xf32>
    %45 = vector.extract_strided_slice %42 {offsets = [0, 0], sizes = [16, 8], strides = [1, 1]} : vector<16x32xf32> to vector<16x8xf32>
    %46 = vector.extract_strided_slice %43 {offsets = [0, 0], sizes = [16, 8], strides = [1, 1]} : vector<16x32xf32> to vector<16x8xf32>
    %cst_36 = arith.constant dense<0.000000e+00> : vector<16x16xf32>
    %47 = tpu.matmul %44, %45, %cst_36 {dimension_numbers = #tpu.dot_dimension_numbers<[1], [1], [0], [0], [0, 0, 1, 0], [], []>} : vector<16x8xf32>, vector<16x8xf32>, vector<16x16xf32> -> vector<16x16xf32>
    %48 = arith.addf %47, %27 : vector<16x16xf32>
    %cst_37 = arith.constant dense<0xFF800000> : vector<16xf32>
    %49 = vector.multi_reduction <maximumf>, %48, %cst_37 [1] : vector<16x16xf32> to vector<16xf32>
    %50 = vector.shape_cast %49 : vector<16xf32> to vector<16x1xf32>
    %51 = vector.broadcast %50 : vector<16x1xf32> to vector<16x16xf32>
    %52 = arith.subf %48, %51 : vector<16x16xf32>
    %53 = math.exp %52 : vector<16x16xf32>
    %cst_38 = arith.constant dense<0.000000e+00> : vector<16xf32>
    %54 = vector.multi_reduction <add>, %53, %cst_38 [1] : vector<16x16xf32> to vector<16xf32>
    %55 = vector.shape_cast %54 : vector<16xf32> to vector<16x1xf32>
    %56 = tpu.reciprocal %55 {approx = true} : vector<16x1xf32> -> vector<16x1xf32>
    %cst_39 = arith.constant dense<0.000000e+00> : vector<16x8xf32>
    %57 = tpu.matmul %53, %46, %cst_39 {dimension_numbers = #tpu.dot_dimension_numbers<[1], [0], [0], [1], [0, 0, 1, 1], [], []>} : vector<16x16xf32>, vector<16x8xf32>, vector<16x8xf32> -> vector<16x8xf32>
    %58 = vector.broadcast %56 : vector<16x1xf32> to vector<16x8xf32>
    %59 = arith.mulf %57, %58 : vector<16x8xf32>
    %60 = vector.extract_strided_slice %35 {offsets = [0, 0], sizes = [8, 32], strides = [1, 1]} : vector<32x32xf32> to vector<8x32xf32>
    %cst_40 = arith.constant dense<0.000000e+00> : vector<16x32xf32>
    %61 = tpu.matmul %59, %60, %cst_40 {dimension_numbers = #tpu.dot_dimension_numbers<[1], [0], [0], [1], [0, 0, 1, 1], [], []>} : vector<16x8xf32>, vector<8x32xf32>, vector<16x32xf32> -> vector<16x32xf32>
    %62 = vector.extract_strided_slice %41 {offsets = [0, 8], sizes = [16, 8], strides = [1, 1]} : vector<16x32xf32> to vector<16x8xf32>
    %63 = vector.extract_strided_slice %42 {offsets = [0, 8], sizes = [16, 8], strides = [1, 1]} : vector<16x32xf32> to vector<16x8xf32>
    %64 = vector.extract_strided_slice %43 {offsets = [0, 8], sizes = [16, 8], strides = [1, 1]} : vector<16x32xf32> to vector<16x8xf32>
    %cst_41 = arith.constant dense<0.000000e+00> : vector<16x16xf32>
    %65 = tpu.matmul %62, %63, %cst_41 {dimension_numbers = #tpu.dot_dimension_numbers<[1], [1], [0], [0], [0, 0, 1, 0], [], []>} : vector<16x8xf32>, vector<16x8xf32>, vector<16x16xf32> -> vector<16x16xf32>
    %66 = arith.addf %65, %27 : vector<16x16xf32>
    %cst_42 = arith.constant dense<0xFF800000> : vector<16xf32>
    %67 = vector.multi_reduction <maximumf>, %66, %cst_42 [1] : vector<16x16xf32> to vector<16xf32>
    %68 = vector.shape_cast %67 : vector<16xf32> to vector<16x1xf32>
    %69 = vector.broadcast %68 : vector<16x1xf32> to vector<16x16xf32>
    %70 = arith.subf %66, %69 : vector<16x16xf32>
    %71 = math.exp %70 : vector<16x16xf32>
    %cst_43 = arith.constant dense<0.000000e+00> : vector<16xf32>
    %72 = vector.multi_reduction <add>, %71, %cst_43 [1] : vector<16x16xf32> to vector<16xf32>
    %73 = vector.shape_cast %72 : vector<16xf32> to vector<16x1xf32>
    %74 = tpu.reciprocal %73 {approx = true} : vector<16x1xf32> -> vector<16x1xf32>
    %cst_44 = arith.constant dense<0.000000e+00> : vector<16x8xf32>
    %75 = tpu.matmul %71, %64, %cst_44 {dimension_numbers = #tpu.dot_dimension_numbers<[1], [0], [0], [1], [0, 0, 1, 1], [], []>} : vector<16x16xf32>, vector<16x8xf32>, vector<16x8xf32> -> vector<16x8xf32>
    %76 = vector.broadcast %74 : vector<16x1xf32> to vector<16x8xf32>
    %77 = arith.mulf %75, %76 : vector<16x8xf32>
    %78 = vector.extract_strided_slice %35 {offsets = [8, 0], sizes = [8, 32], strides = [1, 1]} : vector<32x32xf32> to vector<8x32xf32>
    %cst_45 = arith.constant dense<0.000000e+00> : vector<16x32xf32>
    %79 = tpu.matmul %77, %78, %cst_45 {dimension_numbers = #tpu.dot_dimension_numbers<[1], [0], [0], [1], [0, 0, 1, 1], [], []>} : vector<16x8xf32>, vector<8x32xf32>, vector<16x32xf32> -> vector<16x32xf32>
    %80 = arith.addf %61, %79 : vector<16x32xf32>
    %81 = vector.extract_strided_slice %41 {offsets = [0, 16], sizes = [16, 8], strides = [1, 1]} : vector<16x32xf32> to vector<16x8xf32>
    %82 = vector.extract_strided_slice %42 {offsets = [0, 16], sizes = [16, 8], strides = [1, 1]} : vector<16x32xf32> to vector<16x8xf32>
    %83 = vector.extract_strided_slice %43 {offsets = [0, 16], sizes = [16, 8], strides = [1, 1]} : vector<16x32xf32> to vector<16x8xf32>
    %cst_46 = arith.constant dense<0.000000e+00> : vector<16x16xf32>
    %84 = tpu.matmul %81, %82, %cst_46 {dimension_numbers = #tpu.dot_dimension_numbers<[1], [1], [0], [0], [0, 0, 1, 0], [], []>} : vector<16x8xf32>, vector<16x8xf32>, vector<16x16xf32> -> vector<16x16xf32>
    %85 = arith.addf %84, %27 : vector<16x16xf32>
    %cst_47 = arith.constant dense<0xFF800000> : vector<16xf32>
    %86 = vector.multi_reduction <maximumf>, %85, %cst_47 [1] : vector<16x16xf32> to vector<16xf32>
    %87 = vector.shape_cast %86 : vector<16xf32> to vector<16x1xf32>
    %88 = vector.broadcast %87 : vector<16x1xf32> to vector<16x16xf32>
    %89 = arith.subf %85, %88 : vector<16x16xf32>
    %90 = math.exp %89 : vector<16x16xf32>
    %cst_48 = arith.constant dense<0.000000e+00> : vector<16xf32>
    %91 = vector.multi_reduction <add>, %90, %cst_48 [1] : vector<16x16xf32> to vector<16xf32>
    %92 = vector.shape_cast %91 : vector<16xf32> to vector<16x1xf32>
    %93 = tpu.reciprocal %92 {approx = true} : vector<16x1xf32> -> vector<16x1xf32>
    %cst_49 = arith.constant dense<0.000000e+00> : vector<16x8xf32>
    %94 = tpu.matmul %90, %83, %cst_49 {dimension_numbers = #tpu.dot_dimension_numbers<[1], [0], [0], [1], [0, 0, 1, 1], [], []>} : vector<16x16xf32>, vector<16x8xf32>, vector<16x8xf32> -> vector<16x8xf32>
    %95 = vector.broadcast %93 : vector<16x1xf32> to vector<16x8xf32>
    %96 = arith.mulf %94, %95 : vector<16x8xf32>
    %97 = vector.extract_strided_slice %35 {offsets = [16, 0], sizes = [8, 32], strides = [1, 1]} : vector<32x32xf32> to vector<8x32xf32>
    %cst_50 = arith.constant dense<0.000000e+00> : vector<16x32xf32>
    %98 = tpu.matmul %96, %97, %cst_50 {dimension_numbers = #tpu.dot_dimension_numbers<[1], [0], [0], [1], [0, 0, 1, 1], [], []>} : vector<16x8xf32>, vector<8x32xf32>, vector<16x32xf32> -> vector<16x32xf32>
    %99 = arith.addf %80, %98 : vector<16x32xf32>
    %100 = vector.extract_strided_slice %41 {offsets = [0, 24], sizes = [16, 8], strides = [1, 1]} : vector<16x32xf32> to vector<16x8xf32>
    %101 = vector.extract_strided_slice %42 {offsets = [0, 24], sizes = [16, 8], strides = [1, 1]} : vector<16x32xf32> to vector<16x8xf32>
    %102 = vector.extract_strided_slice %43 {offsets = [0, 24], sizes = [16, 8], strides = [1, 1]} : vector<16x32xf32> to vector<16x8xf32>
    %cst_51 = arith.constant dense<0.000000e+00> : vector<16x16xf32>
    %103 = tpu.matmul %100, %101, %cst_51 {dimension_numbers = #tpu.dot_dimension_numbers<[1], [1], [0], [0], [0, 0, 1, 0], [], []>} : vector<16x8xf32>, vector<16x8xf32>, vector<16x16xf32> -> vector<16x16xf32>
    %104 = arith.addf %103, %27 : vector<16x16xf32>
    %cst_52 = arith.constant dense<0xFF800000> : vector<16xf32>
    %105 = vector.multi_reduction <maximumf>, %104, %cst_52 [1] : vector<16x16xf32> to vector<16xf32>
    %106 = vector.shape_cast %105 : vector<16xf32> to vector<16x1xf32>
    %107 = vector.broadcast %106 : vector<16x1xf32> to vector<16x16xf32>
    %108 = arith.subf %104, %107 : vector<16x16xf32>
    %109 = math.exp %108 : vector<16x16xf32>
    %cst_53 = arith.constant dense<0.000000e+00> : vector<16xf32>
    %110 = vector.multi_reduction <add>, %109, %cst_53 [1] : vector<16x16xf32> to vector<16xf32>
    %111 = vector.shape_cast %110 : vector<16xf32> to vector<16x1xf32>
    %112 = tpu.reciprocal %111 {approx = true} : vector<16x1xf32> -> vector<16x1xf32>
    %cst_54 = arith.constant dense<0.000000e+00> : vector<16x8xf32>
    %113 = tpu.matmul %109, %102, %cst_54 {dimension_numbers = #tpu.dot_dimension_numbers<[1], [0], [0], [1], [0, 0, 1, 1], [], []>} : vector<16x16xf32>, vector<16x8xf32>, vector<16x8xf32> -> vector<16x8xf32>
    %114 = vector.broadcast %112 : vector<16x1xf32> to vector<16x8xf32>
    %115 = arith.mulf %113, %114 : vector<16x8xf32>
    %116 = vector.extract_strided_slice %35 {offsets = [24, 0], sizes = [8, 32], strides = [1, 1]} : vector<32x32xf32> to vector<8x32xf32>
    %cst_55 = arith.constant dense<0.000000e+00> : vector<16x32xf32>
    %117 = tpu.matmul %115, %116, %cst_55 {dimension_numbers = #tpu.dot_dimension_numbers<[1], [0], [0], [1], [0, 0, 1, 1], [], []>} : vector<16x8xf32>, vector<8x32xf32>, vector<16x32xf32> -> vector<16x32xf32>
    %118 = arith.addf %99, %117 : vector<16x32xf32>
    %119 = vector.broadcast %37 : vector<1x32xf32> to vector<16x32xf32>
    %120 = arith.addf %118, %119 : vector<16x32xf32>
    %c0_56 = arith.constant 0 : index
    %c0_57 = arith.constant 0 : index
    %c0_58 = arith.constant 0 : index
    %121 = vector.load %arg21[%c0_56, %c0_57, %c0_58] : memref<2x16x32xf32, #tpu.memory_space<vmem>>, vector<1x16x32xf32>
    %122 = vector.shape_cast %121 : vector<1x16x32xf32> to vector<16x32xf32>
    %123 = vector.shape_cast %42 : vector<16x32xf32> to vector<1x16x32xf32>
    tpu.vector_store %arg21[%c0_56, %c0_57, %c0_58], %123 {strides = array<i32>} : memref<2x16x32xf32, #tpu.memory_space<vmem>>, vector<1x16x32xf32>,
    %c0_59 = arith.constant 0 : index
    %c0_60 = arith.constant 0 : index
    %c0_61 = arith.constant 0 : index
    %124 = vector.load %arg22[%c0_59, %c0_60, %c0_61] : memref<2x16x32xf32, #tpu.memory_space<vmem>>, vector<1x16x32xf32>
    %125 = vector.shape_cast %124 : vector<1x16x32xf32> to vector<16x32xf32>
    %126 = vector.shape_cast %43 : vector<16x32xf32> to vector<1x16x32xf32>
    tpu.vector_store %arg22[%c0_59, %c0_60, %c0_61], %126 {strides = array<i32>} : memref<2x16x32xf32, #tpu.memory_space<vmem>>, vector<1x16x32xf32>,
    %127 = arith.addf %120, %24 : vector<16x32xf32>
    %c0_62 = arith.constant 0 : index
    %c0_63 = arith.constant 0 : index
    %c0_64 = arith.constant 0 : index
    %c0_65 = arith.constant 0 : index
    %128 = vector.load %arg12[%c0_62, %c0_63, %c0_64, %c0_65] : memref<2x3x1x32xf32, #tpu.memory_space<vmem>>, vector<1x1x1x32xf32>
    %129 = vector.shape_cast %128 : vector<1x1x1x32xf32> to vector<1x32xf32>
    %c0_66 = arith.constant 0 : index
    %c0_67 = arith.constant 0 : index
    %c0_68 = arith.constant 0 : index
    %c0_69 = arith.constant 0 : index
    %130 = vector.load %arg13[%c0_66, %c0_67, %c0_68, %c0_69] : memref<2x3x1x32xf32, #tpu.memory_space<vmem>>, vector<1x1x1x32xf32>
    %131 = vector.shape_cast %130 : vector<1x1x1x32xf32> to vector<1x32xf32>
    %cst_70 = arith.constant dense<0.000000e+00> : vector<16xf32>
    %132 = vector.multi_reduction <add>, %127, %cst_70 [1] : vector<16x32xf32> to vector<16xf32>
    %133 = vector.shape_cast %132 : vector<16xf32> to vector<16x1xf32>
    %cst_71 = arith.constant 3.200000e+01 : f32
    %134 = vector.broadcast %cst_71 : f32 to vector<16x1xf32>
    %135 = arith.divf %133, %134 : vector<16x1xf32>
    %136 = vector.broadcast %135 : vector<16x1xf32> to vector<16x32xf32>
    %137 = arith.subf %127, %136 : vector<16x32xf32>
    %138 = arith.mulf %137, %137 : vector<16x32xf32>
    %cst_72 = arith.constant dense<0.000000e+00> : vector<16xf32>
    %139 = vector.multi_reduction <add>, %138, %cst_72 [1] : vector<16x32xf32> to vector<16xf32>
    %140 = vector.shape_cast %139 : vector<16xf32> to vector<16x1xf32>
    %cst_73 = arith.constant 3.200000e+01 : f32
    %141 = vector.broadcast %cst_73 : f32 to vector<16x1xf32>
    %142 = arith.divf %140, %141 : vector<16x1xf32>
    %143 = vector.broadcast %135 : vector<16x1xf32> to vector<16x32xf32>
    %144 = arith.subf %127, %143 : vector<16x32xf32>
    %cst_74 = arith.constant 9.99999974E-6 : f32
    %145 = vector.broadcast %cst_74 : f32 to vector<16x1xf32>
    %146 = arith.addf %142, %145 : vector<16x1xf32>
    %147 = math.rsqrt %146 : vector<16x1xf32>
    %148 = vector.broadcast %147 : vector<16x1xf32> to vector<16x32xf32>
    %149 = arith.mulf %144, %148 : vector<16x32xf32>
    %150 = vector.broadcast %129 : vector<1x32xf32> to vector<16x32xf32>
    %151 = arith.mulf %149, %150 : vector<16x32xf32>
    %152 = vector.broadcast %131 : vector<1x32xf32> to vector<16x32xf32>
    %153 = arith.addf %151, %152 : vector<16x32xf32>
    %c0_75 = arith.constant 0 : index
    %c1 = arith.constant 1 : index
    %c0_76 = arith.constant 0 : index
    %c0_77 = arith.constant 0 : index
    %154 = vector.load %arg8[%c0_75, %c1, %c0_76, %c0_77] : memref<2x3x32x96xf32, #tpu.memory_space<vmem>>, vector<1x1x32x96xf32>
    %155 = vector.shape_cast %154 : vector<1x1x32x96xf32> to vector<32x96xf32>
    %c0_78 = arith.constant 0 : index
    %c1_79 = arith.constant 1 : index
    %c0_80 = arith.constant 0 : index
    %c0_81 = arith.constant 0 : index
    %156 = vector.load %arg9[%c0_78, %c1_79, %c0_80, %c0_81] : memref<2x3x1x96xf32, #tpu.memory_space<vmem>>, vector<1x1x1x96xf32>
    %157 = vector.shape_cast %156 : vector<1x1x1x96xf32> to vector<1x96xf32>
    %c0_82 = arith.constant 0 : index
    %c1_83 = arith.constant 1 : index
    %c0_84 = arith.constant 0 : index
    %c0_85 = arith.constant 0 : index
    %158 = vector.load %arg10[%c0_82, %c1_83, %c0_84, %c0_85] : memref<2x3x32x32xf32, #tpu.memory_space<vmem>>, vector<1x1x32x32xf32>
    %159 = vector.shape_cast %158 : vector<1x1x32x32xf32> to vector<32x32xf32>
    %c0_86 = arith.constant 0 : index
    %c1_87 = arith.constant 1 : index
    %c0_88 = arith.constant 0 : index
    %c0_89 = arith.constant 0 : index
    %160 = vector.load %arg11[%c0_86, %c1_87, %c0_88, %c0_89] : memref<2x3x1x32xf32, #tpu.memory_space<vmem>>, vector<1x1x1x32xf32>
    %161 = vector.shape_cast %160 : vector<1x1x1x32xf32> to vector<1x32xf32>
    %162 = vector.extract_strided_slice %155 {offsets = [0, 0], sizes = [32, 32], strides = [1, 1]} : vector<32x96xf32> to vector<32x32xf32>
    %cst_90 = arith.constant dense<0.000000e+00> : vector<16x32xf32>
    %163 = tpu.matmul %153, %162, %cst_90 {dimension_numbers = #tpu.dot_dimension_numbers<[1], [0], [0], [1], [0, 0, 1, 1], [], []>} : vector<16x32xf32>, vector<32x32xf32>, vector<16x32xf32> -> vector<16x32xf32>
    %164 = vector.extract_strided_slice %157 {offsets = [0, 0], sizes = [1, 32], strides = [1, 1]} : vector<1x96xf32> to vector<1x32xf32>
    %165 = vector.broadcast %164 : vector<1x32xf32> to vector<16x32xf32>
    %166 = arith.addf %163, %165 : vector<16x32xf32>
    %167 = vector.extract_strided_slice %155 {offsets = [0, 32], sizes = [32, 64], strides = [1, 1]} : vector<32x96xf32> to vector<32x64xf32>
    %cst_91 = arith.constant dense<0.000000e+00> : vector<16x64xf32>
    %168 = tpu.matmul %25, %167, %cst_91 {dimension_numbers = #tpu.dot_dimension_numbers<[1], [0], [0], [1], [0, 0, 1, 1], [], []>} : vector<16x32xf32>, vector<32x64xf32>, vector<16x64xf32> -> vector<16x64xf32>
    %169 = vector.extract_strided_slice %157 {offsets = [0, 32], sizes = [1, 64], strides = [1, 1]} : vector<1x96xf32> to vector<1x64xf32>
    %170 = vector.broadcast %169 : vector<1x64xf32> to vector<16x64xf32>
    %171 = arith.addf %168, %170 : vector<16x64xf32>
    %172 = vector.extract_strided_slice %171 {offsets = [0, 0], sizes = [16, 32], strides = [1, 1]} : vector<16x64xf32> to vector<16x32xf32>
    %173 = vector.extract_strided_slice %171 {offsets = [0, 32], sizes = [16, 32], strides = [1, 1]} : vector<16x64xf32> to vector<16x32xf32>
    %174 = vector.extract_strided_slice %166 {offsets = [0, 0], sizes = [16, 8], strides = [1, 1]} : vector<16x32xf32> to vector<16x8xf32>
    %175 = vector.extract_strided_slice %172 {offsets = [0, 0], sizes = [16, 8], strides = [1, 1]} : vector<16x32xf32> to vector<16x8xf32>
    %176 = vector.extract_strided_slice %173 {offsets = [0, 0], sizes = [16, 8], strides = [1, 1]} : vector<16x32xf32> to vector<16x8xf32>
    %cst_92 = arith.constant dense<0.000000e+00> : vector<16x16xf32>
    %177 = tpu.matmul %174, %175, %cst_92 {dimension_numbers = #tpu.dot_dimension_numbers<[1], [1], [0], [0], [0, 0, 1, 0], [], []>} : vector<16x8xf32>, vector<16x8xf32>, vector<16x16xf32> -> vector<16x16xf32>
    %178 = arith.addf %177, %28 : vector<16x16xf32>
    %cst_93 = arith.constant dense<0xFF800000> : vector<16xf32>
    %179 = vector.multi_reduction <maximumf>, %178, %cst_93 [1] : vector<16x16xf32> to vector<16xf32>
    %180 = vector.shape_cast %179 : vector<16xf32> to vector<16x1xf32>
    %181 = vector.broadcast %180 : vector<16x1xf32> to vector<16x16xf32>
    %182 = arith.subf %178, %181 : vector<16x16xf32>
    %183 = math.exp %182 : vector<16x16xf32>
    %cst_94 = arith.constant dense<0.000000e+00> : vector<16xf32>
    %184 = vector.multi_reduction <add>, %183, %cst_94 [1] : vector<16x16xf32> to vector<16xf32>
    %185 = vector.shape_cast %184 : vector<16xf32> to vector<16x1xf32>
    %186 = tpu.reciprocal %185 {approx = true} : vector<16x1xf32> -> vector<16x1xf32>
    %cst_95 = arith.constant dense<0.000000e+00> : vector<16x8xf32>
    %187 = tpu.matmul %183, %176, %cst_95 {dimension_numbers = #tpu.dot_dimension_numbers<[1], [0], [0], [1], [0, 0, 1, 1], [], []>} : vector<16x16xf32>, vector<16x8xf32>, vector<16x8xf32> -> vector<16x8xf32>
    %188 = vector.broadcast %186 : vector<16x1xf32> to vector<16x8xf32>
    %189 = arith.mulf %187, %188 : vector<16x8xf32>
    %190 = vector.extract_strided_slice %159 {offsets = [0, 0], sizes = [8, 32], strides = [1, 1]} : vector<32x32xf32> to vector<8x32xf32>
    %cst_96 = arith.constant dense<0.000000e+00> : vector<16x32xf32>
    %191 = tpu.matmul %189, %190, %cst_96 {dimension_numbers = #tpu.dot_dimension_numbers<[1], [0], [0], [1], [0, 0, 1, 1], [], []>} : vector<16x8xf32>, vector<8x32xf32>, vector<16x32xf32> -> vector<16x32xf32>
    %192 = vector.extract_strided_slice %166 {offsets = [0, 8], sizes = [16, 8], strides = [1, 1]} : vector<16x32xf32> to vector<16x8xf32>
    %193 = vector.extract_strided_slice %172 {offsets = [0, 8], sizes = [16, 8], strides = [1, 1]} : vector<16x32xf32> to vector<16x8xf32>
    %194 = vector.extract_strided_slice %173 {offsets = [0, 8], sizes = [16, 8], strides = [1, 1]} : vector<16x32xf32> to vector<16x8xf32>
    %cst_97 = arith.constant dense<0.000000e+00> : vector<16x16xf32>
    %195 = tpu.matmul %192, %193, %cst_97 {dimension_numbers = #tpu.dot_dimension_numbers<[1], [1], [0], [0], [0, 0, 1, 0], [], []>} : vector<16x8xf32>, vector<16x8xf32>, vector<16x16xf32> -> vector<16x16xf32>
    %196 = arith.addf %195, %28 : vector<16x16xf32>
    %cst_98 = arith.constant dense<0xFF800000> : vector<16xf32>
    %197 = vector.multi_reduction <maximumf>, %196, %cst_98 [1] : vector<16x16xf32> to vector<16xf32>
    %198 = vector.shape_cast %197 : vector<16xf32> to vector<16x1xf32>
    %199 = vector.broadcast %198 : vector<16x1xf32> to vector<16x16xf32>
    %200 = arith.subf %196, %199 : vector<16x16xf32>
    %201 = math.exp %200 : vector<16x16xf32>
    %cst_99 = arith.constant dense<0.000000e+00> : vector<16xf32>
    %202 = vector.multi_reduction <add>, %201, %cst_99 [1] : vector<16x16xf32> to vector<16xf32>
    %203 = vector.shape_cast %202 : vector<16xf32> to vector<16x1xf32>
    %204 = tpu.reciprocal %203 {approx = true} : vector<16x1xf32> -> vector<16x1xf32>
    %cst_100 = arith.constant dense<0.000000e+00> : vector<16x8xf32>
    %205 = tpu.matmul %201, %194, %cst_100 {dimension_numbers = #tpu.dot_dimension_numbers<[1], [0], [0], [1], [0, 0, 1, 1], [], []>} : vector<16x16xf32>, vector<16x8xf32>, vector<16x8xf32> -> vector<16x8xf32>
    %206 = vector.broadcast %204 : vector<16x1xf32> to vector<16x8xf32>
    %207 = arith.mulf %205, %206 : vector<16x8xf32>
    %208 = vector.extract_strided_slice %159 {offsets = [8, 0], sizes = [8, 32], strides = [1, 1]} : vector<32x32xf32> to vector<8x32xf32>
    %cst_101 = arith.constant dense<0.000000e+00> : vector<16x32xf32>
    %209 = tpu.matmul %207, %208, %cst_101 {dimension_numbers = #tpu.dot_dimension_numbers<[1], [0], [0], [1], [0, 0, 1, 1], [], []>} : vector<16x8xf32>, vector<8x32xf32>, vector<16x32xf32> -> vector<16x32xf32>
    %210 = arith.addf %191, %209 : vector<16x32xf32>
    %211 = vector.extract_strided_slice %166 {offsets = [0, 16], sizes = [16, 8], strides = [1, 1]} : vector<16x32xf32> to vector<16x8xf32>
    %212 = vector.extract_strided_slice %172 {offsets = [0, 16], sizes = [16, 8], strides = [1, 1]} : vector<16x32xf32> to vector<16x8xf32>
    %213 = vector.extract_strided_slice %173 {offsets = [0, 16], sizes = [16, 8], strides = [1, 1]} : vector<16x32xf32> to vector<16x8xf32>
    %cst_102 = arith.constant dense<0.000000e+00> : vector<16x16xf32>
    %214 = tpu.matmul %211, %212, %cst_102 {dimension_numbers = #tpu.dot_dimension_numbers<[1], [1], [0], [0], [0, 0, 1, 0], [], []>} : vector<16x8xf32>, vector<16x8xf32>, vector<16x16xf32> -> vector<16x16xf32>
    %215 = arith.addf %214, %28 : vector<16x16xf32>
    %cst_103 = arith.constant dense<0xFF800000> : vector<16xf32>
    %216 = vector.multi_reduction <maximumf>, %215, %cst_103 [1] : vector<16x16xf32> to vector<16xf32>
    %217 = vector.shape_cast %216 : vector<16xf32> to vector<16x1xf32>
    %218 = vector.broadcast %217 : vector<16x1xf32> to vector<16x16xf32>
    %219 = arith.subf %215, %218 : vector<16x16xf32>
    %220 = math.exp %219 : vector<16x16xf32>
    %cst_104 = arith.constant dense<0.000000e+00> : vector<16xf32>
    %221 = vector.multi_reduction <add>, %220, %cst_104 [1] : vector<16x16xf32> to vector<16xf32>
    %222 = vector.shape_cast %221 : vector<16xf32> to vector<16x1xf32>
    %223 = tpu.reciprocal %222 {approx = true} : vector<16x1xf32> -> vector<16x1xf32>
    %cst_105 = arith.constant dense<0.000000e+00> : vector<16x8xf32>
    %224 = tpu.matmul %220, %213, %cst_105 {dimension_numbers = #tpu.dot_dimension_numbers<[1], [0], [0], [1], [0, 0, 1, 1], [], []>} : vector<16x16xf32>, vector<16x8xf32>, vector<16x8xf32> -> vector<16x8xf32>
    %225 = vector.broadcast %223 : vector<16x1xf32> to vector<16x8xf32>
    %226 = arith.mulf %224, %225 : vector<16x8xf32>
    %227 = vector.extract_strided_slice %159 {offsets = [16, 0], sizes = [8, 32], strides = [1, 1]} : vector<32x32xf32> to vector<8x32xf32>
    %cst_106 = arith.constant dense<0.000000e+00> : vector<16x32xf32>
    %228 = tpu.matmul %226, %227, %cst_106 {dimension_numbers = #tpu.dot_dimension_numbers<[1], [0], [0], [1], [0, 0, 1, 1], [], []>} : vector<16x8xf32>, vector<8x32xf32>, vector<16x32xf32> -> vector<16x32xf32>
    %229 = arith.addf %210, %228 : vector<16x32xf32>
    %230 = vector.extract_strided_slice %166 {offsets = [0, 24], sizes = [16, 8], strides = [1, 1]} : vector<16x32xf32> to vector<16x8xf32>
    %231 = vector.extract_strided_slice %172 {offsets = [0, 24], sizes = [16, 8], strides = [1, 1]} : vector<16x32xf32> to vector<16x8xf32>
    %232 = vector.extract_strided_slice %173 {offsets = [0, 24], sizes = [16, 8], strides = [1, 1]} : vector<16x32xf32> to vector<16x8xf32>
    %cst_107 = arith.constant dense<0.000000e+00> : vector<16x16xf32>
    %233 = tpu.matmul %230, %231, %cst_107 {dimension_numbers = #tpu.dot_dimension_numbers<[1], [1], [0], [0], [0, 0, 1, 0], [], []>} : vector<16x8xf32>, vector<16x8xf32>, vector<16x16xf32> -> vector<16x16xf32>
    %234 = arith.addf %233, %28 : vector<16x16xf32>
    %cst_108 = arith.constant dense<0xFF800000> : vector<16xf32>
    %235 = vector.multi_reduction <maximumf>, %234, %cst_108 [1] : vector<16x16xf32> to vector<16xf32>
    %236 = vector.shape_cast %235 : vector<16xf32> to vector<16x1xf32>
    %237 = vector.broadcast %236 : vector<16x1xf32> to vector<16x16xf32>
    %238 = arith.subf %234, %237 : vector<16x16xf32>
    %239 = math.exp %238 : vector<16x16xf32>
    %cst_109 = arith.constant dense<0.000000e+00> : vector<16xf32>
    %240 = vector.multi_reduction <add>, %239, %cst_109 [1] : vector<16x16xf32> to vector<16xf32>
    %241 = vector.shape_cast %240 : vector<16xf32> to vector<16x1xf32>
    %242 = tpu.reciprocal %241 {approx = true} : vector<16x1xf32> -> vector<16x1xf32>
    %cst_110 = arith.constant dense<0.000000e+00> : vector<16x8xf32>
    %243 = tpu.matmul %239, %232, %cst_110 {dimension_numbers = #tpu.dot_dimension_numbers<[1], [0], [0], [1], [0, 0, 1, 1], [], []>} : vector<16x16xf32>, vector<16x8xf32>, vector<16x8xf32> -> vector<16x8xf32>
    %244 = vector.broadcast %242 : vector<16x1xf32> to vector<16x8xf32>
    %245 = arith.mulf %243, %244 : vector<16x8xf32>
    %246 = vector.extract_strided_slice %159 {offsets = [24, 0], sizes = [8, 32], strides = [1, 1]} : vector<32x32xf32> to vector<8x32xf32>
    %cst_111 = arith.constant dense<0.000000e+00> : vector<16x32xf32>
    %247 = tpu.matmul %245, %246, %cst_111 {dimension_numbers = #tpu.dot_dimension_numbers<[1], [0], [0], [1], [0, 0, 1, 1], [], []>} : vector<16x8xf32>, vector<8x32xf32>, vector<16x32xf32> -> vector<16x32xf32>
    %248 = arith.addf %229, %247 : vector<16x32xf32>
    %249 = vector.broadcast %161 : vector<1x32xf32> to vector<16x32xf32>
    %250 = arith.addf %248, %249 : vector<16x32xf32>
    %c0_112 = arith.constant 0 : index
    %c0_113 = arith.constant 0 : index
    %c0_114 = arith.constant 0 : index
    %251 = vector.load %arg23[%c0_112, %c0_113, %c0_114] : memref<2x16x32xf32, #tpu.memory_space<vmem>>, vector<1x16x32xf32>
    %252 = vector.shape_cast %251 : vector<1x16x32xf32> to vector<16x32xf32>
    %253 = vector.shape_cast %172 : vector<16x32xf32> to vector<1x16x32xf32>
    tpu.vector_store %arg23[%c0_112, %c0_113, %c0_114], %253 {strides = array<i32>} : memref<2x16x32xf32, #tpu.memory_space<vmem>>, vector<1x16x32xf32>,
    %c0_115 = arith.constant 0 : index
    %c0_116 = arith.constant 0 : index
    %c0_117 = arith.constant 0 : index
    %254 = vector.load %arg24[%c0_115, %c0_116, %c0_117] : memref<2x16x32xf32, #tpu.memory_space<vmem>>, vector<1x16x32xf32>
    %255 = vector.shape_cast %254 : vector<1x16x32xf32> to vector<16x32xf32>
    %256 = vector.shape_cast %173 : vector<16x32xf32> to vector<1x16x32xf32>
    tpu.vector_store %arg24[%c0_115, %c0_116, %c0_117], %256 {strides = array<i32>} : memref<2x16x32xf32, #tpu.memory_space<vmem>>, vector<1x16x32xf32>,
    %257 = arith.addf %250, %153 : vector<16x32xf32>
    %c0_118 = arith.constant 0 : index
    %c1_119 = arith.constant 1 : index
    %c0_120 = arith.constant 0 : index
    %c0_121 = arith.constant 0 : index
    %258 = vector.load %arg12[%c0_118, %c1_119, %c0_120, %c0_121] : memref<2x3x1x32xf32, #tpu.memory_space<vmem>>, vector<1x1x1x32xf32>
    %259 = vector.shape_cast %258 : vector<1x1x1x32xf32> to vector<1x32xf32>
    %c0_122 = arith.constant 0 : index
    %c1_123 = arith.constant 1 : index
    %c0_124 = arith.constant 0 : index
    %c0_125 = arith.constant 0 : index
    %260 = vector.load %arg13[%c0_122, %c1_123, %c0_124, %c0_125] : memref<2x3x1x32xf32, #tpu.memory_space<vmem>>, vector<1x1x1x32xf32>
    %261 = vector.shape_cast %260 : vector<1x1x1x32xf32> to vector<1x32xf32>
    %cst_126 = arith.constant dense<0.000000e+00> : vector<16xf32>
    %262 = vector.multi_reduction <add>, %257, %cst_126 [1] : vector<16x32xf32> to vector<16xf32>
    %263 = vector.shape_cast %262 : vector<16xf32> to vector<16x1xf32>
    %cst_127 = arith.constant 3.200000e+01 : f32
    %264 = vector.broadcast %cst_127 : f32 to vector<16x1xf32>
    %265 = arith.divf %263, %264 : vector<16x1xf32>
    %266 = vector.broadcast %265 : vector<16x1xf32> to vector<16x32xf32>
    %267 = arith.subf %257, %266 : vector<16x32xf32>
    %268 = arith.mulf %267, %267 : vector<16x32xf32>
    %cst_128 = arith.constant dense<0.000000e+00> : vector<16xf32>
    %269 = vector.multi_reduction <add>, %268, %cst_128 [1] : vector<16x32xf32> to vector<16xf32>
    %270 = vector.shape_cast %269 : vector<16xf32> to vector<16x1xf32>
    %cst_129 = arith.constant 3.200000e+01 : f32
    %271 = vector.broadcast %cst_129 : f32 to vector<16x1xf32>
    %272 = arith.divf %270, %271 : vector<16x1xf32>
    %273 = vector.broadcast %265 : vector<16x1xf32> to vector<16x32xf32>
    %274 = arith.subf %257, %273 : vector<16x32xf32>
    %cst_130 = arith.constant 9.99999974E-6 : f32
    %275 = vector.broadcast %cst_130 : f32 to vector<16x1xf32>
    %276 = arith.addf %272, %275 : vector<16x1xf32>
    %277 = math.rsqrt %276 : vector<16x1xf32>
    %278 = vector.broadcast %277 : vector<16x1xf32> to vector<16x32xf32>
    %279 = arith.mulf %274, %278 : vector<16x32xf32>
    %280 = vector.broadcast %259 : vector<1x32xf32> to vector<16x32xf32>
    %281 = arith.mulf %279, %280 : vector<16x32xf32>
    %282 = vector.broadcast %261 : vector<1x32xf32> to vector<16x32xf32>
    %283 = arith.addf %281, %282 : vector<16x32xf32>
    %c0_131 = arith.constant 0 : index
    %c2 = arith.constant 2 : index
    %c0_132 = arith.constant 0 : index
    %c0_133 = arith.constant 0 : index
    %284 = vector.load %arg8[%c0_131, %c2, %c0_132, %c0_133] : memref<2x3x32x96xf32, #tpu.memory_space<vmem>>, vector<1x1x32x96xf32>
    %285 = vector.shape_cast %284 : vector<1x1x32x96xf32> to vector<32x96xf32>
    %c0_134 = arith.constant 0 : index
    %c2_135 = arith.constant 2 : index
    %c0_136 = arith.constant 0 : index
    %c0_137 = arith.constant 0 : index
    %286 = vector.load %arg9[%c0_134, %c2_135, %c0_136, %c0_137] : memref<2x3x1x96xf32, #tpu.memory_space<vmem>>, vector<1x1x1x96xf32>
    %287 = vector.shape_cast %286 : vector<1x1x1x96xf32> to vector<1x96xf32>
    %c0_138 = arith.constant 0 : index
    %c2_139 = arith.constant 2 : index
    %c0_140 = arith.constant 0 : index
    %c0_141 = arith.constant 0 : index
    %288 = vector.load %arg10[%c0_138, %c2_139, %c0_140, %c0_141] : memref<2x3x32x32xf32, #tpu.memory_space<vmem>>, vector<1x1x32x32xf32>
    %289 = vector.shape_cast %288 : vector<1x1x32x32xf32> to vector<32x32xf32>
    %c0_142 = arith.constant 0 : index
    %c2_143 = arith.constant 2 : index
    %c0_144 = arith.constant 0 : index
    %c0_145 = arith.constant 0 : index
    %290 = vector.load %arg11[%c0_142, %c2_143, %c0_144, %c0_145] : memref<2x3x1x32xf32, #tpu.memory_space<vmem>>, vector<1x1x1x32xf32>
    %291 = vector.shape_cast %290 : vector<1x1x1x32xf32> to vector<1x32xf32>
    %292 = vector.extract_strided_slice %285 {offsets = [0, 0], sizes = [32, 32], strides = [1, 1]} : vector<32x96xf32> to vector<32x32xf32>
    %cst_146 = arith.constant dense<0.000000e+00> : vector<16x32xf32>
    %293 = tpu.matmul %283, %292, %cst_146 {dimension_numbers = #tpu.dot_dimension_numbers<[1], [0], [0], [1], [0, 0, 1, 1], [], []>} : vector<16x32xf32>, vector<32x32xf32>, vector<16x32xf32> -> vector<16x32xf32>
    %294 = vector.extract_strided_slice %287 {offsets = [0, 0], sizes = [1, 32], strides = [1, 1]} : vector<1x96xf32> to vector<1x32xf32>
    %295 = vector.broadcast %294 : vector<1x32xf32> to vector<16x32xf32>
    %296 = arith.addf %293, %295 : vector<16x32xf32>
    %297 = vector.extract_strided_slice %285 {offsets = [0, 32], sizes = [32, 64], strides = [1, 1]} : vector<32x96xf32> to vector<32x64xf32>
    %cst_147 = arith.constant dense<0.000000e+00> : vector<32x64xf32>
    %298 = tpu.matmul %26, %297, %cst_147 {dimension_numbers = #tpu.dot_dimension_numbers<[1], [0], [0], [1], [0, 0, 1, 1], [], []>} : vector<32x32xf32>, vector<32x64xf32>, vector<32x64xf32> -> vector<32x64xf32>
    %299 = vector.extract_strided_slice %287 {offsets = [0, 32], sizes = [1, 64], strides = [1, 1]} : vector<1x96xf32> to vector<1x64xf32>
    %300 = vector.broadcast %299 : vector<1x64xf32> to vector<32x64xf32>
    %301 = arith.addf %298, %300 : vector<32x64xf32>
    %302 = vector.extract_strided_slice %301 {offsets = [0, 0], sizes = [32, 32], strides = [1, 1]} : vector<32x64xf32> to vector<32x32xf32>
    %303 = vector.extract_strided_slice %301 {offsets = [0, 32], sizes = [32, 32], strides = [1, 1]} : vector<32x64xf32> to vector<32x32xf32>
    %304 = vector.extract_strided_slice %296 {offsets = [0, 0], sizes = [16, 8], strides = [1, 1]} : vector<16x32xf32> to vector<16x8xf32>
    %305 = vector.extract_strided_slice %302 {offsets = [0, 0], sizes = [32, 8], strides = [1, 1]} : vector<32x32xf32> to vector<32x8xf32>
    %306 = vector.extract_strided_slice %303 {offsets = [0, 0], sizes = [32, 8], strides = [1, 1]} : vector<32x32xf32> to vector<32x8xf32>
    %cst_148 = arith.constant dense<0.000000e+00> : vector<16x32xf32>
    %307 = tpu.matmul %304, %305, %cst_148 {dimension_numbers = #tpu.dot_dimension_numbers<[1], [1], [0], [0], [0, 0, 1, 0], [], []>} : vector<16x8xf32>, vector<32x8xf32>, vector<16x32xf32> -> vector<16x32xf32>
    %308 = arith.addf %307, %29 : vector<16x32xf32>
    %cst_149 = arith.constant dense<0xFF800000> : vector<16xf32>
    %309 = vector.multi_reduction <maximumf>, %308, %cst_149 [1] : vector<16x32xf32> to vector<16xf32>
    %310 = vector.shape_cast %309 : vector<16xf32> to vector<16x1xf32>
    %311 = vector.broadcast %310 : vector<16x1xf32> to vector<16x32xf32>
    %312 = arith.subf %308, %311 : vector<16x32xf32>
    %313 = math.exp %312 : vector<16x32xf32>
    %cst_150 = arith.constant dense<0.000000e+00> : vector<16xf32>
    %314 = vector.multi_reduction <add>, %313, %cst_150 [1] : vector<16x32xf32> to vector<16xf32>
    %315 = vector.shape_cast %314 : vector<16xf32> to vector<16x1xf32>
    %316 = tpu.reciprocal %315 {approx = true} : vector<16x1xf32> -> vector<16x1xf32>
    %cst_151 = arith.constant dense<0.000000e+00> : vector<16x8xf32>
    %317 = tpu.matmul %313, %306, %cst_151 {dimension_numbers = #tpu.dot_dimension_numbers<[1], [0], [0], [1], [0, 0, 1, 1], [], []>} : vector<16x32xf32>, vector<32x8xf32>, vector<16x8xf32> -> vector<16x8xf32>
    %318 = vector.broadcast %316 : vector<16x1xf32> to vector<16x8xf32>
    %319 = arith.mulf %317, %318 : vector<16x8xf32>
    %320 = vector.extract_strided_slice %289 {offsets = [0, 0], sizes = [8, 32], strides = [1, 1]} : vector<32x32xf32> to vector<8x32xf32>
    %cst_152 = arith.constant dense<0.000000e+00> : vector<16x32xf32>
    %321 = tpu.matmul %319, %320, %cst_152 {dimension_numbers = #tpu.dot_dimension_numbers<[1], [0], [0], [1], [0, 0, 1, 1], [], []>} : vector<16x8xf32>, vector<8x32xf32>, vector<16x32xf32> -> vector<16x32xf32>
    %322 = vector.extract_strided_slice %296 {offsets = [0, 8], sizes = [16, 8], strides = [1, 1]} : vector<16x32xf32> to vector<16x8xf32>
    %323 = vector.extract_strided_slice %302 {offsets = [0, 8], sizes = [32, 8], strides = [1, 1]} : vector<32x32xf32> to vector<32x8xf32>
    %324 = vector.extract_strided_slice %303 {offsets = [0, 8], sizes = [32, 8], strides = [1, 1]} : vector<32x32xf32> to vector<32x8xf32>
    %cst_153 = arith.constant dense<0.000000e+00> : vector<16x32xf32>
    %325 = tpu.matmul %322, %323, %cst_153 {dimension_numbers = #tpu.dot_dimension_numbers<[1], [1], [0], [0], [0, 0, 1, 0], [], []>} : vector<16x8xf32>, vector<32x8xf32>, vector<16x32xf32> -> vector<16x32xf32>
    %326 = arith.addf %325, %29 : vector<16x32xf32>
    %cst_154 = arith.constant dense<0xFF800000> : vector<16xf32>
    %327 = vector.multi_reduction <maximumf>, %326, %cst_154 [1] : vector<16x32xf32> to vector<16xf32>
    %328 = vector.shape_cast %327 : vector<16xf32> to vector<16x1xf32>
    %329 = vector.broadcast %328 : vector<16x1xf32> to vector<16x32xf32>
    %330 = arith.subf %326, %329 : vector<16x32xf32>
    %331 = math.exp %330 : vector<16x32xf32>
    %cst_155 = arith.constant dense<0.000000e+00> : vector<16xf32>
    %332 = vector.multi_reduction <add>, %331, %cst_155 [1] : vector<16x32xf32> to vector<16xf32>
    %333 = vector.shape_cast %332 : vector<16xf32> to vector<16x1xf32>
    %334 = tpu.reciprocal %333 {approx = true} : vector<16x1xf32> -> vector<16x1xf32>
    %cst_156 = arith.constant dense<0.000000e+00> : vector<16x8xf32>
    %335 = tpu.matmul %331, %324, %cst_156 {dimension_numbers = #tpu.dot_dimension_numbers<[1], [0], [0], [1], [0, 0, 1, 1], [], []>} : vector<16x32xf32>, vector<32x8xf32>, vector<16x8xf32> -> vector<16x8xf32>
    %336 = vector.broadcast %334 : vector<16x1xf32> to vector<16x8xf32>
    %337 = arith.mulf %335, %336 : vector<16x8xf32>
    %338 = vector.extract_strided_slice %289 {offsets = [8, 0], sizes = [8, 32], strides = [1, 1]} : vector<32x32xf32> to vector<8x32xf32>
    %cst_157 = arith.constant dense<0.000000e+00> : vector<16x32xf32>
    %339 = tpu.matmul %337, %338, %cst_157 {dimension_numbers = #tpu.dot_dimension_numbers<[1], [0], [0], [1], [0, 0, 1, 1], [], []>} : vector<16x8xf32>, vector<8x32xf32>, vector<16x32xf32> -> vector<16x32xf32>
    %340 = arith.addf %321, %339 : vector<16x32xf32>
    %341 = vector.extract_strided_slice %296 {offsets = [0, 16], sizes = [16, 8], strides = [1, 1]} : vector<16x32xf32> to vector<16x8xf32>
    %342 = vector.extract_strided_slice %302 {offsets = [0, 16], sizes = [32, 8], strides = [1, 1]} : vector<32x32xf32> to vector<32x8xf32>
    %343 = vector.extract_strided_slice %303 {offsets = [0, 16], sizes = [32, 8], strides = [1, 1]} : vector<32x32xf32> to vector<32x8xf32>
    %cst_158 = arith.constant dense<0.000000e+00> : vector<16x32xf32>
    %344 = tpu.matmul %341, %342, %cst_158 {dimension_numbers = #tpu.dot_dimension_numbers<[1], [1], [0], [0], [0, 0, 1, 0], [], []>} : vector<16x8xf32>, vector<32x8xf32>, vector<16x32xf32> -> vector<16x32xf32>
    %345 = arith.addf %344, %29 : vector<16x32xf32>
    %cst_159 = arith.constant dense<0xFF800000> : vector<16xf32>
    %346 = vector.multi_reduction <maximumf>, %345, %cst_159 [1] : vector<16x32xf32> to vector<16xf32>
    %347 = vector.shape_cast %346 : vector<16xf32> to vector<16x1xf32>
    %348 = vector.broadcast %347 : vector<16x1xf32> to vector<16x32xf32>
    %349 = arith.subf %345, %348 : vector<16x32xf32>
    %350 = math.exp %349 : vector<16x32xf32>
    %cst_160 = arith.constant dense<0.000000e+00> : vector<16xf32>
    %351 = vector.multi_reduction <add>, %350, %cst_160 [1] : vector<16x32xf32> to vector<16xf32>
    %352 = vector.shape_cast %351 : vector<16xf32> to vector<16x1xf32>
    %353 = tpu.reciprocal %352 {approx = true} : vector<16x1xf32> -> vector<16x1xf32>
    %cst_161 = arith.constant dense<0.000000e+00> : vector<16x8xf32>
    %354 = tpu.matmul %350, %343, %cst_161 {dimension_numbers = #tpu.dot_dimension_numbers<[1], [0], [0], [1], [0, 0, 1, 1], [], []>} : vector<16x32xf32>, vector<32x8xf32>, vector<16x8xf32> -> vector<16x8xf32>
    %355 = vector.broadcast %353 : vector<16x1xf32> to vector<16x8xf32>
    %356 = arith.mulf %354, %355 : vector<16x8xf32>
    %357 = vector.extract_strided_slice %289 {offsets = [16, 0], sizes = [8, 32], strides = [1, 1]} : vector<32x32xf32> to vector<8x32xf32>
    %cst_162 = arith.constant dense<0.000000e+00> : vector<16x32xf32>
    %358 = tpu.matmul %356, %357, %cst_162 {dimension_numbers = #tpu.dot_dimension_numbers<[1], [0], [0], [1], [0, 0, 1, 1], [], []>} : vector<16x8xf32>, vector<8x32xf32>, vector<16x32xf32> -> vector<16x32xf32>
    %359 = arith.addf %340, %358 : vector<16x32xf32>
    %360 = vector.extract_strided_slice %296 {offsets = [0, 24], sizes = [16, 8], strides = [1, 1]} : vector<16x32xf32> to vector<16x8xf32>
    %361 = vector.extract_strided_slice %302 {offsets = [0, 24], sizes = [32, 8], strides = [1, 1]} : vector<32x32xf32> to vector<32x8xf32>
    %362 = vector.extract_strided_slice %303 {offsets = [0, 24], sizes = [32, 8], strides = [1, 1]} : vector<32x32xf32> to vector<32x8xf32>
    %cst_163 = arith.constant dense<0.000000e+00> : vector<16x32xf32>
    %363 = tpu.matmul %360, %361, %cst_163 {dimension_numbers = #tpu.dot_dimension_numbers<[1], [1], [0], [0], [0, 0, 1, 0], [], []>} : vector<16x8xf32>, vector<32x8xf32>, vector<16x32xf32> -> vector<16x32xf32>
    %364 = arith.addf %363, %29 : vector<16x32xf32>
    %cst_164 = arith.constant dense<0xFF800000> : vector<16xf32>
    %365 = vector.multi_reduction <maximumf>, %364, %cst_164 [1] : vector<16x32xf32> to vector<16xf32>
    %366 = vector.shape_cast %365 : vector<16xf32> to vector<16x1xf32>
    %367 = vector.broadcast %366 : vector<16x1xf32> to vector<16x32xf32>
    %368 = arith.subf %364, %367 : vector<16x32xf32>
    %369 = math.exp %368 : vector<16x32xf32>
    %cst_165 = arith.constant dense<0.000000e+00> : vector<16xf32>
    %370 = vector.multi_reduction <add>, %369, %cst_165 [1] : vector<16x32xf32> to vector<16xf32>
    %371 = vector.shape_cast %370 : vector<16xf32> to vector<16x1xf32>
    %372 = tpu.reciprocal %371 {approx = true} : vector<16x1xf32> -> vector<16x1xf32>
    %cst_166 = arith.constant dense<0.000000e+00> : vector<16x8xf32>
    %373 = tpu.matmul %369, %362, %cst_166 {dimension_numbers = #tpu.dot_dimension_numbers<[1], [0], [0], [1], [0, 0, 1, 1], [], []>} : vector<16x32xf32>, vector<32x8xf32>, vector<16x8xf32> -> vector<16x8xf32>
    %374 = vector.broadcast %372 : vector<16x1xf32> to vector<16x8xf32>
    %375 = arith.mulf %373, %374 : vector<16x8xf32>
    %376 = vector.extract_strided_slice %289 {offsets = [24, 0], sizes = [8, 32], strides = [1, 1]} : vector<32x32xf32> to vector<8x32xf32>
    %cst_167 = arith.constant dense<0.000000e+00> : vector<16x32xf32>
    %377 = tpu.matmul %375, %376, %cst_167 {dimension_numbers = #tpu.dot_dimension_numbers<[1], [0], [0], [1], [0, 0, 1, 1], [], []>} : vector<16x8xf32>, vector<8x32xf32>, vector<16x32xf32> -> vector<16x32xf32>
    %378 = arith.addf %359, %377 : vector<16x32xf32>
    %379 = vector.broadcast %291 : vector<1x32xf32> to vector<16x32xf32>
    %380 = arith.addf %378, %379 : vector<16x32xf32>
    %c0_168 = arith.constant 0 : index
    %c0_169 = arith.constant 0 : index
    %c0_170 = arith.constant 0 : index
    %381 = vector.load %arg25[%c0_168, %c0_169, %c0_170] : memref<2x32x32xf32, #tpu.memory_space<vmem>>, vector<1x32x32xf32>
    %382 = vector.shape_cast %381 : vector<1x32x32xf32> to vector<32x32xf32>
    %383 = vector.shape_cast %302 : vector<32x32xf32> to vector<1x32x32xf32>
    tpu.vector_store %arg25[%c0_168, %c0_169, %c0_170], %383 {strides = array<i32>} : memref<2x32x32xf32, #tpu.memory_space<vmem>>, vector<1x32x32xf32>,
    %c0_171 = arith.constant 0 : index
    %c0_172 = arith.constant 0 : index
    %c0_173 = arith.constant 0 : index
    %384 = vector.load %arg26[%c0_171, %c0_172, %c0_173] : memref<2x32x32xf32, #tpu.memory_space<vmem>>, vector<1x32x32xf32>
    %385 = vector.shape_cast %384 : vector<1x32x32xf32> to vector<32x32xf32>
    %386 = vector.shape_cast %303 : vector<32x32xf32> to vector<1x32x32xf32>
    tpu.vector_store %arg26[%c0_171, %c0_172, %c0_173], %386 {strides = array<i32>} : memref<2x32x32xf32, #tpu.memory_space<vmem>>, vector<1x32x32xf32>,
    %387 = arith.addf %380, %283 : vector<16x32xf32>
    %c0_174 = arith.constant 0 : index
    %c2_175 = arith.constant 2 : index
    %c0_176 = arith.constant 0 : index
    %c0_177 = arith.constant 0 : index
    %388 = vector.load %arg12[%c0_174, %c2_175, %c0_176, %c0_177] : memref<2x3x1x32xf32, #tpu.memory_space<vmem>>, vector<1x1x1x32xf32>
    %389 = vector.shape_cast %388 : vector<1x1x1x32xf32> to vector<1x32xf32>
    %c0_178 = arith.constant 0 : index
    %c2_179 = arith.constant 2 : index
    %c0_180 = arith.constant 0 : index
    %c0_181 = arith.constant 0 : index
    %390 = vector.load %arg13[%c0_178, %c2_179, %c0_180, %c0_181] : memref<2x3x1x32xf32, #tpu.memory_space<vmem>>, vector<1x1x1x32xf32>
    %391 = vector.shape_cast %390 : vector<1x1x1x32xf32> to vector<1x32xf32>
    %cst_182 = arith.constant dense<0.000000e+00> : vector<16xf32>
    %392 = vector.multi_reduction <add>, %387, %cst_182 [1] : vector<16x32xf32> to vector<16xf32>
    %393 = vector.shape_cast %392 : vector<16xf32> to vector<16x1xf32>
    %cst_183 = arith.constant 3.200000e+01 : f32
    %394 = vector.broadcast %cst_183 : f32 to vector<16x1xf32>
    %395 = arith.divf %393, %394 : vector<16x1xf32>
    %396 = vector.broadcast %395 : vector<16x1xf32> to vector<16x32xf32>
    %397 = arith.subf %387, %396 : vector<16x32xf32>
    %398 = arith.mulf %397, %397 : vector<16x32xf32>
    %cst_184 = arith.constant dense<0.000000e+00> : vector<16xf32>
    %399 = vector.multi_reduction <add>, %398, %cst_184 [1] : vector<16x32xf32> to vector<16xf32>
    %400 = vector.shape_cast %399 : vector<16xf32> to vector<16x1xf32>
    %cst_185 = arith.constant 3.200000e+01 : f32
    %401 = vector.broadcast %cst_185 : f32 to vector<16x1xf32>
    %402 = arith.divf %400, %401 : vector<16x1xf32>
    %403 = vector.broadcast %395 : vector<16x1xf32> to vector<16x32xf32>
    %404 = arith.subf %387, %403 : vector<16x32xf32>
    %cst_186 = arith.constant 9.99999974E-6 : f32
    %405 = vector.broadcast %cst_186 : f32 to vector<16x1xf32>
    %406 = arith.addf %402, %405 : vector<16x1xf32>
    %407 = math.rsqrt %406 : vector<16x1xf32>
    %408 = vector.broadcast %407 : vector<16x1xf32> to vector<16x32xf32>
    %409 = arith.mulf %404, %408 : vector<16x32xf32>
    %410 = vector.broadcast %389 : vector<1x32xf32> to vector<16x32xf32>
    %411 = arith.mulf %409, %410 : vector<16x32xf32>
    %412 = vector.broadcast %391 : vector<1x32xf32> to vector<16x32xf32>
    %413 = arith.addf %411, %412 : vector<16x32xf32>
    %c0_187 = arith.constant 0 : index
    %c0_188 = arith.constant 0 : index
    %c0_189 = arith.constant 0 : index
    %414 = vector.load %arg14[%c0_187, %c0_188, %c0_189] : memref<2x32x64xf32, #tpu.memory_space<vmem>>, vector<1x32x64xf32>
    %415 = vector.shape_cast %414 : vector<1x32x64xf32> to vector<32x64xf32>
    %cst_190 = arith.constant dense<0.000000e+00> : vector<16x64xf32>
    %416 = tpu.matmul %413, %415, %cst_190 {dimension_numbers = #tpu.dot_dimension_numbers<[1], [0], [0], [1], [0, 0, 1, 1], [], []>} : vector<16x32xf32>, vector<32x64xf32>, vector<16x64xf32> -> vector<16x64xf32>
    %c0_191 = arith.constant 0 : index
    %c0_192 = arith.constant 0 : index
    %c0_193 = arith.constant 0 : index
    %417 = vector.load %arg15[%c0_191, %c0_192, %c0_193] : memref<2x1x64xf32, #tpu.memory_space<vmem>>, vector<1x1x64xf32>
    %418 = vector.shape_cast %417 : vector<1x1x64xf32> to vector<1x64xf32>
    %419 = vector.broadcast %418 : vector<1x64xf32> to vector<16x64xf32>
    %420 = arith.addf %416, %419 : vector<16x64xf32>
    %cst_194 = arith.constant 5.000000e-01 : f32
    %421 = vector.broadcast %cst_194 : f32 to vector<16x64xf32>
    %422 = arith.mulf %421, %420 : vector<16x64xf32>
    %423 = arith.mulf %420, %420 : vector<16x64xf32>
    %424 = arith.mulf %423, %420 : vector<16x64xf32>
    %cst_195 = arith.constant 4.471500e-02 : f32
    %425 = vector.broadcast %cst_195 : f32 to vector<16x64xf32>
    %426 = arith.mulf %425, %424 : vector<16x64xf32>
    %427 = arith.addf %420, %426 : vector<16x64xf32>
    %cst_196 = arith.constant 0.797884583 : f32
    %428 = vector.broadcast %cst_196 : f32 to vector<16x64xf32>
    %429 = arith.mulf %428, %427 : vector<16x64xf32>
    %430 = math.tanh %429 : vector<16x64xf32>
    %cst_197 = arith.constant 1.000000e+00 : f32
    %431 = vector.broadcast %cst_197 : f32 to vector<16x64xf32>
    %432 = arith.addf %431, %430 : vector<16x64xf32>
    %433 = arith.mulf %422, %432 : vector<16x64xf32>
    %c0_198 = arith.constant 0 : index
    %c0_199 = arith.constant 0 : index
    %c0_200 = arith.constant 0 : index
    %434 = vector.load %arg16[%c0_198, %c0_199, %c0_200] : memref<2x64x32xf32, #tpu.memory_space<vmem>>, vector<1x64x32xf32>
    %435 = vector.shape_cast %434 : vector<1x64x32xf32> to vector<64x32xf32>
    %cst_201 = arith.constant dense<0.000000e+00> : vector<16x32xf32>
    %436 = tpu.matmul %433, %435, %cst_201 {dimension_numbers = #tpu.dot_dimension_numbers<[1], [0], [0], [1], [0, 0, 1, 1], [], []>} : vector<16x64xf32>, vector<64x32xf32>, vector<16x32xf32> -> vector<16x32xf32>
    %c0_202 = arith.constant 0 : index
    %c0_203 = arith.constant 0 : index
    %c0_204 = arith.constant 0 : index
    %437 = vector.load %arg17[%c0_202, %c0_203, %c0_204] : memref<2x1x32xf32, #tpu.memory_space<vmem>>, vector<1x1x32xf32>
    %438 = vector.shape_cast %437 : vector<1x1x32xf32> to vector<1x32xf32>
    %439 = vector.broadcast %438 : vector<1x32xf32> to vector<16x32xf32>
    %440 = arith.addf %436, %439 : vector<16x32xf32>
    %441 = arith.addf %440, %413 : vector<16x32xf32>
    %c0_205 = arith.constant 0 : index
    %c0_206 = arith.constant 0 : index
    %c0_207 = arith.constant 0 : index
    %442 = vector.load %arg18[%c0_205, %c0_206, %c0_207] : memref<2x1x32xf32, #tpu.memory_space<vmem>>, vector<1x1x32xf32>
    %443 = vector.shape_cast %442 : vector<1x1x32xf32> to vector<1x32xf32>
    %c0_208 = arith.constant 0 : index
    %c0_209 = arith.constant 0 : index
    %c0_210 = arith.constant 0 : index
    %444 = vector.load %arg19[%c0_208, %c0_209, %c0_210] : memref<2x1x32xf32, #tpu.memory_space<vmem>>, vector<1x1x32xf32>
    %445 = vector.shape_cast %444 : vector<1x1x32xf32> to vector<1x32xf32>
    %cst_211 = arith.constant dense<0.000000e+00> : vector<16xf32>
    %446 = vector.multi_reduction <add>, %441, %cst_211 [1] : vector<16x32xf32> to vector<16xf32>
    %447 = vector.shape_cast %446 : vector<16xf32> to vector<16x1xf32>
    %cst_212 = arith.constant 3.200000e+01 : f32
    %448 = vector.broadcast %cst_212 : f32 to vector<16x1xf32>
    %449 = arith.divf %447, %448 : vector<16x1xf32>
    %450 = vector.broadcast %449 : vector<16x1xf32> to vector<16x32xf32>
    %451 = arith.subf %441, %450 : vector<16x32xf32>
    %452 = arith.mulf %451, %451 : vector<16x32xf32>
    %cst_213 = arith.constant dense<0.000000e+00> : vector<16xf32>
    %453 = vector.multi_reduction <add>, %452, %cst_213 [1] : vector<16x32xf32> to vector<16xf32>
    %454 = vector.shape_cast %453 : vector<16xf32> to vector<16x1xf32>
    %cst_214 = arith.constant 3.200000e+01 : f32
    %455 = vector.broadcast %cst_214 : f32 to vector<16x1xf32>
    %456 = arith.divf %454, %455 : vector<16x1xf32>
    %457 = vector.broadcast %449 : vector<16x1xf32> to vector<16x32xf32>
    %458 = arith.subf %441, %457 : vector<16x32xf32>
    %cst_215 = arith.constant 9.99999974E-6 : f32
    %459 = vector.broadcast %cst_215 : f32 to vector<16x1xf32>
    %460 = arith.addf %456, %459 : vector<16x1xf32>
    %461 = math.rsqrt %460 : vector<16x1xf32>
    %462 = vector.broadcast %461 : vector<16x1xf32> to vector<16x32xf32>
    %463 = arith.mulf %458, %462 : vector<16x32xf32>
    %464 = vector.broadcast %443 : vector<1x32xf32> to vector<16x32xf32>
    %465 = arith.mulf %463, %464 : vector<16x32xf32>
    %466 = vector.broadcast %445 : vector<1x32xf32> to vector<16x32xf32>
    %467 = arith.addf %465, %466 : vector<16x32xf32>
    %c1_216 = arith.constant 1 : index
    %c0_217 = arith.constant 0 : index
    %c0_218 = arith.constant 0 : index
    %c0_219 = arith.constant 0 : index
    %468 = vector.load %arg8[%c1_216, %c0_217, %c0_218, %c0_219] : memref<2x3x32x96xf32, #tpu.memory_space<vmem>>, vector<1x1x32x96xf32>
    %469 = vector.shape_cast %468 : vector<1x1x32x96xf32> to vector<32x96xf32>
    %c1_220 = arith.constant 1 : index
    %c0_221 = arith.constant 0 : index
    %c0_222 = arith.constant 0 : index
    %c0_223 = arith.constant 0 : index
    %470 = vector.load %arg9[%c1_220, %c0_221, %c0_222, %c0_223] : memref<2x3x1x96xf32, #tpu.memory_space<vmem>>, vector<1x1x1x96xf32>
    %471 = vector.shape_cast %470 : vector<1x1x1x96xf32> to vector<1x96xf32>
    %c1_224 = arith.constant 1 : index
    %c0_225 = arith.constant 0 : index
    %c0_226 = arith.constant 0 : index
    %c0_227 = arith.constant 0 : index
    %472 = vector.load %arg10[%c1_224, %c0_225, %c0_226, %c0_227] : memref<2x3x32x32xf32, #tpu.memory_space<vmem>>, vector<1x1x32x32xf32>
    %473 = vector.shape_cast %472 : vector<1x1x32x32xf32> to vector<32x32xf32>
    %c1_228 = arith.constant 1 : index
    %c0_229 = arith.constant 0 : index
    %c0_230 = arith.constant 0 : index
    %c0_231 = arith.constant 0 : index
    %474 = vector.load %arg11[%c1_228, %c0_229, %c0_230, %c0_231] : memref<2x3x1x32xf32, #tpu.memory_space<vmem>>, vector<1x1x1x32xf32>
    %475 = vector.shape_cast %474 : vector<1x1x1x32xf32> to vector<1x32xf32>
    %cst_232 = arith.constant dense<0.000000e+00> : vector<16x96xf32>
    %476 = tpu.matmul %467, %469, %cst_232 {dimension_numbers = #tpu.dot_dimension_numbers<[1], [0], [0], [1], [0, 0, 1, 1], [], []>} : vector<16x32xf32>, vector<32x96xf32>, vector<16x96xf32> -> vector<16x96xf32>
    %477 = vector.broadcast %471 : vector<1x96xf32> to vector<16x96xf32>
    %478 = arith.addf %476, %477 : vector<16x96xf32>
    %479 = vector.extract_strided_slice %478 {offsets = [0, 0], sizes = [16, 32], strides = [1, 1]} : vector<16x96xf32> to vector<16x32xf32>
    %480 = vector.extract_strided_slice %478 {offsets = [0, 32], sizes = [16, 32], strides = [1, 1]} : vector<16x96xf32> to vector<16x32xf32>
    %481 = vector.extract_strided_slice %478 {offsets = [0, 64], sizes = [16, 32], strides = [1, 1]} : vector<16x96xf32> to vector<16x32xf32>
    %482 = vector.extract_strided_slice %479 {offsets = [0, 0], sizes = [16, 8], strides = [1, 1]} : vector<16x32xf32> to vector<16x8xf32>
    %483 = vector.extract_strided_slice %480 {offsets = [0, 0], sizes = [16, 8], strides = [1, 1]} : vector<16x32xf32> to vector<16x8xf32>
    %484 = vector.extract_strided_slice %481 {offsets = [0, 0], sizes = [16, 8], strides = [1, 1]} : vector<16x32xf32> to vector<16x8xf32>
    %cst_233 = arith.constant dense<0.000000e+00> : vector<16x16xf32>
    %485 = tpu.matmul %482, %483, %cst_233 {dimension_numbers = #tpu.dot_dimension_numbers<[1], [1], [0], [0], [0, 0, 1, 0], [], []>} : vector<16x8xf32>, vector<16x8xf32>, vector<16x16xf32> -> vector<16x16xf32>
    %486 = arith.addf %485, %27 : vector<16x16xf32>
    %cst_234 = arith.constant dense<0xFF800000> : vector<16xf32>
    %487 = vector.multi_reduction <maximumf>, %486, %cst_234 [1] : vector<16x16xf32> to vector<16xf32>
    %488 = vector.shape_cast %487 : vector<16xf32> to vector<16x1xf32>
    %489 = vector.broadcast %488 : vector<16x1xf32> to vector<16x16xf32>
    %490 = arith.subf %486, %489 : vector<16x16xf32>
    %491 = math.exp %490 : vector<16x16xf32>
    %cst_235 = arith.constant dense<0.000000e+00> : vector<16xf32>
    %492 = vector.multi_reduction <add>, %491, %cst_235 [1] : vector<16x16xf32> to vector<16xf32>
    %493 = vector.shape_cast %492 : vector<16xf32> to vector<16x1xf32>
    %494 = tpu.reciprocal %493 {approx = true} : vector<16x1xf32> -> vector<16x1xf32>
    %cst_236 = arith.constant dense<0.000000e+00> : vector<16x8xf32>
    %495 = tpu.matmul %491, %484, %cst_236 {dimension_numbers = #tpu.dot_dimension_numbers<[1], [0], [0], [1], [0, 0, 1, 1], [], []>} : vector<16x16xf32>, vector<16x8xf32>, vector<16x8xf32> -> vector<16x8xf32>
    %496 = vector.broadcast %494 : vector<16x1xf32> to vector<16x8xf32>
    %497 = arith.mulf %495, %496 : vector<16x8xf32>
    %498 = vector.extract_strided_slice %473 {offsets = [0, 0], sizes = [8, 32], strides = [1, 1]} : vector<32x32xf32> to vector<8x32xf32>
    %cst_237 = arith.constant dense<0.000000e+00> : vector<16x32xf32>
    %499 = tpu.matmul %497, %498, %cst_237 {dimension_numbers = #tpu.dot_dimension_numbers<[1], [0], [0], [1], [0, 0, 1, 1], [], []>} : vector<16x8xf32>, vector<8x32xf32>, vector<16x32xf32> -> vector<16x32xf32>
    %500 = vector.extract_strided_slice %479 {offsets = [0, 8], sizes = [16, 8], strides = [1, 1]} : vector<16x32xf32> to vector<16x8xf32>
    %501 = vector.extract_strided_slice %480 {offsets = [0, 8], sizes = [16, 8], strides = [1, 1]} : vector<16x32xf32> to vector<16x8xf32>
    %502 = vector.extract_strided_slice %481 {offsets = [0, 8], sizes = [16, 8], strides = [1, 1]} : vector<16x32xf32> to vector<16x8xf32>
    %cst_238 = arith.constant dense<0.000000e+00> : vector<16x16xf32>
    %503 = tpu.matmul %500, %501, %cst_238 {dimension_numbers = #tpu.dot_dimension_numbers<[1], [1], [0], [0], [0, 0, 1, 0], [], []>} : vector<16x8xf32>, vector<16x8xf32>, vector<16x16xf32> -> vector<16x16xf32>
    %504 = arith.addf %503, %27 : vector<16x16xf32>
    %cst_239 = arith.constant dense<0xFF800000> : vector<16xf32>
    %505 = vector.multi_reduction <maximumf>, %504, %cst_239 [1] : vector<16x16xf32> to vector<16xf32>
    %506 = vector.shape_cast %505 : vector<16xf32> to vector<16x1xf32>
    %507 = vector.broadcast %506 : vector<16x1xf32> to vector<16x16xf32>
    %508 = arith.subf %504, %507 : vector<16x16xf32>
    %509 = math.exp %508 : vector<16x16xf32>
    %cst_240 = arith.constant dense<0.000000e+00> : vector<16xf32>
    %510 = vector.multi_reduction <add>, %509, %cst_240 [1] : vector<16x16xf32> to vector<16xf32>
    %511 = vector.shape_cast %510 : vector<16xf32> to vector<16x1xf32>
    %512 = tpu.reciprocal %511 {approx = true} : vector<16x1xf32> -> vector<16x1xf32>
    %cst_241 = arith.constant dense<0.000000e+00> : vector<16x8xf32>
    %513 = tpu.matmul %509, %502, %cst_241 {dimension_numbers = #tpu.dot_dimension_numbers<[1], [0], [0], [1], [0, 0, 1, 1], [], []>} : vector<16x16xf32>, vector<16x8xf32>, vector<16x8xf32> -> vector<16x8xf32>
    %514 = vector.broadcast %512 : vector<16x1xf32> to vector<16x8xf32>
    %515 = arith.mulf %513, %514 : vector<16x8xf32>
    %516 = vector.extract_strided_slice %473 {offsets = [8, 0], sizes = [8, 32], strides = [1, 1]} : vector<32x32xf32> to vector<8x32xf32>
    %cst_242 = arith.constant dense<0.000000e+00> : vector<16x32xf32>
    %517 = tpu.matmul %515, %516, %cst_242 {dimension_numbers = #tpu.dot_dimension_numbers<[1], [0], [0], [1], [0, 0, 1, 1], [], []>} : vector<16x8xf32>, vector<8x32xf32>, vector<16x32xf32> -> vector<16x32xf32>
    %518 = arith.addf %499, %517 : vector<16x32xf32>
    %519 = vector.extract_strided_slice %479 {offsets = [0, 16], sizes = [16, 8], strides = [1, 1]} : vector<16x32xf32> to vector<16x8xf32>
    %520 = vector.extract_strided_slice %480 {offsets = [0, 16], sizes = [16, 8], strides = [1, 1]} : vector<16x32xf32> to vector<16x8xf32>
    %521 = vector.extract_strided_slice %481 {offsets = [0, 16], sizes = [16, 8], strides = [1, 1]} : vector<16x32xf32> to vector<16x8xf32>
    %cst_243 = arith.constant dense<0.000000e+00> : vector<16x16xf32>
    %522 = tpu.matmul %519, %520, %cst_243 {dimension_numbers = #tpu.dot_dimension_numbers<[1], [1], [0], [0], [0, 0, 1, 0], [], []>} : vector<16x8xf32>, vector<16x8xf32>, vector<16x16xf32> -> vector<16x16xf32>
    %523 = arith.addf %522, %27 : vector<16x16xf32>
    %cst_244 = arith.constant dense<0xFF800000> : vector<16xf32>
    %524 = vector.multi_reduction <maximumf>, %523, %cst_244 [1] : vector<16x16xf32> to vector<16xf32>
    %525 = vector.shape_cast %524 : vector<16xf32> to vector<16x1xf32>
    %526 = vector.broadcast %525 : vector<16x1xf32> to vector<16x16xf32>
    %527 = arith.subf %523, %526 : vector<16x16xf32>
    %528 = math.exp %527 : vector<16x16xf32>
    %cst_245 = arith.constant dense<0.000000e+00> : vector<16xf32>
    %529 = vector.multi_reduction <add>, %528, %cst_245 [1] : vector<16x16xf32> to vector<16xf32>
    %530 = vector.shape_cast %529 : vector<16xf32> to vector<16x1xf32>
    %531 = tpu.reciprocal %530 {approx = true} : vector<16x1xf32> -> vector<16x1xf32>
    %cst_246 = arith.constant dense<0.000000e+00> : vector<16x8xf32>
    %532 = tpu.matmul %528, %521, %cst_246 {dimension_numbers = #tpu.dot_dimension_numbers<[1], [0], [0], [1], [0, 0, 1, 1], [], []>} : vector<16x16xf32>, vector<16x8xf32>, vector<16x8xf32> -> vector<16x8xf32>
    %533 = vector.broadcast %531 : vector<16x1xf32> to vector<16x8xf32>
    %534 = arith.mulf %532, %533 : vector<16x8xf32>
    %535 = vector.extract_strided_slice %473 {offsets = [16, 0], sizes = [8, 32], strides = [1, 1]} : vector<32x32xf32> to vector<8x32xf32>
    %cst_247 = arith.constant dense<0.000000e+00> : vector<16x32xf32>
    %536 = tpu.matmul %534, %535, %cst_247 {dimension_numbers = #tpu.dot_dimension_numbers<[1], [0], [0], [1], [0, 0, 1, 1], [], []>} : vector<16x8xf32>, vector<8x32xf32>, vector<16x32xf32> -> vector<16x32xf32>
    %537 = arith.addf %518, %536 : vector<16x32xf32>
    %538 = vector.extract_strided_slice %479 {offsets = [0, 24], sizes = [16, 8], strides = [1, 1]} : vector<16x32xf32> to vector<16x8xf32>
    %539 = vector.extract_strided_slice %480 {offsets = [0, 24], sizes = [16, 8], strides = [1, 1]} : vector<16x32xf32> to vector<16x8xf32>
    %540 = vector.extract_strided_slice %481 {offsets = [0, 24], sizes = [16, 8], strides = [1, 1]} : vector<16x32xf32> to vector<16x8xf32>
    %cst_248 = arith.constant dense<0.000000e+00> : vector<16x16xf32>
    %541 = tpu.matmul %538, %539, %cst_248 {dimension_numbers = #tpu.dot_dimension_numbers<[1], [1], [0], [0], [0, 0, 1, 0], [], []>} : vector<16x8xf32>, vector<16x8xf32>, vector<16x16xf32> -> vector<16x16xf32>
    %542 = arith.addf %541, %27 : vector<16x16xf32>
    %cst_249 = arith.constant dense<0xFF800000> : vector<16xf32>
    %543 = vector.multi_reduction <maximumf>, %542, %cst_249 [1] : vector<16x16xf32> to vector<16xf32>
    %544 = vector.shape_cast %543 : vector<16xf32> to vector<16x1xf32>
    %545 = vector.broadcast %544 : vector<16x1xf32> to vector<16x16xf32>
    %546 = arith.subf %542, %545 : vector<16x16xf32>
    %547 = math.exp %546 : vector<16x16xf32>
    %cst_250 = arith.constant dense<0.000000e+00> : vector<16xf32>
    %548 = vector.multi_reduction <add>, %547, %cst_250 [1] : vector<16x16xf32> to vector<16xf32>
    %549 = vector.shape_cast %548 : vector<16xf32> to vector<16x1xf32>
    %550 = tpu.reciprocal %549 {approx = true} : vector<16x1xf32> -> vector<16x1xf32>
    %cst_251 = arith.constant dense<0.000000e+00> : vector<16x8xf32>
    %551 = tpu.matmul %547, %540, %cst_251 {dimension_numbers = #tpu.dot_dimension_numbers<[1], [0], [0], [1], [0, 0, 1, 1], [], []>} : vector<16x16xf32>, vector<16x8xf32>, vector<16x8xf32> -> vector<16x8xf32>
    %552 = vector.broadcast %550 : vector<16x1xf32> to vector<16x8xf32>
    %553 = arith.mulf %551, %552 : vector<16x8xf32>
    %554 = vector.extract_strided_slice %473 {offsets = [24, 0], sizes = [8, 32], strides = [1, 1]} : vector<32x32xf32> to vector<8x32xf32>
    %cst_252 = arith.constant dense<0.000000e+00> : vector<16x32xf32>
    %555 = tpu.matmul %553, %554, %cst_252 {dimension_numbers = #tpu.dot_dimension_numbers<[1], [0], [0], [1], [0, 0, 1, 1], [], []>} : vector<16x8xf32>, vector<8x32xf32>, vector<16x32xf32> -> vector<16x32xf32>
    %556 = arith.addf %537, %555 : vector<16x32xf32>
    %557 = vector.broadcast %475 : vector<1x32xf32> to vector<16x32xf32>
    %558 = arith.addf %556, %557 : vector<16x32xf32>
    %c1_253 = arith.constant 1 : index
    %c0_254 = arith.constant 0 : index
    %c0_255 = arith.constant 0 : index
    %559 = vector.load %arg21[%c1_253, %c0_254, %c0_255] : memref<2x16x32xf32, #tpu.memory_space<vmem>>, vector<1x16x32xf32>
    %560 = vector.shape_cast %559 : vector<1x16x32xf32> to vector<16x32xf32>
    %561 = vector.shape_cast %480 : vector<16x32xf32> to vector<1x16x32xf32>
    tpu.vector_store %arg21[%c1_253, %c0_254, %c0_255], %561 {strides = array<i32>} : memref<2x16x32xf32, #tpu.memory_space<vmem>>, vector<1x16x32xf32>,
    %c1_256 = arith.constant 1 : index
    %c0_257 = arith.constant 0 : index
    %c0_258 = arith.constant 0 : index
    %562 = vector.load %arg22[%c1_256, %c0_257, %c0_258] : memref<2x16x32xf32, #tpu.memory_space<vmem>>, vector<1x16x32xf32>
    %563 = vector.shape_cast %562 : vector<1x16x32xf32> to vector<16x32xf32>
    %564 = vector.shape_cast %481 : vector<16x32xf32> to vector<1x16x32xf32>
    tpu.vector_store %arg22[%c1_256, %c0_257, %c0_258], %564 {strides = array<i32>} : memref<2x16x32xf32, #tpu.memory_space<vmem>>, vector<1x16x32xf32>,
    %565 = arith.addf %558, %467 : vector<16x32xf32>
    %c1_259 = arith.constant 1 : index
    %c0_260 = arith.constant 0 : index
    %c0_261 = arith.constant 0 : index
    %c0_262 = arith.constant 0 : index
    %566 = vector.load %arg12[%c1_259, %c0_260, %c0_261, %c0_262] : memref<2x3x1x32xf32, #tpu.memory_space<vmem>>, vector<1x1x1x32xf32>
    %567 = vector.shape_cast %566 : vector<1x1x1x32xf32> to vector<1x32xf32>
    %c1_263 = arith.constant 1 : index
    %c0_264 = arith.constant 0 : index
    %c0_265 = arith.constant 0 : index
    %c0_266 = arith.constant 0 : index
    %568 = vector.load %arg13[%c1_263, %c0_264, %c0_265, %c0_266] : memref<2x3x1x32xf32, #tpu.memory_space<vmem>>, vector<1x1x1x32xf32>
    %569 = vector.shape_cast %568 : vector<1x1x1x32xf32> to vector<1x32xf32>
    %cst_267 = arith.constant dense<0.000000e+00> : vector<16xf32>
    %570 = vector.multi_reduction <add>, %565, %cst_267 [1] : vector<16x32xf32> to vector<16xf32>
    %571 = vector.shape_cast %570 : vector<16xf32> to vector<16x1xf32>
    %cst_268 = arith.constant 3.200000e+01 : f32
    %572 = vector.broadcast %cst_268 : f32 to vector<16x1xf32>
    %573 = arith.divf %571, %572 : vector<16x1xf32>
    %574 = vector.broadcast %573 : vector<16x1xf32> to vector<16x32xf32>
    %575 = arith.subf %565, %574 : vector<16x32xf32>
    %576 = arith.mulf %575, %575 : vector<16x32xf32>
    %cst_269 = arith.constant dense<0.000000e+00> : vector<16xf32>
    %577 = vector.multi_reduction <add>, %576, %cst_269 [1] : vector<16x32xf32> to vector<16xf32>
    %578 = vector.shape_cast %577 : vector<16xf32> to vector<16x1xf32>
    %cst_270 = arith.constant 3.200000e+01 : f32
    %579 = vector.broadcast %cst_270 : f32 to vector<16x1xf32>
    %580 = arith.divf %578, %579 : vector<16x1xf32>
    %581 = vector.broadcast %573 : vector<16x1xf32> to vector<16x32xf32>
    %582 = arith.subf %565, %581 : vector<16x32xf32>
    %cst_271 = arith.constant 9.99999974E-6 : f32
    %583 = vector.broadcast %cst_271 : f32 to vector<16x1xf32>
    %584 = arith.addf %580, %583 : vector<16x1xf32>
    %585 = math.rsqrt %584 : vector<16x1xf32>
    %586 = vector.broadcast %585 : vector<16x1xf32> to vector<16x32xf32>
    %587 = arith.mulf %582, %586 : vector<16x32xf32>
    %588 = vector.broadcast %567 : vector<1x32xf32> to vector<16x32xf32>
    %589 = arith.mulf %587, %588 : vector<16x32xf32>
    %590 = vector.broadcast %569 : vector<1x32xf32> to vector<16x32xf32>
    %591 = arith.addf %589, %590 : vector<16x32xf32>
    %c1_272 = arith.constant 1 : index
    %c1_273 = arith.constant 1 : index
    %c0_274 = arith.constant 0 : index
    %c0_275 = arith.constant 0 : index
    %592 = vector.load %arg8[%c1_272, %c1_273, %c0_274, %c0_275] : memref<2x3x32x96xf32, #tpu.memory_space<vmem>>, vector<1x1x32x96xf32>
    %593 = vector.shape_cast %592 : vector<1x1x32x96xf32> to vector<32x96xf32>
    %c1_276 = arith.constant 1 : index
    %c1_277 = arith.constant 1 : index
    %c0_278 = arith.constant 0 : index
    %c0_279 = arith.constant 0 : index
    %594 = vector.load %arg9[%c1_276, %c1_277, %c0_278, %c0_279] : memref<2x3x1x96xf32, #tpu.memory_space<vmem>>, vector<1x1x1x96xf32>
    %595 = vector.shape_cast %594 : vector<1x1x1x96xf32> to vector<1x96xf32>
    %c1_280 = arith.constant 1 : index
    %c1_281 = arith.constant 1 : index
    %c0_282 = arith.constant 0 : index
    %c0_283 = arith.constant 0 : index
    %596 = vector.load %arg10[%c1_280, %c1_281, %c0_282, %c0_283] : memref<2x3x32x32xf32, #tpu.memory_space<vmem>>, vector<1x1x32x32xf32>
    %597 = vector.shape_cast %596 : vector<1x1x32x32xf32> to vector<32x32xf32>
    %c1_284 = arith.constant 1 : index
    %c1_285 = arith.constant 1 : index
    %c0_286 = arith.constant 0 : index
    %c0_287 = arith.constant 0 : index
    %598 = vector.load %arg11[%c1_284, %c1_285, %c0_286, %c0_287] : memref<2x3x1x32xf32, #tpu.memory_space<vmem>>, vector<1x1x1x32xf32>
    %599 = vector.shape_cast %598 : vector<1x1x1x32xf32> to vector<1x32xf32>
    %600 = vector.extract_strided_slice %593 {offsets = [0, 0], sizes = [32, 32], strides = [1, 1]} : vector<32x96xf32> to vector<32x32xf32>
    %cst_288 = arith.constant dense<0.000000e+00> : vector<16x32xf32>
    %601 = tpu.matmul %591, %600, %cst_288 {dimension_numbers = #tpu.dot_dimension_numbers<[1], [0], [0], [1], [0, 0, 1, 1], [], []>} : vector<16x32xf32>, vector<32x32xf32>, vector<16x32xf32> -> vector<16x32xf32>
    %602 = vector.extract_strided_slice %595 {offsets = [0, 0], sizes = [1, 32], strides = [1, 1]} : vector<1x96xf32> to vector<1x32xf32>
    %603 = vector.broadcast %602 : vector<1x32xf32> to vector<16x32xf32>
    %604 = arith.addf %601, %603 : vector<16x32xf32>
    %605 = vector.extract_strided_slice %593 {offsets = [0, 32], sizes = [32, 64], strides = [1, 1]} : vector<32x96xf32> to vector<32x64xf32>
    %cst_289 = arith.constant dense<0.000000e+00> : vector<16x64xf32>
    %606 = tpu.matmul %25, %605, %cst_289 {dimension_numbers = #tpu.dot_dimension_numbers<[1], [0], [0], [1], [0, 0, 1, 1], [], []>} : vector<16x32xf32>, vector<32x64xf32>, vector<16x64xf32> -> vector<16x64xf32>
    %607 = vector.extract_strided_slice %595 {offsets = [0, 32], sizes = [1, 64], strides = [1, 1]} : vector<1x96xf32> to vector<1x64xf32>
    %608 = vector.broadcast %607 : vector<1x64xf32> to vector<16x64xf32>
    %609 = arith.addf %606, %608 : vector<16x64xf32>
    %610 = vector.extract_strided_slice %609 {offsets = [0, 0], sizes = [16, 32], strides = [1, 1]} : vector<16x64xf32> to vector<16x32xf32>
    %611 = vector.extract_strided_slice %609 {offsets = [0, 32], sizes = [16, 32], strides = [1, 1]} : vector<16x64xf32> to vector<16x32xf32>
    %612 = vector.extract_strided_slice %604 {offsets = [0, 0], sizes = [16, 8], strides = [1, 1]} : vector<16x32xf32> to vector<16x8xf32>
    %613 = vector.extract_strided_slice %610 {offsets = [0, 0], sizes = [16, 8], strides = [1, 1]} : vector<16x32xf32> to vector<16x8xf32>
    %614 = vector.extract_strided_slice %611 {offsets = [0, 0], sizes = [16, 8], strides = [1, 1]} : vector<16x32xf32> to vector<16x8xf32>
    %cst_290 = arith.constant dense<0.000000e+00> : vector<16x16xf32>
    %615 = tpu.matmul %612, %613, %cst_290 {dimension_numbers = #tpu.dot_dimension_numbers<[1], [1], [0], [0], [0, 0, 1, 0], [], []>} : vector<16x8xf32>, vector<16x8xf32>, vector<16x16xf32> -> vector<16x16xf32>
    %616 = arith.addf %615, %28 : vector<16x16xf32>
    %cst_291 = arith.constant dense<0xFF800000> : vector<16xf32>
    %617 = vector.multi_reduction <maximumf>, %616, %cst_291 [1] : vector<16x16xf32> to vector<16xf32>
    %618 = vector.shape_cast %617 : vector<16xf32> to vector<16x1xf32>
    %619 = vector.broadcast %618 : vector<16x1xf32> to vector<16x16xf32>
    %620 = arith.subf %616, %619 : vector<16x16xf32>
    %621 = math.exp %620 : vector<16x16xf32>
    %cst_292 = arith.constant dense<0.000000e+00> : vector<16xf32>
    %622 = vector.multi_reduction <add>, %621, %cst_292 [1] : vector<16x16xf32> to vector<16xf32>
    %623 = vector.shape_cast %622 : vector<16xf32> to vector<16x1xf32>
    %624 = tpu.reciprocal %623 {approx = true} : vector<16x1xf32> -> vector<16x1xf32>
    %cst_293 = arith.constant dense<0.000000e+00> : vector<16x8xf32>
    %625 = tpu.matmul %621, %614, %cst_293 {dimension_numbers = #tpu.dot_dimension_numbers<[1], [0], [0], [1], [0, 0, 1, 1], [], []>} : vector<16x16xf32>, vector<16x8xf32>, vector<16x8xf32> -> vector<16x8xf32>
    %626 = vector.broadcast %624 : vector<16x1xf32> to vector<16x8xf32>
    %627 = arith.mulf %625, %626 : vector<16x8xf32>
    %628 = vector.extract_strided_slice %597 {offsets = [0, 0], sizes = [8, 32], strides = [1, 1]} : vector<32x32xf32> to vector<8x32xf32>
    %cst_294 = arith.constant dense<0.000000e+00> : vector<16x32xf32>
    %629 = tpu.matmul %627, %628, %cst_294 {dimension_numbers = #tpu.dot_dimension_numbers<[1], [0], [0], [1], [0, 0, 1, 1], [], []>} : vector<16x8xf32>, vector<8x32xf32>, vector<16x32xf32> -> vector<16x32xf32>
    %630 = vector.extract_strided_slice %604 {offsets = [0, 8], sizes = [16, 8], strides = [1, 1]} : vector<16x32xf32> to vector<16x8xf32>
    %631 = vector.extract_strided_slice %610 {offsets = [0, 8], sizes = [16, 8], strides = [1, 1]} : vector<16x32xf32> to vector<16x8xf32>
    %632 = vector.extract_strided_slice %611 {offsets = [0, 8], sizes = [16, 8], strides = [1, 1]} : vector<16x32xf32> to vector<16x8xf32>
    %cst_295 = arith.constant dense<0.000000e+00> : vector<16x16xf32>
    %633 = tpu.matmul %630, %631, %cst_295 {dimension_numbers = #tpu.dot_dimension_numbers<[1], [1], [0], [0], [0, 0, 1, 0], [], []>} : vector<16x8xf32>, vector<16x8xf32>, vector<16x16xf32> -> vector<16x16xf32>
    %634 = arith.addf %633, %28 : vector<16x16xf32>
    %cst_296 = arith.constant dense<0xFF800000> : vector<16xf32>
    %635 = vector.multi_reduction <maximumf>, %634, %cst_296 [1] : vector<16x16xf32> to vector<16xf32>
    %636 = vector.shape_cast %635 : vector<16xf32> to vector<16x1xf32>
    %637 = vector.broadcast %636 : vector<16x1xf32> to vector<16x16xf32>
    %638 = arith.subf %634, %637 : vector<16x16xf32>
    %639 = math.exp %638 : vector<16x16xf32>
    %cst_297 = arith.constant dense<0.000000e+00> : vector<16xf32>
    %640 = vector.multi_reduction <add>, %639, %cst_297 [1] : vector<16x16xf32> to vector<16xf32>
    %641 = vector.shape_cast %640 : vector<16xf32> to vector<16x1xf32>
    %642 = tpu.reciprocal %641 {approx = true} : vector<16x1xf32> -> vector<16x1xf32>
    %cst_298 = arith.constant dense<0.000000e+00> : vector<16x8xf32>
    %643 = tpu.matmul %639, %632, %cst_298 {dimension_numbers = #tpu.dot_dimension_numbers<[1], [0], [0], [1], [0, 0, 1, 1], [], []>} : vector<16x16xf32>, vector<16x8xf32>, vector<16x8xf32> -> vector<16x8xf32>
    %644 = vector.broadcast %642 : vector<16x1xf32> to vector<16x8xf32>
    %645 = arith.mulf %643, %644 : vector<16x8xf32>
    %646 = vector.extract_strided_slice %597 {offsets = [8, 0], sizes = [8, 32], strides = [1, 1]} : vector<32x32xf32> to vector<8x32xf32>
    %cst_299 = arith.constant dense<0.000000e+00> : vector<16x32xf32>
    %647 = tpu.matmul %645, %646, %cst_299 {dimension_numbers = #tpu.dot_dimension_numbers<[1], [0], [0], [1], [0, 0, 1, 1], [], []>} : vector<16x8xf32>, vector<8x32xf32>, vector<16x32xf32> -> vector<16x32xf32>
    %648 = arith.addf %629, %647 : vector<16x32xf32>
    %649 = vector.extract_strided_slice %604 {offsets = [0, 16], sizes = [16, 8], strides = [1, 1]} : vector<16x32xf32> to vector<16x8xf32>
    %650 = vector.extract_strided_slice %610 {offsets = [0, 16], sizes = [16, 8], strides = [1, 1]} : vector<16x32xf32> to vector<16x8xf32>
    %651 = vector.extract_strided_slice %611 {offsets = [0, 16], sizes = [16, 8], strides = [1, 1]} : vector<16x32xf32> to vector<16x8xf32>
    %cst_300 = arith.constant dense<0.000000e+00> : vector<16x16xf32>
    %652 = tpu.matmul %649, %650, %cst_300 {dimension_numbers = #tpu.dot_dimension_numbers<[1], [1], [0], [0], [0, 0, 1, 0], [], []>} : vector<16x8xf32>, vector<16x8xf32>, vector<16x16xf32> -> vector<16x16xf32>
    %653 = arith.addf %652, %28 : vector<16x16xf32>
    %cst_301 = arith.constant dense<0xFF800000> : vector<16xf32>
    %654 = vector.multi_reduction <maximumf>, %653, %cst_301 [1] : vector<16x16xf32> to vector<16xf32>
    %655 = vector.shape_cast %654 : vector<16xf32> to vector<16x1xf32>
    %656 = vector.broadcast %655 : vector<16x1xf32> to vector<16x16xf32>
    %657 = arith.subf %653, %656 : vector<16x16xf32>
    %658 = math.exp %657 : vector<16x16xf32>
    %cst_302 = arith.constant dense<0.000000e+00> : vector<16xf32>
    %659 = vector.multi_reduction <add>, %658, %cst_302 [1] : vector<16x16xf32> to vector<16xf32>
    %660 = vector.shape_cast %659 : vector<16xf32> to vector<16x1xf32>
    %661 = tpu.reciprocal %660 {approx = true} : vector<16x1xf32> -> vector<16x1xf32>
    %cst_303 = arith.constant dense<0.000000e+00> : vector<16x8xf32>
    %662 = tpu.matmul %658, %651, %cst_303 {dimension_numbers = #tpu.dot_dimension_numbers<[1], [0], [0], [1], [0, 0, 1, 1], [], []>} : vector<16x16xf32>, vector<16x8xf32>, vector<16x8xf32> -> vector<16x8xf32>
    %663 = vector.broadcast %661 : vector<16x1xf32> to vector<16x8xf32>
    %664 = arith.mulf %662, %663 : vector<16x8xf32>
    %665 = vector.extract_strided_slice %597 {offsets = [16, 0], sizes = [8, 32], strides = [1, 1]} : vector<32x32xf32> to vector<8x32xf32>
    %cst_304 = arith.constant dense<0.000000e+00> : vector<16x32xf32>
    %666 = tpu.matmul %664, %665, %cst_304 {dimension_numbers = #tpu.dot_dimension_numbers<[1], [0], [0], [1], [0, 0, 1, 1], [], []>} : vector<16x8xf32>, vector<8x32xf32>, vector<16x32xf32> -> vector<16x32xf32>
    %667 = arith.addf %648, %666 : vector<16x32xf32>
    %668 = vector.extract_strided_slice %604 {offsets = [0, 24], sizes = [16, 8], strides = [1, 1]} : vector<16x32xf32> to vector<16x8xf32>
    %669 = vector.extract_strided_slice %610 {offsets = [0, 24], sizes = [16, 8], strides = [1, 1]} : vector<16x32xf32> to vector<16x8xf32>
    %670 = vector.extract_strided_slice %611 {offsets = [0, 24], sizes = [16, 8], strides = [1, 1]} : vector<16x32xf32> to vector<16x8xf32>
    %cst_305 = arith.constant dense<0.000000e+00> : vector<16x16xf32>
    %671 = tpu.matmul %668, %669, %cst_305 {dimension_numbers = #tpu.dot_dimension_numbers<[1], [1], [0], [0], [0, 0, 1, 0], [], []>} : vector<16x8xf32>, vector<16x8xf32>, vector<16x16xf32> -> vector<16x16xf32>
    %672 = arith.addf %671, %28 : vector<16x16xf32>
    %cst_306 = arith.constant dense<0xFF800000> : vector<16xf32>
    %673 = vector.multi_reduction <maximumf>, %672, %cst_306 [1] : vector<16x16xf32> to vector<16xf32>
    %674 = vector.shape_cast %673 : vector<16xf32> to vector<16x1xf32>
    %675 = vector.broadcast %674 : vector<16x1xf32> to vector<16x16xf32>
    %676 = arith.subf %672, %675 : vector<16x16xf32>
    %677 = math.exp %676 : vector<16x16xf32>
    %cst_307 = arith.constant dense<0.000000e+00> : vector<16xf32>
    %678 = vector.multi_reduction <add>, %677, %cst_307 [1] : vector<16x16xf32> to vector<16xf32>
    %679 = vector.shape_cast %678 : vector<16xf32> to vector<16x1xf32>
    %680 = tpu.reciprocal %679 {approx = true} : vector<16x1xf32> -> vector<16x1xf32>
    %cst_308 = arith.constant dense<0.000000e+00> : vector<16x8xf32>
    %681 = tpu.matmul %677, %670, %cst_308 {dimension_numbers = #tpu.dot_dimension_numbers<[1], [0], [0], [1], [0, 0, 1, 1], [], []>} : vector<16x16xf32>, vector<16x8xf32>, vector<16x8xf32> -> vector<16x8xf32>
    %682 = vector.broadcast %680 : vector<16x1xf32> to vector<16x8xf32>
    %683 = arith.mulf %681, %682 : vector<16x8xf32>
    %684 = vector.extract_strided_slice %597 {offsets = [24, 0], sizes = [8, 32], strides = [1, 1]} : vector<32x32xf32> to vector<8x32xf32>
    %cst_309 = arith.constant dense<0.000000e+00> : vector<16x32xf32>
    %685 = tpu.matmul %683, %684, %cst_309 {dimension_numbers = #tpu.dot_dimension_numbers<[1], [0], [0], [1], [0, 0, 1, 1], [], []>} : vector<16x8xf32>, vector<8x32xf32>, vector<16x32xf32> -> vector<16x32xf32>
    %686 = arith.addf %667, %685 : vector<16x32xf32>
    %687 = vector.broadcast %599 : vector<1x32xf32> to vector<16x32xf32>
    %688 = arith.addf %686, %687 : vector<16x32xf32>
    %c1_310 = arith.constant 1 : index
    %c0_311 = arith.constant 0 : index
    %c0_312 = arith.constant 0 : index
    %689 = vector.load %arg23[%c1_310, %c0_311, %c0_312] : memref<2x16x32xf32, #tpu.memory_space<vmem>>, vector<1x16x32xf32>
    %690 = vector.shape_cast %689 : vector<1x16x32xf32> to vector<16x32xf32>
    %691 = vector.shape_cast %610 : vector<16x32xf32> to vector<1x16x32xf32>
    tpu.vector_store %arg23[%c1_310, %c0_311, %c0_312], %691 {strides = array<i32>} : memref<2x16x32xf32, #tpu.memory_space<vmem>>, vector<1x16x32xf32>,
    %c1_313 = arith.constant 1 : index
    %c0_314 = arith.constant 0 : index
    %c0_315 = arith.constant 0 : index
    %692 = vector.load %arg24[%c1_313, %c0_314, %c0_315] : memref<2x16x32xf32, #tpu.memory_space<vmem>>, vector<1x16x32xf32>
    %693 = vector.shape_cast %692 : vector<1x16x32xf32> to vector<16x32xf32>
    %694 = vector.shape_cast %611 : vector<16x32xf32> to vector<1x16x32xf32>
    tpu.vector_store %arg24[%c1_313, %c0_314, %c0_315], %694 {strides = array<i32>} : memref<2x16x32xf32, #tpu.memory_space<vmem>>, vector<1x16x32xf32>,
    %695 = arith.addf %688, %591 : vector<16x32xf32>
    %c1_316 = arith.constant 1 : index
    %c1_317 = arith.constant 1 : index
    %c0_318 = arith.constant 0 : index
    %c0_319 = arith.constant 0 : index
    %696 = vector.load %arg12[%c1_316, %c1_317, %c0_318, %c0_319] : memref<2x3x1x32xf32, #tpu.memory_space<vmem>>, vector<1x1x1x32xf32>
    %697 = vector.shape_cast %696 : vector<1x1x1x32xf32> to vector<1x32xf32>
    %c1_320 = arith.constant 1 : index
    %c1_321 = arith.constant 1 : index
    %c0_322 = arith.constant 0 : index
    %c0_323 = arith.constant 0 : index
    %698 = vector.load %arg13[%c1_320, %c1_321, %c0_322, %c0_323] : memref<2x3x1x32xf32, #tpu.memory_space<vmem>>, vector<1x1x1x32xf32>
    %699 = vector.shape_cast %698 : vector<1x1x1x32xf32> to vector<1x32xf32>
    %cst_324 = arith.constant dense<0.000000e+00> : vector<16xf32>
    %700 = vector.multi_reduction <add>, %695, %cst_324 [1] : vector<16x32xf32> to vector<16xf32>
    %701 = vector.shape_cast %700 : vector<16xf32> to vector<16x1xf32>
    %cst_325 = arith.constant 3.200000e+01 : f32
    %702 = vector.broadcast %cst_325 : f32 to vector<16x1xf32>
    %703 = arith.divf %701, %702 : vector<16x1xf32>
    %704 = vector.broadcast %703 : vector<16x1xf32> to vector<16x32xf32>
    %705 = arith.subf %695, %704 : vector<16x32xf32>
    %706 = arith.mulf %705, %705 : vector<16x32xf32>
    %cst_326 = arith.constant dense<0.000000e+00> : vector<16xf32>
    %707 = vector.multi_reduction <add>, %706, %cst_326 [1] : vector<16x32xf32> to vector<16xf32>
    %708 = vector.shape_cast %707 : vector<16xf32> to vector<16x1xf32>
    %cst_327 = arith.constant 3.200000e+01 : f32
    %709 = vector.broadcast %cst_327 : f32 to vector<16x1xf32>
    %710 = arith.divf %708, %709 : vector<16x1xf32>
    %711 = vector.broadcast %703 : vector<16x1xf32> to vector<16x32xf32>
    %712 = arith.subf %695, %711 : vector<16x32xf32>
    %cst_328 = arith.constant 9.99999974E-6 : f32
    %713 = vector.broadcast %cst_328 : f32 to vector<16x1xf32>
    %714 = arith.addf %710, %713 : vector<16x1xf32>
    %715 = math.rsqrt %714 : vector<16x1xf32>
    %716 = vector.broadcast %715 : vector<16x1xf32> to vector<16x32xf32>
    %717 = arith.mulf %712, %716 : vector<16x32xf32>
    %718 = vector.broadcast %697 : vector<1x32xf32> to vector<16x32xf32>
    %719 = arith.mulf %717, %718 : vector<16x32xf32>
    %720 = vector.broadcast %699 : vector<1x32xf32> to vector<16x32xf32>
    %721 = arith.addf %719, %720 : vector<16x32xf32>
    %c1_329 = arith.constant 1 : index
    %c2_330 = arith.constant 2 : index
    %c0_331 = arith.constant 0 : index
    %c0_332 = arith.constant 0 : index
    %722 = vector.load %arg8[%c1_329, %c2_330, %c0_331, %c0_332] : memref<2x3x32x96xf32, #tpu.memory_space<vmem>>, vector<1x1x32x96xf32>
    %723 = vector.shape_cast %722 : vector<1x1x32x96xf32> to vector<32x96xf32>
    %c1_333 = arith.constant 1 : index
    %c2_334 = arith.constant 2 : index
    %c0_335 = arith.constant 0 : index
    %c0_336 = arith.constant 0 : index
    %724 = vector.load %arg9[%c1_333, %c2_334, %c0_335, %c0_336] : memref<2x3x1x96xf32, #tpu.memory_space<vmem>>, vector<1x1x1x96xf32>
    %725 = vector.shape_cast %724 : vector<1x1x1x96xf32> to vector<1x96xf32>
    %c1_337 = arith.constant 1 : index
    %c2_338 = arith.constant 2 : index
    %c0_339 = arith.constant 0 : index
    %c0_340 = arith.constant 0 : index
    %726 = vector.load %arg10[%c1_337, %c2_338, %c0_339, %c0_340] : memref<2x3x32x32xf32, #tpu.memory_space<vmem>>, vector<1x1x32x32xf32>
    %727 = vector.shape_cast %726 : vector<1x1x32x32xf32> to vector<32x32xf32>
    %c1_341 = arith.constant 1 : index
    %c2_342 = arith.constant 2 : index
    %c0_343 = arith.constant 0 : index
    %c0_344 = arith.constant 0 : index
    %728 = vector.load %arg11[%c1_341, %c2_342, %c0_343, %c0_344] : memref<2x3x1x32xf32, #tpu.memory_space<vmem>>, vector<1x1x1x32xf32>
    %729 = vector.shape_cast %728 : vector<1x1x1x32xf32> to vector<1x32xf32>
    %730 = vector.extract_strided_slice %723 {offsets = [0, 0], sizes = [32, 32], strides = [1, 1]} : vector<32x96xf32> to vector<32x32xf32>
    %cst_345 = arith.constant dense<0.000000e+00> : vector<16x32xf32>
    %731 = tpu.matmul %721, %730, %cst_345 {dimension_numbers = #tpu.dot_dimension_numbers<[1], [0], [0], [1], [0, 0, 1, 1], [], []>} : vector<16x32xf32>, vector<32x32xf32>, vector<16x32xf32> -> vector<16x32xf32>
    %732 = vector.extract_strided_slice %725 {offsets = [0, 0], sizes = [1, 32], strides = [1, 1]} : vector<1x96xf32> to vector<1x32xf32>
    %733 = vector.broadcast %732 : vector<1x32xf32> to vector<16x32xf32>
    %734 = arith.addf %731, %733 : vector<16x32xf32>
    %735 = vector.extract_strided_slice %723 {offsets = [0, 32], sizes = [32, 64], strides = [1, 1]} : vector<32x96xf32> to vector<32x64xf32>
    %cst_346 = arith.constant dense<0.000000e+00> : vector<32x64xf32>
    %736 = tpu.matmul %26, %735, %cst_346 {dimension_numbers = #tpu.dot_dimension_numbers<[1], [0], [0], [1], [0, 0, 1, 1], [], []>} : vector<32x32xf32>, vector<32x64xf32>, vector<32x64xf32> -> vector<32x64xf32>
    %737 = vector.extract_strided_slice %725 {offsets = [0, 32], sizes = [1, 64], strides = [1, 1]} : vector<1x96xf32> to vector<1x64xf32>
    %738 = vector.broadcast %737 : vector<1x64xf32> to vector<32x64xf32>
    %739 = arith.addf %736, %738 : vector<32x64xf32>
    %740 = vector.extract_strided_slice %739 {offsets = [0, 0], sizes = [32, 32], strides = [1, 1]} : vector<32x64xf32> to vector<32x32xf32>
    %741 = vector.extract_strided_slice %739 {offsets = [0, 32], sizes = [32, 32], strides = [1, 1]} : vector<32x64xf32> to vector<32x32xf32>
    %742 = vector.extract_strided_slice %734 {offsets = [0, 0], sizes = [16, 8], strides = [1, 1]} : vector<16x32xf32> to vector<16x8xf32>
    %743 = vector.extract_strided_slice %740 {offsets = [0, 0], sizes = [32, 8], strides = [1, 1]} : vector<32x32xf32> to vector<32x8xf32>
    %744 = vector.extract_strided_slice %741 {offsets = [0, 0], sizes = [32, 8], strides = [1, 1]} : vector<32x32xf32> to vector<32x8xf32>
    %cst_347 = arith.constant dense<0.000000e+00> : vector<16x32xf32>
    %745 = tpu.matmul %742, %743, %cst_347 {dimension_numbers = #tpu.dot_dimension_numbers<[1], [1], [0], [0], [0, 0, 1, 0], [], []>} : vector<16x8xf32>, vector<32x8xf32>, vector<16x32xf32> -> vector<16x32xf32>
    %746 = arith.addf %745, %29 : vector<16x32xf32>
    %cst_348 = arith.constant dense<0xFF800000> : vector<16xf32>
    %747 = vector.multi_reduction <maximumf>, %746, %cst_348 [1] : vector<16x32xf32> to vector<16xf32>
    %748 = vector.shape_cast %747 : vector<16xf32> to vector<16x1xf32>
    %749 = vector.broadcast %748 : vector<16x1xf32> to vector<16x32xf32>
    %750 = arith.subf %746, %749 : vector<16x32xf32>
    %751 = math.exp %750 : vector<16x32xf32>
    %cst_349 = arith.constant dense<0.000000e+00> : vector<16xf32>
    %752 = vector.multi_reduction <add>, %751, %cst_349 [1] : vector<16x32xf32> to vector<16xf32>
    %753 = vector.shape_cast %752 : vector<16xf32> to vector<16x1xf32>
    %754 = tpu.reciprocal %753 {approx = true} : vector<16x1xf32> -> vector<16x1xf32>
    %cst_350 = arith.constant dense<0.000000e+00> : vector<16x8xf32>
    %755 = tpu.matmul %751, %744, %cst_350 {dimension_numbers = #tpu.dot_dimension_numbers<[1], [0], [0], [1], [0, 0, 1, 1], [], []>} : vector<16x32xf32>, vector<32x8xf32>, vector<16x8xf32> -> vector<16x8xf32>
    %756 = vector.broadcast %754 : vector<16x1xf32> to vector<16x8xf32>
    %757 = arith.mulf %755, %756 : vector<16x8xf32>
    %758 = vector.extract_strided_slice %727 {offsets = [0, 0], sizes = [8, 32], strides = [1, 1]} : vector<32x32xf32> to vector<8x32xf32>
    %cst_351 = arith.constant dense<0.000000e+00> : vector<16x32xf32>
    %759 = tpu.matmul %757, %758, %cst_351 {dimension_numbers = #tpu.dot_dimension_numbers<[1], [0], [0], [1], [0, 0, 1, 1], [], []>} : vector<16x8xf32>, vector<8x32xf32>, vector<16x32xf32> -> vector<16x32xf32>
    %760 = vector.extract_strided_slice %734 {offsets = [0, 8], sizes = [16, 8], strides = [1, 1]} : vector<16x32xf32> to vector<16x8xf32>
    %761 = vector.extract_strided_slice %740 {offsets = [0, 8], sizes = [32, 8], strides = [1, 1]} : vector<32x32xf32> to vector<32x8xf32>
    %762 = vector.extract_strided_slice %741 {offsets = [0, 8], sizes = [32, 8], strides = [1, 1]} : vector<32x32xf32> to vector<32x8xf32>
    %cst_352 = arith.constant dense<0.000000e+00> : vector<16x32xf32>
    %763 = tpu.matmul %760, %761, %cst_352 {dimension_numbers = #tpu.dot_dimension_numbers<[1], [1], [0], [0], [0, 0, 1, 0], [], []>} : vector<16x8xf32>, vector<32x8xf32>, vector<16x32xf32> -> vector<16x32xf32>
    %764 = arith.addf %763, %29 : vector<16x32xf32>
    %cst_353 = arith.constant dense<0xFF800000> : vector<16xf32>
    %765 = vector.multi_reduction <maximumf>, %764, %cst_353 [1] : vector<16x32xf32> to vector<16xf32>
    %766 = vector.shape_cast %765 : vector<16xf32> to vector<16x1xf32>
    %767 = vector.broadcast %766 : vector<16x1xf32> to vector<16x32xf32>
    %768 = arith.subf %764, %767 : vector<16x32xf32>
    %769 = math.exp %768 : vector<16x32xf32>
    %cst_354 = arith.constant dense<0.000000e+00> : vector<16xf32>
    %770 = vector.multi_reduction <add>, %769, %cst_354 [1] : vector<16x32xf32> to vector<16xf32>
    %771 = vector.shape_cast %770 : vector<16xf32> to vector<16x1xf32>
    %772 = tpu.reciprocal %771 {approx = true} : vector<16x1xf32> -> vector<16x1xf32>
    %cst_355 = arith.constant dense<0.000000e+00> : vector<16x8xf32>
    %773 = tpu.matmul %769, %762, %cst_355 {dimension_numbers = #tpu.dot_dimension_numbers<[1], [0], [0], [1], [0, 0, 1, 1], [], []>} : vector<16x32xf32>, vector<32x8xf32>, vector<16x8xf32> -> vector<16x8xf32>
    %774 = vector.broadcast %772 : vector<16x1xf32> to vector<16x8xf32>
    %775 = arith.mulf %773, %774 : vector<16x8xf32>
    %776 = vector.extract_strided_slice %727 {offsets = [8, 0], sizes = [8, 32], strides = [1, 1]} : vector<32x32xf32> to vector<8x32xf32>
    %cst_356 = arith.constant dense<0.000000e+00> : vector<16x32xf32>
    %777 = tpu.matmul %775, %776, %cst_356 {dimension_numbers = #tpu.dot_dimension_numbers<[1], [0], [0], [1], [0, 0, 1, 1], [], []>} : vector<16x8xf32>, vector<8x32xf32>, vector<16x32xf32> -> vector<16x32xf32>
    %778 = arith.addf %759, %777 : vector<16x32xf32>
    %779 = vector.extract_strided_slice %734 {offsets = [0, 16], sizes = [16, 8], strides = [1, 1]} : vector<16x32xf32> to vector<16x8xf32>
    %780 = vector.extract_strided_slice %740 {offsets = [0, 16], sizes = [32, 8], strides = [1, 1]} : vector<32x32xf32> to vector<32x8xf32>
    %781 = vector.extract_strided_slice %741 {offsets = [0, 16], sizes = [32, 8], strides = [1, 1]} : vector<32x32xf32> to vector<32x8xf32>
    %cst_357 = arith.constant dense<0.000000e+00> : vector<16x32xf32>
    %782 = tpu.matmul %779, %780, %cst_357 {dimension_numbers = #tpu.dot_dimension_numbers<[1], [1], [0], [0], [0, 0, 1, 0], [], []>} : vector<16x8xf32>, vector<32x8xf32>, vector<16x32xf32> -> vector<16x32xf32>
    %783 = arith.addf %782, %29 : vector<16x32xf32>
    %cst_358 = arith.constant dense<0xFF800000> : vector<16xf32>
    %784 = vector.multi_reduction <maximumf>, %783, %cst_358 [1] : vector<16x32xf32> to vector<16xf32>
    %785 = vector.shape_cast %784 : vector<16xf32> to vector<16x1xf32>
    %786 = vector.broadcast %785 : vector<16x1xf32> to vector<16x32xf32>
    %787 = arith.subf %783, %786 : vector<16x32xf32>
    %788 = math.exp %787 : vector<16x32xf32>
    %cst_359 = arith.constant dense<0.000000e+00> : vector<16xf32>
    %789 = vector.multi_reduction <add>, %788, %cst_359 [1] : vector<16x32xf32> to vector<16xf32>
    %790 = vector.shape_cast %789 : vector<16xf32> to vector<16x1xf32>
    %791 = tpu.reciprocal %790 {approx = true} : vector<16x1xf32> -> vector<16x1xf32>
    %cst_360 = arith.constant dense<0.000000e+00> : vector<16x8xf32>
    %792 = tpu.matmul %788, %781, %cst_360 {dimension_numbers = #tpu.dot_dimension_numbers<[1], [0], [0], [1], [0, 0, 1, 1], [], []>} : vector<16x32xf32>, vector<32x8xf32>, vector<16x8xf32> -> vector<16x8xf32>
    %793 = vector.broadcast %791 : vector<16x1xf32> to vector<16x8xf32>
    %794 = arith.mulf %792, %793 : vector<16x8xf32>
    %795 = vector.extract_strided_slice %727 {offsets = [16, 0], sizes = [8, 32], strides = [1, 1]} : vector<32x32xf32> to vector<8x32xf32>
    %cst_361 = arith.constant dense<0.000000e+00> : vector<16x32xf32>
    %796 = tpu.matmul %794, %795, %cst_361 {dimension_numbers = #tpu.dot_dimension_numbers<[1], [0], [0], [1], [0, 0, 1, 1], [], []>} : vector<16x8xf32>, vector<8x32xf32>, vector<16x32xf32> -> vector<16x32xf32>
    %797 = arith.addf %778, %796 : vector<16x32xf32>
    %798 = vector.extract_strided_slice %734 {offsets = [0, 24], sizes = [16, 8], strides = [1, 1]} : vector<16x32xf32> to vector<16x8xf32>
    %799 = vector.extract_strided_slice %740 {offsets = [0, 24], sizes = [32, 8], strides = [1, 1]} : vector<32x32xf32> to vector<32x8xf32>
    %800 = vector.extract_strided_slice %741 {offsets = [0, 24], sizes = [32, 8], strides = [1, 1]} : vector<32x32xf32> to vector<32x8xf32>
    %cst_362 = arith.constant dense<0.000000e+00> : vector<16x32xf32>
    %801 = tpu.matmul %798, %799, %cst_362 {dimension_numbers = #tpu.dot_dimension_numbers<[1], [1], [0], [0], [0, 0, 1, 0], [], []>} : vector<16x8xf32>, vector<32x8xf32>, vector<16x32xf32> -> vector<16x32xf32>
    %802 = arith.addf %801, %29 : vector<16x32xf32>
    %cst_363 = arith.constant dense<0xFF800000> : vector<16xf32>
    %803 = vector.multi_reduction <maximumf>, %802, %cst_363 [1] : vector<16x32xf32> to vector<16xf32>
    %804 = vector.shape_cast %803 : vector<16xf32> to vector<16x1xf32>
    %805 = vector.broadcast %804 : vector<16x1xf32> to vector<16x32xf32>
    %806 = arith.subf %802, %805 : vector<16x32xf32>
    %807 = math.exp %806 : vector<16x32xf32>
    %cst_364 = arith.constant dense<0.000000e+00> : vector<16xf32>
    %808 = vector.multi_reduction <add>, %807, %cst_364 [1] : vector<16x32xf32> to vector<16xf32>
    %809 = vector.shape_cast %808 : vector<16xf32> to vector<16x1xf32>
    %810 = tpu.reciprocal %809 {approx = true} : vector<16x1xf32> -> vector<16x1xf32>
    %cst_365 = arith.constant dense<0.000000e+00> : vector<16x8xf32>
    %811 = tpu.matmul %807, %800, %cst_365 {dimension_numbers = #tpu.dot_dimension_numbers<[1], [0], [0], [1], [0, 0, 1, 1], [], []>} : vector<16x32xf32>, vector<32x8xf32>, vector<16x8xf32> -> vector<16x8xf32>
    %812 = vector.broadcast %810 : vector<16x1xf32> to vector<16x8xf32>
    %813 = arith.mulf %811, %812 : vector<16x8xf32>
    %814 = vector.extract_strided_slice %727 {offsets = [24, 0], sizes = [8, 32], strides = [1, 1]} : vector<32x32xf32> to vector<8x32xf32>
    %cst_366 = arith.constant dense<0.000000e+00> : vector<16x32xf32>
    %815 = tpu.matmul %813, %814, %cst_366 {dimension_numbers = #tpu.dot_dimension_numbers<[1], [0], [0], [1], [0, 0, 1, 1], [], []>} : vector<16x8xf32>, vector<8x32xf32>, vector<16x32xf32> -> vector<16x32xf32>
    %816 = arith.addf %797, %815 : vector<16x32xf32>
    %817 = vector.broadcast %729 : vector<1x32xf32> to vector<16x32xf32>
    %818 = arith.addf %816, %817 : vector<16x32xf32>
    %c1_367 = arith.constant 1 : index
    %c0_368 = arith.constant 0 : index
    %c0_369 = arith.constant 0 : index
    %819 = vector.load %arg25[%c1_367, %c0_368, %c0_369] : memref<2x32x32xf32, #tpu.memory_space<vmem>>, vector<1x32x32xf32>
    %820 = vector.shape_cast %819 : vector<1x32x32xf32> to vector<32x32xf32>
    %821 = vector.shape_cast %740 : vector<32x32xf32> to vector<1x32x32xf32>
    tpu.vector_store %arg25[%c1_367, %c0_368, %c0_369], %821 {strides = array<i32>} : memref<2x32x32xf32, #tpu.memory_space<vmem>>, vector<1x32x32xf32>,
    %c1_370 = arith.constant 1 : index
    %c0_371 = arith.constant 0 : index
    %c0_372 = arith.constant 0 : index
    %822 = vector.load %arg26[%c1_370, %c0_371, %c0_372] : memref<2x32x32xf32, #tpu.memory_space<vmem>>, vector<1x32x32xf32>
    %823 = vector.shape_cast %822 : vector<1x32x32xf32> to vector<32x32xf32>
    %824 = vector.shape_cast %741 : vector<32x32xf32> to vector<1x32x32xf32>
    tpu.vector_store %arg26[%c1_370, %c0_371, %c0_372], %824 {strides = array<i32>} : memref<2x32x32xf32, #tpu.memory_space<vmem>>, vector<1x32x32xf32>,
    %825 = arith.addf %818, %721 : vector<16x32xf32>
    %c1_373 = arith.constant 1 : index
    %c2_374 = arith.constant 2 : index
    %c0_375 = arith.constant 0 : index
    %c0_376 = arith.constant 0 : index
    %826 = vector.load %arg12[%c1_373, %c2_374, %c0_375, %c0_376] : memref<2x3x1x32xf32, #tpu.memory_space<vmem>>, vector<1x1x1x32xf32>
    %827 = vector.shape_cast %826 : vector<1x1x1x32xf32> to vector<1x32xf32>
    %c1_377 = arith.constant 1 : index
    %c2_378 = arith.constant 2 : index
    %c0_379 = arith.constant 0 : index
    %c0_380 = arith.constant 0 : index
    %828 = vector.load %arg13[%c1_377, %c2_378, %c0_379, %c0_380] : memref<2x3x1x32xf32, #tpu.memory_space<vmem>>, vector<1x1x1x32xf32>
    %829 = vector.shape_cast %828 : vector<1x1x1x32xf32> to vector<1x32xf32>
    %cst_381 = arith.constant dense<0.000000e+00> : vector<16xf32>
    %830 = vector.multi_reduction <add>, %825, %cst_381 [1] : vector<16x32xf32> to vector<16xf32>
    %831 = vector.shape_cast %830 : vector<16xf32> to vector<16x1xf32>
    %cst_382 = arith.constant 3.200000e+01 : f32
    %832 = vector.broadcast %cst_382 : f32 to vector<16x1xf32>
    %833 = arith.divf %831, %832 : vector<16x1xf32>
    %834 = vector.broadcast %833 : vector<16x1xf32> to vector<16x32xf32>
    %835 = arith.subf %825, %834 : vector<16x32xf32>
    %836 = arith.mulf %835, %835 : vector<16x32xf32>
    %cst_383 = arith.constant dense<0.000000e+00> : vector<16xf32>
    %837 = vector.multi_reduction <add>, %836, %cst_383 [1] : vector<16x32xf32> to vector<16xf32>
    %838 = vector.shape_cast %837 : vector<16xf32> to vector<16x1xf32>
    %cst_384 = arith.constant 3.200000e+01 : f32
    %839 = vector.broadcast %cst_384 : f32 to vector<16x1xf32>
    %840 = arith.divf %838, %839 : vector<16x1xf32>
    %841 = vector.broadcast %833 : vector<16x1xf32> to vector<16x32xf32>
    %842 = arith.subf %825, %841 : vector<16x32xf32>
    %cst_385 = arith.constant 9.99999974E-6 : f32
    %843 = vector.broadcast %cst_385 : f32 to vector<16x1xf32>
    %844 = arith.addf %840, %843 : vector<16x1xf32>
    %845 = math.rsqrt %844 : vector<16x1xf32>
    %846 = vector.broadcast %845 : vector<16x1xf32> to vector<16x32xf32>
    %847 = arith.mulf %842, %846 : vector<16x32xf32>
    %848 = vector.broadcast %827 : vector<1x32xf32> to vector<16x32xf32>
    %849 = arith.mulf %847, %848 : vector<16x32xf32>
    %850 = vector.broadcast %829 : vector<1x32xf32> to vector<16x32xf32>
    %851 = arith.addf %849, %850 : vector<16x32xf32>
    %c1_386 = arith.constant 1 : index
    %c0_387 = arith.constant 0 : index
    %c0_388 = arith.constant 0 : index
    %852 = vector.load %arg14[%c1_386, %c0_387, %c0_388] : memref<2x32x64xf32, #tpu.memory_space<vmem>>, vector<1x32x64xf32>
    %853 = vector.shape_cast %852 : vector<1x32x64xf32> to vector<32x64xf32>
    %cst_389 = arith.constant dense<0.000000e+00> : vector<16x64xf32>
    %854 = tpu.matmul %851, %853, %cst_389 {dimension_numbers = #tpu.dot_dimension_numbers<[1], [0], [0], [1], [0, 0, 1, 1], [], []>} : vector<16x32xf32>, vector<32x64xf32>, vector<16x64xf32> -> vector<16x64xf32>
    %c1_390 = arith.constant 1 : index
    %c0_391 = arith.constant 0 : index
    %c0_392 = arith.constant 0 : index
    %855 = vector.load %arg15[%c1_390, %c0_391, %c0_392] : memref<2x1x64xf32, #tpu.memory_space<vmem>>, vector<1x1x64xf32>
    %856 = vector.shape_cast %855 : vector<1x1x64xf32> to vector<1x64xf32>
    %857 = vector.broadcast %856 : vector<1x64xf32> to vector<16x64xf32>
    %858 = arith.addf %854, %857 : vector<16x64xf32>
    %cst_393 = arith.constant 5.000000e-01 : f32
    %859 = vector.broadcast %cst_393 : f32 to vector<16x64xf32>
    %860 = arith.mulf %859, %858 : vector<16x64xf32>
    %861 = arith.mulf %858, %858 : vector<16x64xf32>
    %862 = arith.mulf %861, %858 : vector<16x64xf32>
    %cst_394 = arith.constant 4.471500e-02 : f32
    %863 = vector.broadcast %cst_394 : f32 to vector<16x64xf32>
    %864 = arith.mulf %863, %862 : vector<16x64xf32>
    %865 = arith.addf %858, %864 : vector<16x64xf32>
    %cst_395 = arith.constant 0.797884583 : f32
    %866 = vector.broadcast %cst_395 : f32 to vector<16x64xf32>
    %867 = arith.mulf %866, %865 : vector<16x64xf32>
    %868 = math.tanh %867 : vector<16x64xf32>
    %cst_396 = arith.constant 1.000000e+00 : f32
    %869 = vector.broadcast %cst_396 : f32 to vector<16x64xf32>
    %870 = arith.addf %869, %868 : vector<16x64xf32>
    %871 = arith.mulf %860, %870 : vector<16x64xf32>
    %c1_397 = arith.constant 1 : index
    %c0_398 = arith.constant 0 : index
    %c0_399 = arith.constant 0 : index
    %872 = vector.load %arg16[%c1_397, %c0_398, %c0_399] : memref<2x64x32xf32, #tpu.memory_space<vmem>>, vector<1x64x32xf32>
    %873 = vector.shape_cast %872 : vector<1x64x32xf32> to vector<64x32xf32>
    %cst_400 = arith.constant dense<0.000000e+00> : vector<16x32xf32>
    %874 = tpu.matmul %871, %873, %cst_400 {dimension_numbers = #tpu.dot_dimension_numbers<[1], [0], [0], [1], [0, 0, 1, 1], [], []>} : vector<16x64xf32>, vector<64x32xf32>, vector<16x32xf32> -> vector<16x32xf32>
    %c1_401 = arith.constant 1 : index
    %c0_402 = arith.constant 0 : index
    %c0_403 = arith.constant 0 : index
    %875 = vector.load %arg17[%c1_401, %c0_402, %c0_403] : memref<2x1x32xf32, #tpu.memory_space<vmem>>, vector<1x1x32xf32>
    %876 = vector.shape_cast %875 : vector<1x1x32xf32> to vector<1x32xf32>
    %877 = vector.broadcast %876 : vector<1x32xf32> to vector<16x32xf32>
    %878 = arith.addf %874, %877 : vector<16x32xf32>
    %879 = arith.addf %878, %851 : vector<16x32xf32>
    %c1_404 = arith.constant 1 : index
    %c0_405 = arith.constant 0 : index
    %c0_406 = arith.constant 0 : index
    %880 = vector.load %arg18[%c1_404, %c0_405, %c0_406] : memref<2x1x32xf32, #tpu.memory_space<vmem>>, vector<1x1x32xf32>
    %881 = vector.shape_cast %880 : vector<1x1x32xf32> to vector<1x32xf32>
    %c1_407 = arith.constant 1 : index
    %c0_408 = arith.constant 0 : index
    %c0_409 = arith.constant 0 : index
    %882 = vector.load %arg19[%c1_407, %c0_408, %c0_409] : memref<2x1x32xf32, #tpu.memory_space<vmem>>, vector<1x1x32xf32>
    %883 = vector.shape_cast %882 : vector<1x1x32xf32> to vector<1x32xf32>
    %cst_410 = arith.constant dense<0.000000e+00> : vector<16xf32>
    %884 = vector.multi_reduction <add>, %879, %cst_410 [1] : vector<16x32xf32> to vector<16xf32>
    %885 = vector.shape_cast %884 : vector<16xf32> to vector<16x1xf32>
    %cst_411 = arith.constant 3.200000e+01 : f32
    %886 = vector.broadcast %cst_411 : f32 to vector<16x1xf32>
    %887 = arith.divf %885, %886 : vector<16x1xf32>
    %888 = vector.broadcast %887 : vector<16x1xf32> to vector<16x32xf32>
    %889 = arith.subf %879, %888 : vector<16x32xf32>
    %890 = arith.mulf %889, %889 : vector<16x32xf32>
    %cst_412 = arith.constant dense<0.000000e+00> : vector<16xf32>
    %891 = vector.multi_reduction <add>, %890, %cst_412 [1] : vector<16x32xf32> to vector<16xf32>
    %892 = vector.shape_cast %891 : vector<16xf32> to vector<16x1xf32>
    %cst_413 = arith.constant 3.200000e+01 : f32
    %893 = vector.broadcast %cst_413 : f32 to vector<16x1xf32>
    %894 = arith.divf %892, %893 : vector<16x1xf32>
    %895 = vector.broadcast %887 : vector<16x1xf32> to vector<16x32xf32>
    %896 = arith.subf %879, %895 : vector<16x32xf32>
    %cst_414 = arith.constant 9.99999974E-6 : f32
    %897 = vector.broadcast %cst_414 : f32 to vector<16x1xf32>
    %898 = arith.addf %894, %897 : vector<16x1xf32>
    %899 = math.rsqrt %898 : vector<16x1xf32>
    %900 = vector.broadcast %899 : vector<16x1xf32> to vector<16x32xf32>
    %901 = arith.mulf %896, %900 : vector<16x32xf32>
    %902 = vector.broadcast %881 : vector<1x32xf32> to vector<16x32xf32>
    %903 = arith.mulf %901, %902 : vector<16x32xf32>
    %904 = vector.broadcast %883 : vector<1x32xf32> to vector<16x32xf32>
    %905 = arith.addf %903, %904 : vector<16x32xf32>
    %c0_415 = arith.constant 0 : index
    %c0_416 = arith.constant 0 : index
    %906 = vector.load %arg20[%c0_415, %c0_416] : memref<16x32xf32, #tpu.memory_space<vmem>>, vector<16x32xf32>
    tpu.vector_store %arg20[%c0_415, %c0_416], %905 {strides = array<i32>} : memref<16x32xf32, #tpu.memory_space<vmem>>, vector<16x32xf32>,
    return
  }
}

</mosaic_0001>

<llo_original>
// kernel: fact_bart_decoder_forward.1
$region0: #{fact_bart_decoder_forward.1}
  #allocation0 [shape = 'u32[]', space=smem, size = 0x4, offset = 0x4, fixed_abs, tag = 'smem constant byte address 0x4 - core index']
  #allocation1 [shape = 'u32[72,128]{1,0:T(1,128)}', space=vmem, size = 0x9000, scoped, tag = 'internal scratch']
  %s0 = inlined_call_operand.vmem [shape: f32[16,32], index: 0, kind: input, shape index: {}]
  %s1 = inlined_call_operand.vmem [shape: f32[16,32], index: 1, kind: input, shape index: {}]
  %s2 = inlined_call_operand.vmem [shape: f32[32,32], index: 2, kind: input, shape index: {}]
  %s3 = inlined_call_operand.vmem [shape: f32[16,16], index: 3, kind: input, shape index: {}]
  %s4 = inlined_call_operand.vmem [shape: f32[16,16], index: 4, kind: input, shape index: {}]
  %s5 = inlined_call_operand.vmem [shape: f32[16,32], index: 5, kind: input, shape index: {}]
  %s6 = inlined_call_operand.vmem [shape: f32[1,32], index: 6, kind: input, shape index: {}]
  %s7 = inlined_call_operand.vmem [shape: f32[1,32], index: 7, kind: input, shape index: {}]
  %s8 = inlined_call_operand.vmem [shape: f32[2,3,32,96], index: 8, kind: input, shape index: {}]
  %s9 = inlined_call_operand.vmem [shape: f32[2,3,1,96], index: 9, kind: input, shape index: {}]
  %s10 = inlined_call_operand.vmem [shape: f32[2,3,32,32], index: 10, kind: input, shape index: {}]
  %s11 = inlined_call_operand.vmem [shape: f32[2,3,1,32], index: 11, kind: input, shape index: {}]
  %s12 = inlined_call_operand.vmem [shape: f32[2,3,1,32], index: 12, kind: input, shape index: {}]
  %s13 = inlined_call_operand.vmem [shape: f32[2,3,1,32], index: 13, kind: input, shape index: {}]
  %s14 = inlined_call_operand.vmem [shape: f32[2,32,64], index: 14, kind: input, shape index: {}]
  %s15 = inlined_call_operand.vmem [shape: f32[2,1,64], index: 15, kind: input, shape index: {}]
  %s16 = inlined_call_operand.vmem [shape: f32[2,64,32], index: 16, kind: input, shape index: {}]
  %s17 = inlined_call_operand.vmem [shape: f32[2,1,32], index: 17, kind: input, shape index: {}]
  %s18 = inlined_call_operand.vmem [shape: f32[2,1,32], index: 18, kind: input, shape index: {}]
  %s19 = inlined_call_operand.vmem [shape: f32[2,1,32], index: 19, kind: input, shape index: {}]
  %s20 = inlined_call_operand.hbm [shape: f32[16,32], index: 20, kind: output, shape index: {0}]
  %s21 = inlined_call_operand.vmem [shape: f32[2,16,32], index: 21, kind: output, shape index: {1}]
  %s22 = inlined_call_operand.vmem [shape: f32[2,16,32], index: 22, kind: output, shape index: {2}]
  %s23 = inlined_call_operand.vmem [shape: f32[2,16,32], index: 23, kind: output, shape index: {3}]
  %s24 = inlined_call_operand.vmem [shape: f32[2,16,32], index: 24, kind: output, shape index: {4}]
  %s25 = inlined_call_operand.vmem [shape: f32[2,32,32], index: 25, kind: output, shape index: {5}]
  %s26 = inlined_call_operand.vmem [shape: f32[2,32,32], index: 26, kind: output, shape index: {6}]
  %27 = xla_tuple %s20, %s21, %s22, %s23, %s24, %s25, %s26
  %s28 = sld [smem:[#allocation0]]
  $region138: #{fact_bart_decoder_forward.1} parent=0
    _
  %s30 = ssub.s32 1, %s28
  %s31 = scalar_select 0, %s30, %s28
  $region1: #{fact_bart_decoder_forward.1} parent=0
    #allocation2 [shape = 'u8[8192]{0}', space=vmem, size = 0x2000, scoped, tag = 'output window, operand 0, single buffered']
    #allocation3 [shape = 's32[1]{0}', space=sflag, size = 0x4, scoped, tag = 'scoped memory for fact_bart_decoder_forward.1']
    %32 = vsyncpa [#allocation3], 0
    // Predicated region
    $region2: #{fact_bart_decoder_forward.1} parent=1 // pred_check
      _
    $region3: #{fact_bart_decoder_forward.1} parent=1 // pred_check_branch
      %34 = sbr.rel (0) target = $region5
    $region4: #{fact_bart_decoder_forward.1} parent=1 // pred_region
      _
    $region5: #{fact_bart_decoder_forward.1} parent=1 // pred_fallthru
      _
    // Predicated region
    $region6: #{fact_bart_decoder_forward.1} parent=1 // pred_check
      _
    $region7: #{fact_bart_decoder_forward.1} parent=1 // pred_check_branch
      %36 = sbr.rel (0) target = $region9
    $region8: #{fact_bart_decoder_forward.1} parent=1 // pred_region
      _
    $region9: #{fact_bart_decoder_forward.1} parent=1 // pred_fallthru
      _
    // Predicated region
    $region10: #{fact_bart_decoder_forward.1} parent=1 // pred_check
      _
    $region11: #{fact_bart_decoder_forward.1} parent=1 // pred_check_branch
      %38 = sbr.rel (0) target = $region13
    $region12: #{fact_bart_decoder_forward.1} parent=1 // pred_region
      _
    $region13: #{fact_bart_decoder_forward.1} parent=1 // pred_fallthru
      _
    // Predicated region
    $region14: #{fact_bart_decoder_forward.1} parent=1 // pred_check
      _
    $region15: #{fact_bart_decoder_forward.1} parent=1 // pred_check_branch
      %40 = sbr.rel (0) target = $region17
    $region16: #{fact_bart_decoder_forward.1} parent=1 // pred_region
      _
    $region17: #{fact_bart_decoder_forward.1} parent=1 // pred_fallthru
      _
    // Predicated region
    $region18: #{fact_bart_decoder_forward.1} parent=1 // pred_check
      _
    $region19: #{fact_bart_decoder_forward.1} parent=1 // pred_check_branch
      %42 = sbr.rel (0) target = $region21
    $region20: #{fact_bart_decoder_forward.1} parent=1 // pred_region
      _
    $region21: #{fact_bart_decoder_forward.1} parent=1 // pred_fallthru
      _
    // Predicated region
    $region22: #{fact_bart_decoder_forward.1} parent=1 // pred_check
      _
    $region23: #{fact_bart_decoder_forward.1} parent=1 // pred_check_branch
      %44 = sbr.rel (0) target = $region25
    $region24: #{fact_bart_decoder_forward.1} parent=1 // pred_region
      _
    $region25: #{fact_bart_decoder_forward.1} parent=1 // pred_fallthru
      _
    // Predicated region
    $region26: #{fact_bart_decoder_forward.1} parent=1 // pred_check
      _
    $region27: #{fact_bart_decoder_forward.1} parent=1 // pred_check_branch
      %46 = sbr.rel (0) target = $region29
    $region28: #{fact_bart_decoder_forward.1} parent=1 // pred_region
      _
    $region29: #{fact_bart_decoder_forward.1} parent=1 // pred_fallthru
      _
    // Predicated region
    $region30: #{fact_bart_decoder_forward.1} parent=1 // pred_check
      _
    $region31: #{fact_bart_decoder_forward.1} parent=1 // pred_check_branch
      %48 = sbr.rel (0) target = $region33
    $region32: #{fact_bart_decoder_forward.1} parent=1 // pred_region
      _
    $region33: #{fact_bart_decoder_forward.1} parent=1 // pred_fallthru
      _
    // Predicated region
    $region34: #{fact_bart_decoder_forward.1} parent=1 // pred_check
      _
    $region35: #{fact_bart_decoder_forward.1} parent=1 // pred_check_branch
      %50 = sbr.rel (0) target = $region37
    $region36: #{fact_bart_decoder_forward.1} parent=1 // pred_region
      _
    $region37: #{fact_bart_decoder_forward.1} parent=1 // pred_fallthru
      _
    // Predicated region
    $region38: #{fact_bart_decoder_forward.1} parent=1 // pred_check
      _
    $region39: #{fact_bart_decoder_forward.1} parent=1 // pred_check_branch
      %52 = sbr.rel (0) target = $region41
    $region40: #{fact_bart_decoder_forward.1} parent=1 // pred_region
      _
    $region41: #{fact_bart_decoder_forward.1} parent=1 // pred_fallthru
      _
    // Predicated region
    $region42: #{fact_bart_decoder_forward.1} parent=1 // pred_check
      _
    $region43: #{fact_bart_decoder_forward.1} parent=1 // pred_check_branch
      %54 = sbr.rel (0) target = $region45
    $region44: #{fact_bart_decoder_forward.1} parent=1 // pred_region
      _
    $region45: #{fact_bart_decoder_forward.1} parent=1 // pred_fallthru
      _
    // Predicated region
    $region46: #{fact_bart_decoder_forward.1} parent=1 // pred_check
      _
    $region47: #{fact_bart_decoder_forward.1} parent=1 // pred_check_branch
      %56 = sbr.rel (0) target = $region49
    $region48: #{fact_bart_decoder_forward.1} parent=1 // pred_region
      _
    $region49: #{fact_bart_decoder_forward.1} parent=1 // pred_fallthru
      _
    // Predicated region
    $region50: #{fact_bart_decoder_forward.1} parent=1 // pred_check
      _
    $region51: #{fact_bart_decoder_forward.1} parent=1 // pred_check_branch
      %58 = sbr.rel (0) target = $region53
    $region52: #{fact_bart_decoder_forward.1} parent=1 // pred_region
      _
    $region53: #{fact_bart_decoder_forward.1} parent=1 // pred_fallthru
      _
    // Predicated region
    $region54: #{fact_bart_decoder_forward.1} parent=1 // pred_check
      _
    $region55: #{fact_bart_decoder_forward.1} parent=1 // pred_check_branch
      %60 = sbr.rel (0) target = $region57
    $region56: #{fact_bart_decoder_forward.1} parent=1 // pred_region
      _
    $region57: #{fact_bart_decoder_forward.1} parent=1 // pred_fallthru
      _
    // Predicated region
    $region58: #{fact_bart_decoder_forward.1} parent=1 // pred_check
      _
    $region59: #{fact_bart_decoder_forward.1} parent=1 // pred_check_branch
      %62 = sbr.rel (0) target = $region61
    $region60: #{fact_bart_decoder_forward.1} parent=1 // pred_region
      _
    $region61: #{fact_bart_decoder_forward.1} parent=1 // pred_fallthru
      _
    // Predicated region
    $region62: #{fact_bart_decoder_forward.1} parent=1 // pred_check
      _
    $region63: #{fact_bart_decoder_forward.1} parent=1 // pred_check_branch
      %64 = sbr.rel (0) target = $region65
    $region64: #{fact_bart_decoder_forward.1} parent=1 // pred_region
      _
    $region65: #{fact_bart_decoder_forward.1} parent=1 // pred_fallthru
      _
    // Predicated region
    $region66: #{fact_bart_decoder_forward.1} parent=1 // pred_check
      _
    $region67: #{fact_bart_decoder_forward.1} parent=1 // pred_check_branch
      %66 = sbr.rel (0) target = $region69
    $region68: #{fact_bart_decoder_forward.1} parent=1 // pred_region
      _
    $region69: #{fact_bart_decoder_forward.1} parent=1 // pred_fallthru
      _
    // Predicated region
    $region70: #{fact_bart_decoder_forward.1} parent=1 // pred_check
      _
    $region71: #{fact_bart_decoder_forward.1} parent=1 // pred_check_branch
      %68 = sbr.rel (0) target = $region73
    $region72: #{fact_bart_decoder_forward.1} parent=1 // pred_region
      _
    $region73: #{fact_bart_decoder_forward.1} parent=1 // pred_fallthru
      _
    // Predicated region
    $region74: #{fact_bart_decoder_forward.1} parent=1 // pred_check
      _
    $region75: #{fact_bart_decoder_forward.1} parent=1 // pred_check_branch
      %70 = sbr.rel (0) target = $region77
    $region76: #{fact_bart_decoder_forward.1} parent=1 // pred_region
      _
    $region77: #{fact_bart_decoder_forward.1} parent=1 // pred_fallthru
      _
    // Predicated region
    $region78: #{fact_bart_decoder_forward.1} parent=1 // pred_check
      _
    $region79: #{fact_bart_decoder_forward.1} parent=1 // pred_check_branch
      %72 = sbr.rel (0) target = $region81
    $region80: #{fact_bart_decoder_forward.1} parent=1 // pred_region
      _
    $region81: #{fact_bart_decoder_forward.1} parent=1 // pred_fallthru
      _
    %v73 = vld [vmem:[%s0] sm:$0xff]
    %v74 = vld [vmem:[%s0 + $0x8] sm:$0xff]
    %v75 = vld [vmem:[%s6] sm:$0x1]
    %v76 = vld [vmem:[%s7] sm:$0x1]
    %vm77 = vcmask 261120
    %v78 = vsel %vm77, %v73, 0.0
    %79 = vadd.xlane.f32.xlu0 %v78
    %v80 = vpop.xlane.xlu0 %79
    %v81 = vsel %vm77, %v74, 0.0
    %82 = vadd.xlane.f32.xlu0 %v81
    %v83 = vpop.xlane.xlu0 %82
    %v84 = vrcp.pop 32.0
    %v85 = vmul.f32 32.0, %v84
    %v86 = vsub.f32 1.0, %v85
    %v87 = vmul.f32 %v84, %v86
    %v88 = vadd.f32 %v84, %v87
    %vm89 = vweird.f32 %v84
    %v90 = vsel %vm89, %v84, %v88
    %v91 = vmul.f32 %v80, %v90
    %v92 = vmul.f32 %v83, %v90
    %v93 = vsub.f32 %v73, %v91
    %v94 = vsub.f32 %v74, %v92
    %v95 = vmul.f32 %v93, %v93
    %v96 = vmul.f32 %v94, %v94
    %v97 = vsel %vm77, %v95, 0.0
    %98 = vadd.xlane.f32.xlu0 %v97
    %v99 = vpop.xlane.xlu0 %98
    %v100 = vsel %vm77, %v96, 0.0
    %101 = vadd.xlane.f32.xlu0 %v100
    %v102 = vpop.xlane.xlu0 %101
    %v103 = vmul.f32 %v99, %v90
    %v104 = vmul.f32 %v102, %v90
    %v105 = vadd.f32 %v103, 1e-05
    %v106 = vadd.f32 %v104, 1e-05
    %v107 = vrsqrt.pop %v105
    %v108 = vmul.f32 %v107, %v105
    %v109 = vmul.f32 %v108, %v107
    %v110 = vmul.f32 0.5, %v109
    %v111 = vsub.f32 1.5, %v110
    %v112 = vmul.f32 %v107, %v111
    %vm113 = vweird.f32 %v105
    %vm114 = vweird.f32 %v107
    %vm115 = vmor %vm113, %vm114
    %v116 = vsel %vm115, %v107, %v112
    %v117 = vrsqrt.pop %v106
    %v118 = vmul.f32 %v117, %v106
    %v119 = vmul.f32 %v118, %v117
    %v120 = vmul.f32 0.5, %v119
    %v121 = vsub.f32 1.5, %v120
    %v122 = vmul.f32 %v117, %v121
    %vm123 = vweird.f32 %v106
    %vm124 = vweird.f32 %v117
    %vm125 = vmor %vm123, %vm124
    %v126 = vsel %vm125, %v117, %v122
    %v127 = vmul.f32 %v93, %v116
    %v128 = vmul.f32 %v94, %v126
    %v130 = vperm.slane %v75, 0
    %v132 = vmul.f32 %v127, %v130
    %v133 = vmul.f32 %v128, %v130
    %v135 = vperm.slane %v76, 0
    %v137 = vadd.f32 %v132, %v135
    %v138 = vadd.f32 %v133, %v135
    %v139 = vld [vmem:[%s1] sm:$0xff]
    %v140 = vld [vmem:[%s1 + $0x8] sm:$0xff]
    %v141 = vld [vmem:[%s2] sm:$0xff]
    %v142 = vld [vmem:[%s2 + $0x8] sm:$0xff]
    %v143 = vld [vmem:[%s2 + $0x10] sm:$0xff]
    %v144 = vld [vmem:[%s2 + $0x18] sm:$0xff]
    %v145 = vld [vmem:[%s3] sm:$0xff]
    %v146 = vld [vmem:[%s3 + $0x8] sm:$0xff]
    %v147 = vld [vmem:[%s4] sm:$0xff]
    %v148 = vld [vmem:[%s4 + $0x8] sm:$0xff]
    %v149 = vld [vmem:[%s5] sm:$0xff]
    %v150 = vld [vmem:[%s5 + $0x8] sm:$0xff]
    %v151 = vld [vmem:[%s8] sm:$0xff]
    %v152 = vld [vmem:[%s8 + $0x8] sm:$0xff]
    %v153 = vld [vmem:[%s8 + $0x10] sm:$0xff]
    %v154 = vld [vmem:[%s8 + $0x18] sm:$0xff]
    %v155 = vld [vmem:[%s9] sm:$0x1]
    %v156 = vld [vmem:[%s10] sm:$0xff]
    %v157 = vld [vmem:[%s10 + $0x8] sm:$0xff]
    %v158 = vld [vmem:[%s10 + $0x10] sm:$0xff]
    %v159 = vld [vmem:[%s10 + $0x18] sm:$0xff]
    %v160 = vld [vmem:[%s11] sm:$0x1]
    %v162 = vperm.slane %v155, 0
    %v165 = vsel %vm77, %v137, 0
    %v168 = vsel %vm77, %v138, 0
    %170 = vmatpush.msra.mxu0 0.0
    %171 = vmatpush.msra.mxu0 0.0
    %172 = vmatpush.msra.mxu0 0.0
    %173 = vmatpush.msra.mxu0 0.0
    %174 = vmatpush.msra.mxu0 0.0
    %175 = vmatpush.msra.mxu0 0.0
    %176 = vmatpush.msra.mxu0 0.0
    %177 = vmatpush.msra.mxu0 0.0
    %178 = vmatpush.msra.mxu0 0.0
    %179 = vmatpush.msra.mxu0 0.0
    %180 = vmatpush.msra.mxu0 0.0
    %181 = vmatpush.msra.mxu0 0.0
    %182 = vmatpush.msra.mxu0 %v154
    %183 = vmatpush.msra.mxu0 %v153
    %184 = vmatpush.msra.mxu0 %v152
    %185 = vmatpush.msra.mxu0 %v151
    %186 = vmatmul.f32.gmra.mxu0 %v165
    %v187 = vpop.f32.mrf.mxu0
    %v188 = vadd.f32 %v162, %v187
    %189 = vmatmul.f32.gmra.mxu0 %v168
    %v190 = vpop.f32.mrf.mxu0
    %v191 = vadd.f32 %v162, %v190
    %192 = vdwg.mxu0
    %195 = vrot.lane.b32.xlu0 %v188, 96
    %v196 = vpop.permute.xlu0 %195
    %197 = vrot.lane.b32.xlu0 %v191, 96
    %v198 = vpop.permute.xlu0 %197
    %vm199 = vcmask 64512
    %v200 = vsel %vm199, %v188, 0
    %v202 = vsel %vm199, %v191, 0
    %v204 = vsel %vm199, %v196, 0
    %v206 = vsel %vm199, %v198, 0
    %208 = vmatpush.xpose.msra.mxu0 0.0
    %209 = vmatpush.xpose.msra.mxu0 0.0
    %210 = vmatpush.xpose.msra.mxu0 0.0
    %211 = vmatpush.xpose.msra.mxu0 0.0
    %212 = vmatpush.xpose.msra.mxu0 0.0
    %213 = vmatpush.xpose.msra.mxu0 0.0
    %214 = vmatpush.xpose.msra.mxu0 0.0
    %215 = vmatpush.xpose.msra.mxu0 0.0
    %216 = vmatpush.xpose.msra.mxu0 0.0
    %217 = vmatpush.xpose.msra.mxu0 0.0
    %218 = vmatpush.xpose.msra.mxu0 0.0
    %219 = vmatpush.xpose.msra.mxu0 0.0
    %220 = vmatpush.xpose.msra.mxu0 0.0
    %221 = vmatpush.xpose.msra.mxu0 0.0
    %222 = vmatpush.xpose.msra.mxu0 %v206
    %223 = vmatpush.xpose.msra.mxu0 %v204
    %224 = vmatmul.f32.gmra.mxu0 %v200
    %v225 = vpop.f32.mrf.mxu0
    %v226 = vadd.f32 %v145, %v225
    %227 = vmatmul.f32.gmra.mxu0 %v202
    %v228 = vpop.f32.mrf.mxu0
    %v229 = vadd.f32 %v146, %v228
    %230 = vdwg.mxu0
    %vm231 = vcmask 130048
    %v232 = vsel %vm231, %v226, -inf
    %233 = vmax.xlane.f32.xlu0 %v232
    %v234 = vpop.xlane.xlu0 %233
    %v235 = vsel %vm231, %v229, -inf
    %236 = vmax.xlane.f32.xlu0 %v235
    %v237 = vpop.xlane.xlu0 %236
    %v238 = vsub.f32 %v226, %v234
    %v239 = vsub.f32 %v229, %v237
    %v240 = vmul.f32 %v238, 1.442695
    %v241 = vpow.pop %v240
    %v242 = vmul.f32 %v239, 1.442695
    %v243 = vpow.pop %v242
    %v244 = vsel %vm231, %v241, 0.0
    %245 = vadd.xlane.f32.xlu0 %v244
    %v246 = vpop.xlane.xlu0 %245
    %v247 = vsel %vm231, %v243, 0.0
    %248 = vadd.xlane.f32.xlu0 %v247
    %v249 = vpop.xlane.xlu0 %248
    %v250 = vrcp.pop %v246
    %v251 = vrcp.pop %v249
    %252 = vrot.lane.b32.xlu0 %v188, 64
    %v253 = vpop.permute.xlu0 %252
    %254 = vrot.lane.b32.xlu0 %v191, 64
    %v255 = vpop.permute.xlu0 %254
    %v259 = vsel %vm231, %v241, 0
    %v262 = vsel %vm231, %v243, 0
    %264 = vmatpush.msra.mxu0 0.0
    %265 = vmatpush.msra.mxu0 0.0
    %266 = vmatpush.msra.mxu0 0.0
    %267 = vmatpush.msra.mxu0 0.0
    %268 = vmatpush.msra.mxu0 0.0
    %269 = vmatpush.msra.mxu0 0.0
    %270 = vmatpush.msra.mxu0 0.0
    %271 = vmatpush.msra.mxu0 0.0
    %272 = vmatpush.msra.mxu0 0.0
    %273 = vmatpush.msra.mxu0 0.0
    %274 = vmatpush.msra.mxu0 0.0
    %275 = vmatpush.msra.mxu0 0.0
    %276 = vmatpush.msra.mxu0 0.0
    %277 = vmatpush.msra.mxu0 0.0
    %278 = vmatpush.msra.mxu0 %v255
    %279 = vmatpush.msra.mxu0 %v253
    %280 = vmatmul.f32.gmra.mxu0 %v259
    %v281 = vpop.f32.mrf.mxu0
    %v282 = vadd.f32 0.0, %v281
    %283 = vmatmul.f32.gmra.mxu0 %v262
    %v284 = vpop.f32.mrf.mxu0
    %v285 = vadd.f32 0.0, %v284
    %286 = vdwg.mxu0
    %v287 = vmul.f32 %v282, %v250
    %v288 = vmul.f32 %v285, %v251
    %289 = vrot.lane.b32.xlu0 %v188, 120
    %v290 = vpop.permute.xlu0 %289
    %291 = vrot.lane.b32.xlu0 %v191, 120
    %v292 = vpop.permute.xlu0 %291
    %293 = vrot.lane.b32.xlu0 %v188, 88
    %v294 = vpop.permute.xlu0 %293
    %295 = vrot.lane.b32.xlu0 %v191, 88
    %v296 = vpop.permute.xlu0 %295
    %v297 = vsel %vm199, %v290, 0
    %v299 = vsel %vm199, %v292, 0
    %v301 = vsel %vm199, %v294, 0
    %v303 = vsel %vm199, %v296, 0
    %305 = vmatpush.xpose.msra.mxu0 0.0
    %306 = vmatpush.xpose.msra.mxu0 0.0
    %307 = vmatpush.xpose.msra.mxu0 0.0
    %308 = vmatpush.xpose.msra.mxu0 0.0
    %309 = vmatpush.xpose.msra.mxu0 0.0
    %310 = vmatpush.xpose.msra.mxu0 0.0
    %311 = vmatpush.xpose.msra.mxu0 0.0
    %312 = vmatpush.xpose.msra.mxu0 0.0
    %313 = vmatpush.xpose.msra.mxu0 0.0
    %314 = vmatpush.xpose.msra.mxu0 0.0
    %315 = vmatpush.xpose.msra.mxu0 0.0
    %316 = vmatpush.xpose.msra.mxu0 0.0
    %317 = vmatpush.xpose.msra.mxu0 0.0
    %318 = vmatpush.xpose.msra.mxu0 0.0
    %319 = vmatpush.xpose.msra.mxu0 %v303
    %320 = vmatpush.xpose.msra.mxu0 %v301
    %321 = vmatmul.f32.gmra.mxu0 %v297
    %v322 = vpop.f32.mrf.mxu0
    %v323 = vadd.f32 %v145, %v322
    %324 = vmatmul.f32.gmra.mxu0 %v299
    %v325 = vpop.f32.mrf.mxu0
    %v326 = vadd.f32 %v146, %v325
    %327 = vdwg.mxu0
    %v328 = vsel %vm231, %v323, -inf
    %329 = vmax.xlane.f32.xlu0 %v328
    %v330 = vpop.xlane.xlu0 %329
    %v331 = vsel %vm231, %v326, -inf
    %332 = vmax.xlane.f32.xlu0 %v331
    %v333 = vpop.xlane.xlu0 %332
    %v334 = vsub.f32 %v323, %v330
    %v335 = vsub.f32 %v326, %v333
    %v336 = vmul.f32 %v334, 1.442695
    %v337 = vpow.pop %v336
    %v338 = vmul.f32 %v335, 1.442695
    %v339 = vpow.pop %v338
    %v340 = vsel %vm231, %v337, 0.0
    %341 = vadd.xlane.f32.xlu0 %v340
    %v342 = vpop.xlane.xlu0 %341
    %v343 = vsel %vm231, %v339, 0.0
    %344 = vadd.xlane.f32.xlu0 %v343
    %v345 = vpop.xlane.xlu0 %344
    %v346 = vrcp.pop %v342
    %v347 = vrcp.pop %v345
    %348 = vrot.lane.b32.xlu0 %v188, 56
    %v349 = vpop.permute.xlu0 %348
    %350 = vrot.lane.b32.xlu0 %v191, 56
    %v351 = vpop.permute.xlu0 %350
    %v355 = vsel %vm231, %v337, 0
    %v358 = vsel %vm231, %v339, 0
    %360 = vmatpush.msra.mxu0 0.0
    %361 = vmatpush.msra.mxu0 0.0
    %362 = vmatpush.msra.mxu0 0.0
    %363 = vmatpush.msra.mxu0 0.0
    %364 = vmatpush.msra.mxu0 0.0
    %365 = vmatpush.msra.mxu0 0.0
    %366 = vmatpush.msra.mxu0 0.0
    %367 = vmatpush.msra.mxu0 0.0
    %368 = vmatpush.msra.mxu0 0.0
    %369 = vmatpush.msra.mxu0 0.0
    %370 = vmatpush.msra.mxu0 0.0
    %371 = vmatpush.msra.mxu0 0.0
    %372 = vmatpush.msra.mxu0 0.0
    %373 = vmatpush.msra.mxu0 0.0
    %374 = vmatpush.msra.mxu0 %v351
    %375 = vmatpush.msra.mxu0 %v349
    %376 = vmatmul.f32.gmra.mxu0 %v355
    %v377 = vpop.f32.mrf.mxu0
    %v378 = vadd.f32 0.0, %v377
    %379 = vmatmul.f32.gmra.mxu0 %v358
    %v380 = vpop.f32.mrf.mxu0
    %v381 = vadd.f32 0.0, %v380
    %382 = vdwg.mxu0
    %v383 = vmul.f32 %v378, %v346
    %v384 = vmul.f32 %v381, %v347
    %v386 = vsel %vm199, %v383, 0
    %v389 = vsel %vm199, %v384, 0
    %391 = vmatpush.msra.mxu0 0.0
    %392 = vmatpush.msra.mxu0 0.0
    %393 = vmatpush.msra.mxu0 0.0
    %394 = vmatpush.msra.mxu0 0.0
    %395 = vmatpush.msra.mxu0 0.0
    %396 = vmatpush.msra.mxu0 0.0
    %397 = vmatpush.msra.mxu0 0.0
    %398 = vmatpush.msra.mxu0 0.0
    %399 = vmatpush.msra.mxu0 0.0
    %400 = vmatpush.msra.mxu0 0.0
    %401 = vmatpush.msra.mxu0 0.0
    %402 = vmatpush.msra.mxu0 0.0
    %403 = vmatpush.msra.mxu0 0.0
    %404 = vmatpush.msra.mxu0 0.0
    %405 = vmatpush.msra.mxu0 0.0
    %406 = vmatpush.msra.mxu0 %v157
    %407 = vmatmul.f32.gmra.mxu0 %v386
    %v408 = vpop.f32.mrf.mxu0
    %v409 = vadd.f32 0.0, %v408
    %410 = vmatmul.f32.gmra.mxu0 %v389
    %v411 = vpop.f32.mrf.mxu0
    %v412 = vadd.f32 0.0, %v411
    %413 = vdwg.mxu0
    %v415 = vsel %vm199, %v287, 0
    %v418 = vsel %vm199, %v288, 0
    %420 = vmatpush.msra.mxu0 0.0
    %421 = vmatpush.msra.mxu0 0.0
    %422 = vmatpush.msra.mxu0 0.0
    %423 = vmatpush.msra.mxu0 0.0
    %424 = vmatpush.msra.mxu0 0.0
    %425 = vmatpush.msra.mxu0 0.0
    %426 = vmatpush.msra.mxu0 0.0
    %427 = vmatpush.msra.mxu0 0.0
    %428 = vmatpush.msra.mxu0 0.0
    %429 = vmatpush.msra.mxu0 0.0
    %430 = vmatpush.msra.mxu0 0.0
    %431 = vmatpush.msra.mxu0 0.0
    %432 = vmatpush.msra.mxu0 0.0
    %433 = vmatpush.msra.mxu0 0.0
    %434 = vmatpush.msra.mxu0 0.0
    %435 = vmatpush.msra.mxu0 %v156
    %436 = vmatmul.f32.gmra.mxu0 %v415
    %v437 = vpop.f32.mrf.mxu0
    %v438 = vadd.f32 %v409, %v437
    %439 = vmatmul.f32.gmra.mxu0 %v418
    %v440 = vpop.f32.mrf.mxu0
    %v441 = vadd.f32 %v412, %v440
    %442 = vdwg.mxu0
    %443 = vrot.lane.b32.xlu0 %v188, 112
    %v444 = vpop.permute.xlu0 %443
    %445 = vrot.lane.b32.xlu0 %v191, 112
    %v446 = vpop.permute.xlu0 %445
    %447 = vrot.lane.b32.xlu0 %v188, 80
    %v448 = vpop.permute.xlu0 %447
    %449 = vrot.lane.b32.xlu0 %v191, 80
    %v450 = vpop.permute.xlu0 %449
    %v451 = vsel %vm199, %v444, 0
    %v453 = vsel %vm199, %v446, 0
    %v455 = vsel %vm199, %v448, 0
    %v457 = vsel %vm199, %v450, 0
    %459 = vmatpush.xpose.msra.mxu0 0.0
    %460 = vmatpush.xpose.msra.mxu0 0.0
    %461 = vmatpush.xpose.msra.mxu0 0.0
    %462 = vmatpush.xpose.msra.mxu0 0.0
    %463 = vmatpush.xpose.msra.mxu0 0.0
    %464 = vmatpush.xpose.msra.mxu0 0.0
    %465 = vmatpush.xpose.msra.mxu0 0.0
    %466 = vmatpush.xpose.msra.mxu0 0.0
    %467 = vmatpush.xpose.msra.mxu0 0.0
    %468 = vmatpush.xpose.msra.mxu0 0.0
    %469 = vmatpush.xpose.msra.mxu0 0.0
    %470 = vmatpush.xpose.msra.mxu0 0.0
    %471 = vmatpush.xpose.msra.mxu0 0.0
    %472 = vmatpush.xpose.msra.mxu0 0.0
    %473 = vmatpush.xpose.msra.mxu0 %v457
    %474 = vmatpush.xpose.msra.mxu0 %v455
    %475 = vmatmul.f32.gmra.mxu0 %v451
    %v476 = vpop.f32.mrf.mxu0
    %v477 = vadd.f32 %v145, %v476
    %478 = vmatmul.f32.gmra.mxu0 %v453
    %v479 = vpop.f32.mrf.mxu0
    %v480 = vadd.f32 %v146, %v479
    %481 = vdwg.mxu0
    %v482 = vsel %vm231, %v477, -inf
    %483 = vmax.xlane.f32.xlu0 %v482
    %v484 = vpop.xlane.xlu0 %483
    %v485 = vsel %vm231, %v480, -inf
    %486 = vmax.xlane.f32.xlu0 %v485
    %v487 = vpop.xlane.xlu0 %486
    %v488 = vsub.f32 %v477, %v484
    %v489 = vsub.f32 %v480, %v487
    %v490 = vmul.f32 %v488, 1.442695
    %v491 = vpow.pop %v490
    %v492 = vmul.f32 %v489, 1.442695
    %v493 = vpow.pop %v492
    %v494 = vsel %vm231, %v491, 0.0
    %495 = vadd.xlane.f32.xlu0 %v494
    %v496 = vpop.xlane.xlu0 %495
    %v497 = vsel %vm231, %v493, 0.0
    %498 = vadd.xlane.f32.xlu0 %v497
    %v499 = vpop.xlane.xlu0 %498
    %v500 = vrcp.pop %v496
    %v501 = vrcp.pop %v499
    %502 = vrot.lane.b32.xlu0 %v188, 48
    %v503 = vpop.permute.xlu0 %502
    %504 = vrot.lane.b32.xlu0 %v191, 48
    %v505 = vpop.permute.xlu0 %504
    %v509 = vsel %vm231, %v491, 0
    %v512 = vsel %vm231, %v493, 0
    %514 = vmatpush.msra.mxu0 0.0
    %515 = vmatpush.msra.mxu0 0.0
    %516 = vmatpush.msra.mxu0 0.0
    %517 = vmatpush.msra.mxu0 0.0
    %518 = vmatpush.msra.mxu0 0.0
    %519 = vmatpush.msra.mxu0 0.0
    %520 = vmatpush.msra.mxu0 0.0
    %521 = vmatpush.msra.mxu0 0.0
    %522 = vmatpush.msra.mxu0 0.0
    %523 = vmatpush.msra.mxu0 0.0
    %524 = vmatpush.msra.mxu0 0.0
    %525 = vmatpush.msra.mxu0 0.0
    %526 = vmatpush.msra.mxu0 0.0
    %527 = vmatpush.msra.mxu0 0.0
    %528 = vmatpush.msra.mxu0 %v505
    %529 = vmatpush.msra.mxu0 %v503
    %530 = vmatmul.f32.gmra.mxu0 %v509
    %v531 = vpop.f32.mrf.mxu0
    %v532 = vadd.f32 0.0, %v531
    %533 = vmatmul.f32.gmra.mxu0 %v512
    %v534 = vpop.f32.mrf.mxu0
    %v535 = vadd.f32 0.0, %v534
    %536 = vdwg.mxu0
    %v537 = vmul.f32 %v532, %v500
    %v538 = vmul.f32 %v535, %v501
    %v540 = vsel %vm199, %v537, 0
    %v543 = vsel %vm199, %v538, 0
    %545 = vmatpush.msra.mxu0 0.0
    %546 = vmatpush.msra.mxu0 0.0
    %547 = vmatpush.msra.mxu0 0.0
    %548 = vmatpush.msra.mxu0 0.0
    %549 = vmatpush.msra.mxu0 0.0
    %550 = vmatpush.msra.mxu0 0.0
    %551 = vmatpush.msra.mxu0 0.0
    %552 = vmatpush.msra.mxu0 0.0
    %553 = vmatpush.msra.mxu0 0.0
    %554 = vmatpush.msra.mxu0 0.0
    %555 = vmatpush.msra.mxu0 0.0
    %556 = vmatpush.msra.mxu0 0.0
    %557 = vmatpush.msra.mxu0 0.0
    %558 = vmatpush.msra.mxu0 0.0
    %559 = vmatpush.msra.mxu0 0.0
    %560 = vmatpush.msra.mxu0 %v158
    %561 = vmatmul.f32.gmra.mxu0 %v540
    %v562 = vpop.f32.mrf.mxu0
    %v563 = vadd.f32 0.0, %v562
    %564 = vmatmul.f32.gmra.mxu0 %v543
    %v565 = vpop.f32.mrf.mxu0
    %v566 = vadd.f32 0.0, %v565
    %567 = vdwg.mxu0
    %v568 = vadd.f32 %v438, %v563
    %v569 = vadd.f32 %v441, %v566
    %570 = vrot.lane.b32.xlu0 %v188, 104
    %v571 = vpop.permute.xlu0 %570
    %572 = vrot.lane.b32.xlu0 %v191, 104
    %v573 = vpop.permute.xlu0 %572
    %574 = vrot.lane.b32.xlu0 %v188, 72
    %v575 = vpop.permute.xlu0 %574
    %576 = vrot.lane.b32.xlu0 %v191, 72
    %v577 = vpop.permute.xlu0 %576
    %v578 = vsel %vm199, %v571, 0
    %v580 = vsel %vm199, %v573, 0
    %v582 = vsel %vm199, %v575, 0
    %v584 = vsel %vm199, %v577, 0
    %586 = vmatpush.xpose.msra.mxu0 0.0
    %587 = vmatpush.xpose.msra.mxu0 0.0
    %588 = vmatpush.xpose.msra.mxu0 0.0
    %589 = vmatpush.xpose.msra.mxu0 0.0
    %590 = vmatpush.xpose.msra.mxu0 0.0
    %591 = vmatpush.xpose.msra.mxu0 0.0
    %592 = vmatpush.xpose.msra.mxu0 0.0
    %593 = vmatpush.xpose.msra.mxu0 0.0
    %594 = vmatpush.xpose.msra.mxu0 0.0
    %595 = vmatpush.xpose.msra.mxu0 0.0
    %596 = vmatpush.xpose.msra.mxu0 0.0
    %597 = vmatpush.xpose.msra.mxu0 0.0
    %598 = vmatpush.xpose.msra.mxu0 0.0
    %599 = vmatpush.xpose.msra.mxu0 0.0
    %600 = vmatpush.xpose.msra.mxu0 %v584
    %601 = vmatpush.xpose.msra.mxu0 %v582
    %602 = vmatmul.f32.gmra.mxu0 %v578
    %v603 = vpop.f32.mrf.mxu0
    %v604 = vadd.f32 %v145, %v603
    %605 = vmatmul.f32.gmra.mxu0 %v580
    %v606 = vpop.f32.mrf.mxu0
    %v607 = vadd.f32 %v146, %v606
    %608 = vdwg.mxu0
    %v609 = vsel %vm231, %v604, -inf
    %610 = vmax.xlane.f32.xlu0 %v609
    %v611 = vpop.xlane.xlu0 %610
    %v612 = vsel %vm231, %v607, -inf
    %613 = vmax.xlane.f32.xlu0 %v612
    %v614 = vpop.xlane.xlu0 %613
    %v615 = vsub.f32 %v604, %v611
    %v616 = vsub.f32 %v607, %v614
    %v617 = vmul.f32 %v615, 1.442695
    %v618 = vpow.pop %v617
    %v619 = vmul.f32 %v616, 1.442695
    %v620 = vpow.pop %v619
    %v621 = vsel %vm231, %v618, 0.0
    %622 = vadd.xlane.f32.xlu0 %v621
    %v623 = vpop.xlane.xlu0 %622
    %v624 = vsel %vm231, %v620, 0.0
    %625 = vadd.xlane.f32.xlu0 %v624
    %v626 = vpop.xlane.xlu0 %625
    %v627 = vrcp.pop %v623
    %v628 = vrcp.pop %v626
    %629 = vrot.lane.b32.xlu0 %v188, 40
    %v630 = vpop.permute.xlu0 %629
    %631 = vrot.lane.b32.xlu0 %v191, 40
    %v632 = vpop.permute.xlu0 %631
    %v636 = vsel %vm231, %v618, 0
    %v639 = vsel %vm231, %v620, 0
    %641 = vmatpush.msra.mxu0 0.0
    %642 = vmatpush.msra.mxu0 0.0
    %643 = vmatpush.msra.mxu0 0.0
    %644 = vmatpush.msra.mxu0 0.0
    %645 = vmatpush.msra.mxu0 0.0
    %646 = vmatpush.msra.mxu0 0.0
    %647 = vmatpush.msra.mxu0 0.0
    %648 = vmatpush.msra.mxu0 0.0
    %649 = vmatpush.msra.mxu0 0.0
    %650 = vmatpush.msra.mxu0 0.0
    %651 = vmatpush.msra.mxu0 0.0
    %652 = vmatpush.msra.mxu0 0.0
    %653 = vmatpush.msra.mxu0 0.0
    %654 = vmatpush.msra.mxu0 0.0
    %655 = vmatpush.msra.mxu0 %v632
    %656 = vmatpush.msra.mxu0 %v630
    %657 = vmatmul.f32.gmra.mxu0 %v636
    %v658 = vpop.f32.mrf.mxu0
    %v659 = vadd.f32 0.0, %v658
    %660 = vmatmul.f32.gmra.mxu0 %v639
    %v661 = vpop.f32.mrf.mxu0
    %v662 = vadd.f32 0.0, %v661
    %663 = vdwg.mxu0
    %v664 = vmul.f32 %v659, %v627
    %v665 = vmul.f32 %v662, %v628
    %v667 = vsel %vm199, %v664, 0
    %v670 = vsel %vm199, %v665, 0
    %672 = vmatpush.msra.mxu0 0.0
    %673 = vmatpush.msra.mxu0 0.0
    %674 = vmatpush.msra.mxu0 0.0
    %675 = vmatpush.msra.mxu0 0.0
    %676 = vmatpush.msra.mxu0 0.0
    %677 = vmatpush.msra.mxu0 0.0
    %678 = vmatpush.msra.mxu0 0.0
    %679 = vmatpush.msra.mxu0 0.0
    %680 = vmatpush.msra.mxu0 0.0
    %681 = vmatpush.msra.mxu0 0.0
    %682 = vmatpush.msra.mxu0 0.0
    %683 = vmatpush.msra.mxu0 0.0
    %684 = vmatpush.msra.mxu0 0.0
    %685 = vmatpush.msra.mxu0 0.0
    %686 = vmatpush.msra.mxu0 0.0
    %687 = vmatpush.msra.mxu0 %v159
    %688 = vmatmul.f32.gmra.mxu0 %v667
    %v689 = vpop.f32.mrf.mxu0
    %v690 = vadd.f32 0.0, %v689
    %691 = vmatmul.f32.gmra.mxu0 %v670
    %v692 = vpop.f32.mrf.mxu0
    %v693 = vadd.f32 0.0, %v692
    %694 = vdwg.mxu0
    %v695 = vadd.f32 %v568, %v690
    %v696 = vadd.f32 %v569, %v693
    %v698 = vperm.slane %v160, 0
    %v700 = vadd.f32 %v695, %v698
    %v701 = vadd.f32 %v696, %v698
    %704 = vst.msk [vmem:[%s21] sm:$0xff] %vm77, %v196
    %705 = vst.msk [vmem:[%s21 + $0x8] sm:$0xff] %vm77, %v198
    %706 = vst.msk [vmem:[%s22] sm:$0xff] %vm77, %v253
    %707 = vst.msk [vmem:[%s22 + $0x8] sm:$0xff] %vm77, %v255
    %v708 = vadd.f32 %v700, %v137
    %v709 = vadd.f32 %v701, %v138
    %v710 = vld [vmem:[%s12] sm:$0x1]
    %v711 = vld [vmem:[%s13] sm:$0x1]
    %v712 = vsel %vm77, %v708, 0.0
    %713 = vadd.xlane.f32.xlu0 %v712
    %v714 = vpop.xlane.xlu0 %713
    %v715 = vsel %vm77, %v709, 0.0
    %716 = vadd.xlane.f32.xlu0 %v715
    %v717 = vpop.xlane.xlu0 %716
    %v718 = vmul.f32 %v714, %v90
    %v719 = vmul.f32 %v717, %v90
    %v720 = vsub.f32 %v708, %v718
    %v721 = vsub.f32 %v709, %v719
    %v722 = vmul.f32 %v720, %v720
    %v723 = vmul.f32 %v721, %v721
    %v724 = vsel %vm77, %v722, 0.0
    %725 = vadd.xlane.f32.xlu0 %v724
    %v726 = vpop.xlane.xlu0 %725
    %v727 = vsel %vm77, %v723, 0.0
    %728 = vadd.xlane.f32.xlu0 %v727
    %v729 = vpop.xlane.xlu0 %728
    %v730 = vmul.f32 %v726, %v90
    %v731 = vmul.f32 %v729, %v90
    %v732 = vadd.f32 %v730, 1e-05
    %v733 = vadd.f32 %v731, 1e-05
    %v734 = vrsqrt.pop %v732
    %v735 = vmul.f32 %v734, %v732
    %v736 = vmul.f32 %v735, %v734
    %v737 = vmul.f32 0.5, %v736
    %v738 = vsub.f32 1.5, %v737
    %v739 = vmul.f32 %v734, %v738
    %vm740 = vweird.f32 %v732
    %vm741 = vweird.f32 %v734
    %vm742 = vmor %vm740, %vm741
    %v743 = vsel %vm742, %v734, %v739
    %v744 = vrsqrt.pop %v733
    %v745 = vmul.f32 %v744, %v733
    %v746 = vmul.f32 %v745, %v744
    %v747 = vmul.f32 0.5, %v746
    %v748 = vsub.f32 1.5, %v747
    %v749 = vmul.f32 %v744, %v748
    %vm750 = vweird.f32 %v733
    %vm751 = vweird.f32 %v744
    %vm752 = vmor %vm750, %vm751
    %v753 = vsel %vm752, %v744, %v749
    %v754 = vmul.f32 %v720, %v743
    %v755 = vmul.f32 %v721, %v753
    %v757 = vperm.slane %v710, 0
    %v759 = vmul.f32 %v754, %v757
    %v760 = vmul.f32 %v755, %v757
    %v762 = vperm.slane %v711, 0
    %v764 = vadd.f32 %v759, %v762
    %v765 = vadd.f32 %v760, %v762
    %s766 = scalar_lea.vmem %s8, 32
    %v767 = vld [vmem:[%s766] sm:$0xff]
    %v768 = vld [vmem:[%s766 + $0x8] sm:$0xff]
    %v769 = vld [vmem:[%s766 + $0x10] sm:$0xff]
    %v770 = vld [vmem:[%s766 + $0x18] sm:$0xff]
    %s771 = scalar_lea.vmem %s9, 1
    %v772 = vld [vmem:[%s771] sm:$0x1]
    %s773 = scalar_lea.vmem %s10, 32
    %v774 = vld [vmem:[%s773] sm:$0xff]
    %v775 = vld [vmem:[%s773 + $0x8] sm:$0xff]
    %v776 = vld [vmem:[%s773 + $0x10] sm:$0xff]
    %v777 = vld [vmem:[%s773 + $0x18] sm:$0xff]
    %s778 = scalar_lea.vmem %s11, 1
    %v779 = vld [vmem:[%s778] sm:$0x1]
    %v781 = vperm.slane %v772, 0
    %v784 = vsel %vm77, %v764, 0
    %v787 = vsel %vm77, %v765, 0
    %789 = vmatpush.msra.mxu0 0.0
    %790 = vmatpush.msra.mxu0 0.0
    %791 = vmatpush.msra.mxu0 0.0
    %792 = vmatpush.msra.mxu0 0.0
    %793 = vmatpush.msra.mxu0 0.0
    %794 = vmatpush.msra.mxu0 0.0
    %795 = vmatpush.msra.mxu0 0.0
    %796 = vmatpush.msra.mxu0 0.0
    %797 = vmatpush.msra.mxu0 0.0
    %798 = vmatpush.msra.mxu0 0.0
    %799 = vmatpush.msra.mxu0 0.0
    %800 = vmatpush.msra.mxu0 0.0
    %801 = vmatpush.msra.mxu0 %v770
    %802 = vmatpush.msra.mxu0 %v769
    %803 = vmatpush.msra.mxu0 %v768
    %804 = vmatpush.msra.mxu0 %v767
    %805 = vmatmul.f32.gmra.mxu0 %v784
    %v806 = vpop.f32.mrf.mxu0
    %v807 = vadd.f32 %v781, %v806
    %808 = vmatmul.f32.gmra.mxu0 %v787
    %v809 = vpop.f32.mrf.mxu0
    %v810 = vadd.f32 %v781, %v809
    %811 = vdwg.mxu0
    %816 = vrot.lane.b32.xlu0 %v767, 96
    %v817 = vpop.permute.xlu0 %816
    %818 = vrot.lane.b32.xlu0 %v768, 96
    %v819 = vpop.permute.xlu0 %818
    %820 = vrot.lane.b32.xlu0 %v769, 96
    %v821 = vpop.permute.xlu0 %820
    %822 = vrot.lane.b32.xlu0 %v770, 96
    %v823 = vpop.permute.xlu0 %822
    %828 = vrot.lane.b32.xlu0 %v781, 96
    %v829 = vpop.permute.xlu0 %828
    %v832 = vsel %vm77, %v139, 0
    %v835 = vsel %vm77, %v140, 0
    %837 = vmatpush.msra.mxu0 0.0
    %838 = vmatpush.msra.mxu0 0.0
    %839 = vmatpush.msra.mxu0 0.0
    %840 = vmatpush.msra.mxu0 0.0
    %841 = vmatpush.msra.mxu0 0.0
    %842 = vmatpush.msra.mxu0 0.0
    %843 = vmatpush.msra.mxu0 0.0
    %844 = vmatpush.msra.mxu0 0.0
    %845 = vmatpush.msra.mxu0 0.0
    %846 = vmatpush.msra.mxu0 0.0
    %847 = vmatpush.msra.mxu0 0.0
    %848 = vmatpush.msra.mxu0 0.0
    %849 = vmatpush.msra.mxu0 %v823
    %850 = vmatpush.msra.mxu0 %v821
    %851 = vmatpush.msra.mxu0 %v819
    %852 = vmatpush.msra.mxu0 %v817
    %853 = vmatmul.f32.gmra.mxu0 %v832
    %v854 = vpop.f32.mrf.mxu0
    %v855 = vadd.f32 %v829, %v854
    %856 = vmatmul.f32.gmra.mxu0 %v835
    %v857 = vpop.f32.mrf.mxu0
    %v858 = vadd.f32 %v829, %v857
    %859 = vdwg.mxu0
    %v861 = vsel %vm199, %v807, 0
    %v864 = vsel %vm199, %v810, 0
    %v867 = vsel %vm199, %v855, 0
    %v870 = vsel %vm199, %v858, 0
    %872 = vmatpush.xpose.msra.mxu0 0.0
    %873 = vmatpush.xpose.msra.mxu0 0.0
    %874 = vmatpush.xpose.msra.mxu0 0.0
    %875 = vmatpush.xpose.msra.mxu0 0.0
    %876 = vmatpush.xpose.msra.mxu0 0.0
    %877 = vmatpush.xpose.msra.mxu0 0.0
    %878 = vmatpush.xpose.msra.mxu0 0.0
    %879 = vmatpush.xpose.msra.mxu0 0.0
    %880 = vmatpush.xpose.msra.mxu0 0.0
    %881 = vmatpush.xpose.msra.mxu0 0.0
    %882 = vmatpush.xpose.msra.mxu0 0.0
    %883 = vmatpush.xpose.msra.mxu0 0.0
    %884 = vmatpush.xpose.msra.mxu0 0.0
    %885 = vmatpush.xpose.msra.mxu0 0.0
    %886 = vmatpush.xpose.msra.mxu0 %v870
    %887 = vmatpush.xpose.msra.mxu0 %v867
    %888 = vmatmul.f32.gmra.mxu0 %v861
    %v889 = vpop.f32.mrf.mxu0
    %v890 = vadd.f32 %v147, %v889
    %891 = vmatmul.f32.gmra.mxu0 %v864
    %v892 = vpop.f32.mrf.mxu0
    %v893 = vadd.f32 %v148, %v892
    %894 = vdwg.mxu0
    %v895 = vsel %vm231, %v890, -inf
    %896 = vmax.xlane.f32.xlu0 %v895
    %v897 = vpop.xlane.xlu0 %896
    %v898 = vsel %vm231, %v893, -inf
    %899 = vmax.xlane.f32.xlu0 %v898
    %v900 = vpop.xlane.xlu0 %899
    %v901 = vsub.f32 %v890, %v897
    %v902 = vsub.f32 %v893, %v900
    %v903 = vmul.f32 %v901, 1.442695
    %v904 = vpow.pop %v903
    %v905 = vmul.f32 %v902, 1.442695
    %v906 = vpow.pop %v905
    %v907 = vsel %vm231, %v904, 0.0
    %908 = vadd.xlane.f32.xlu0 %v907
    %v909 = vpop.xlane.xlu0 %908
    %v910 = vsel %vm231, %v906, 0.0
    %911 = vadd.xlane.f32.xlu0 %v910
    %v912 = vpop.xlane.xlu0 %911
    %v913 = vrcp.pop %v909
    %v914 = vrcp.pop %v912
    %915 = vrot.lane.b32.xlu0 %v855, 96
    %v916 = vpop.permute.xlu0 %915
    %917 = vrot.lane.b32.xlu0 %v858, 96
    %v918 = vpop.permute.xlu0 %917
    %v922 = vsel %vm231, %v904, 0
    %v925 = vsel %vm231, %v906, 0
    %927 = vmatpush.msra.mxu0 0.0
    %928 = vmatpush.msra.mxu0 0.0
    %929 = vmatpush.msra.mxu0 0.0
    %930 = vmatpush.msra.mxu0 0.0
    %931 = vmatpush.msra.mxu0 0.0
    %932 = vmatpush.msra.mxu0 0.0
    %933 = vmatpush.msra.mxu0 0.0
    %934 = vmatpush.msra.mxu0 0.0
    %935 = vmatpush.msra.mxu0 0.0
    %936 = vmatpush.msra.mxu0 0.0
    %937 = vmatpush.msra.mxu0 0.0
    %938 = vmatpush.msra.mxu0 0.0
    %939 = vmatpush.msra.mxu0 0.0
    %940 = vmatpush.msra.mxu0 0.0
    %941 = vmatpush.msra.mxu0 %v918
    %942 = vmatpush.msra.mxu0 %v916
    %943 = vmatmul.f32.gmra.mxu0 %v922
    %v944 = vpop.f32.mrf.mxu0
    %v945 = vadd.f32 0.0, %v944
    %946 = vmatmul.f32.gmra.mxu0 %v925
    %v947 = vpop.f32.mrf.mxu0
    %v948 = vadd.f32 0.0, %v947
    %949 = vdwg.mxu0
    %v950 = vmul.f32 %v945, %v913
    %v951 = vmul.f32 %v948, %v914
    %952 = vrot.lane.b32.xlu0 %v807, 120
    %v953 = vpop.permute.xlu0 %952
    %954 = vrot.lane.b32.xlu0 %v810, 120
    %v955 = vpop.permute.xlu0 %954
    %956 = vrot.lane.b32.xlu0 %v855, 120
    %v957 = vpop.permute.xlu0 %956
    %958 = vrot.lane.b32.xlu0 %v858, 120
    %v959 = vpop.permute.xlu0 %958
    %v960 = vsel %vm199, %v953, 0
    %v962 = vsel %vm199, %v955, 0
    %v964 = vsel %vm199, %v957, 0
    %v966 = vsel %vm199, %v959, 0
    %968 = vmatpush.xpose.msra.mxu0 0.0
    %969 = vmatpush.xpose.msra.mxu0 0.0
    %970 = vmatpush.xpose.msra.mxu0 0.0
    %971 = vmatpush.xpose.msra.mxu0 0.0
    %972 = vmatpush.xpose.msra.mxu0 0.0
    %973 = vmatpush.xpose.msra.mxu0 0.0
    %974 = vmatpush.xpose.msra.mxu0 0.0
    %975 = vmatpush.xpose.msra.mxu0 0.0
    %976 = vmatpush.xpose.msra.mxu0 0.0
    %977 = vmatpush.xpose.msra.mxu0 0.0
    %978 = vmatpush.xpose.msra.mxu0 0.0
    %979 = vmatpush.xpose.msra.mxu0 0.0
    %980 = vmatpush.xpose.msra.mxu0 0.0
    %981 = vmatpush.xpose.msra.mxu0 0.0
    %982 = vmatpush.xpose.msra.mxu0 %v966
    %983 = vmatpush.xpose.msra.mxu0 %v964
    %984 = vmatmul.f32.gmra.mxu0 %v960
    %v985 = vpop.f32.mrf.mxu0
    %v986 = vadd.f32 %v147, %v985
    %987 = vmatmul.f32.gmra.mxu0 %v962
    %v988 = vpop.f32.mrf.mxu0
    %v989 = vadd.f32 %v148, %v988
    %990 = vdwg.mxu0
    %v991 = vsel %vm231, %v986, -inf
    %992 = vmax.xlane.f32.xlu0 %v991
    %v993 = vpop.xlane.xlu0 %992
    %v994 = vsel %vm231, %v989, -inf
    %995 = vmax.xlane.f32.xlu0 %v994
    %v996 = vpop.xlane.xlu0 %995
    %v997 = vsub.f32 %v986, %v993
    %v998 = vsub.f32 %v989, %v996
    %v999 = vmul.f32 %v997, 1.442695
    %v1000 = vpow.pop %v999
    %v1001 = vmul.f32 %v998, 1.442695
    %v1002 = vpow.pop %v1001
    %v1003 = vsel %vm231, %v1000, 0.0
    %1004 = vadd.xlane.f32.xlu0 %v1003
    %v1005 = vpop.xlane.xlu0 %1004
    %v1006 = vsel %vm231, %v1002, 0.0
    %1007 = vadd.xlane.f32.xlu0 %v1006
    %v1008 = vpop.xlane.xlu0 %1007
    %v1009 = vrcp.pop %v1005
    %v1010 = vrcp.pop %v1008
    %1011 = vrot.lane.b32.xlu0 %v855, 88
    %v1012 = vpop.permute.xlu0 %1011
    %1013 = vrot.lane.b32.xlu0 %v858, 88
    %v1014 = vpop.permute.xlu0 %1013
    %v1018 = vsel %vm231, %v1000, 0
    %v1021 = vsel %vm231, %v1002, 0
    %1023 = vmatpush.msra.mxu0 0.0
    %1024 = vmatpush.msra.mxu0 0.0
    %1025 = vmatpush.msra.mxu0 0.0
    %1026 = vmatpush.msra.mxu0 0.0
    %1027 = vmatpush.msra.mxu0 0.0
    %1028 = vmatpush.msra.mxu0 0.0
    %1029 = vmatpush.msra.mxu0 0.0
    %1030 = vmatpush.msra.mxu0 0.0
    %1031 = vmatpush.msra.mxu0 0.0
    %1032 = vmatpush.msra.mxu0 0.0
    %1033 = vmatpush.msra.mxu0 0.0
    %1034 = vmatpush.msra.mxu0 0.0
    %1035 = vmatpush.msra.mxu0 0.0
    %1036 = vmatpush.msra.mxu0 0.0
    %1037 = vmatpush.msra.mxu0 %v1014
    %1038 = vmatpush.msra.mxu0 %v1012
    %1039 = vmatmul.f32.gmra.mxu0 %v1018
    %v1040 = vpop.f32.mrf.mxu0
    %v1041 = vadd.f32 0.0, %v1040
    %1042 = vmatmul.f32.gmra.mxu0 %v1021
    %v1043 = vpop.f32.mrf.mxu0
    %v1044 = vadd.f32 0.0, %v1043
    %1045 = vdwg.mxu0
    %v1046 = vmul.f32 %v1041, %v1009
    %v1047 = vmul.f32 %v1044, %v1010
    %v1049 = vsel %vm199, %v1046, 0
    %v1052 = vsel %vm199, %v1047, 0
    %1054 = vmatpush.msra.mxu0 0.0
    %1055 = vmatpush.msra.mxu0 0.0
    %1056 = vmatpush.msra.mxu0 0.0
    %1057 = vmatpush.msra.mxu0 0.0
    %1058 = vmatpush.msra.mxu0 0.0
    %1059 = vmatpush.msra.mxu0 0.0
    %1060 = vmatpush.msra.mxu0 0.0
    %1061 = vmatpush.msra.mxu0 0.0
    %1062 = vmatpush.msra.mxu0 0.0
    %1063 = vmatpush.msra.mxu0 0.0
    %1064 = vmatpush.msra.mxu0 0.0
    %1065 = vmatpush.msra.mxu0 0.0
    %1066 = vmatpush.msra.mxu0 0.0
    %1067 = vmatpush.msra.mxu0 0.0
    %1068 = vmatpush.msra.mxu0 0.0
    %1069 = vmatpush.msra.mxu0 %v775
    %1070 = vmatmul.f32.gmra.mxu0 %v1049
    %v1071 = vpop.f32.mrf.mxu0
    %v1072 = vadd.f32 0.0, %v1071
    %1073 = vmatmul.f32.gmra.mxu0 %v1052
    %v1074 = vpop.f32.mrf.mxu0
    %v1075 = vadd.f32 0.0, %v1074
    %1076 = vdwg.mxu0
    %v1078 = vsel %vm199, %v950, 0
    %v1081 = vsel %vm199, %v951, 0
    %1083 = vmatpush.msra.mxu0 0.0
    %1084 = vmatpush.msra.mxu0 0.0
    %1085 = vmatpush.msra.mxu0 0.0
    %1086 = vmatpush.msra.mxu0 0.0
    %1087 = vmatpush.msra.mxu0 0.0
    %1088 = vmatpush.msra.mxu0 0.0
    %1089 = vmatpush.msra.mxu0 0.0
    %1090 = vmatpush.msra.mxu0 0.0
    %1091 = vmatpush.msra.mxu0 0.0
    %1092 = vmatpush.msra.mxu0 0.0
    %1093 = vmatpush.msra.mxu0 0.0
    %1094 = vmatpush.msra.mxu0 0.0
    %1095 = vmatpush.msra.mxu0 0.0
    %1096 = vmatpush.msra.mxu0 0.0
    %1097 = vmatpush.msra.mxu0 0.0
    %1098 = vmatpush.msra.mxu0 %v774
    %1099 = vmatmul.f32.gmra.mxu0 %v1078
    %v1100 = vpop.f32.mrf.mxu0
    %v1101 = vadd.f32 %v1072, %v1100
    %1102 = vmatmul.f32.gmra.mxu0 %v1081
    %v1103 = vpop.f32.mrf.mxu0
    %v1104 = vadd.f32 %v1075, %v1103
    %1105 = vdwg.mxu0
    %1106 = vrot.lane.b32.xlu0 %v807, 112
    %v1107 = vpop.permute.xlu0 %1106
    %1108 = vrot.lane.b32.xlu0 %v810, 112
    %v1109 = vpop.permute.xlu0 %1108
    %1110 = vrot.lane.b32.xlu0 %v855, 112
    %v1111 = vpop.permute.xlu0 %1110
    %1112 = vrot.lane.b32.xlu0 %v858, 112
    %v1113 = vpop.permute.xlu0 %1112
    %v1114 = vsel %vm199, %v1107, 0
    %v1116 = vsel %vm199, %v1109, 0
    %v1118 = vsel %vm199, %v1111, 0
    %v1120 = vsel %vm199, %v1113, 0
    %1122 = vmatpush.xpose.msra.mxu0 0.0
    %1123 = vmatpush.xpose.msra.mxu0 0.0
    %1124 = vmatpush.xpose.msra.mxu0 0.0
    %1125 = vmatpush.xpose.msra.mxu0 0.0
    %1126 = vmatpush.xpose.msra.mxu0 0.0
    %1127 = vmatpush.xpose.msra.mxu0 0.0
    %1128 = vmatpush.xpose.msra.mxu0 0.0
    %1129 = vmatpush.xpose.msra.mxu0 0.0
    %1130 = vmatpush.xpose.msra.mxu0 0.0
    %1131 = vmatpush.xpose.msra.mxu0 0.0
    %1132 = vmatpush.xpose.msra.mxu0 0.0
    %1133 = vmatpush.xpose.msra.mxu0 0.0
    %1134 = vmatpush.xpose.msra.mxu0 0.0
    %1135 = vmatpush.xpose.msra.mxu0 0.0
    %1136 = vmatpush.xpose.msra.mxu0 %v1120
    %1137 = vmatpush.xpose.msra.mxu0 %v1118
    %1138 = vmatmul.f32.gmra.mxu0 %v1114
    %v1139 = vpop.f32.mrf.mxu0
    %v1140 = vadd.f32 %v147, %v1139
    %1141 = vmatmul.f32.gmra.mxu0 %v1116
    %v1142 = vpop.f32.mrf.mxu0
    %v1143 = vadd.f32 %v148, %v1142
    %1144 = vdwg.mxu0
    %v1145 = vsel %vm231, %v1140, -inf
    %1146 = vmax.xlane.f32.xlu0 %v1145
    %v1147 = vpop.xlane.xlu0 %1146
    %v1148 = vsel %vm231, %v1143, -inf
    %1149 = vmax.xlane.f32.xlu0 %v1148
    %v1150 = vpop.xlane.xlu0 %1149
    %v1151 = vsub.f32 %v1140, %v1147
    %v1152 = vsub.f32 %v1143, %v1150
    %v1153 = vmul.f32 %v1151, 1.442695
    %v1154 = vpow.pop %v1153
    %v1155 = vmul.f32 %v1152, 1.442695
    %v1156 = vpow.pop %v1155
    %v1157 = vsel %vm231, %v1154, 0.0
    %1158 = vadd.xlane.f32.xlu0 %v1157
    %v1159 = vpop.xlane.xlu0 %1158
    %v1160 = vsel %vm231, %v1156, 0.0
    %1161 = vadd.xlane.f32.xlu0 %v1160
    %v1162 = vpop.xlane.xlu0 %1161
    %v1163 = vrcp.pop %v1159
    %v1164 = vrcp.pop %v1162
    %1165 = vrot.lane.b32.xlu0 %v855, 80
    %v1166 = vpop.permute.xlu0 %1165
    %1167 = vrot.lane.b32.xlu0 %v858, 80
    %v1168 = vpop.permute.xlu0 %1167
    %v1172 = vsel %vm231, %v1154, 0
    %v1175 = vsel %vm231, %v1156, 0
    %1177 = vmatpush.msra.mxu0 0.0
    %1178 = vmatpush.msra.mxu0 0.0
    %1179 = vmatpush.msra.mxu0 0.0
    %1180 = vmatpush.msra.mxu0 0.0
    %1181 = vmatpush.msra.mxu0 0.0
    %1182 = vmatpush.msra.mxu0 0.0
    %1183 = vmatpush.msra.mxu0 0.0
    %1184 = vmatpush.msra.mxu0 0.0
    %1185 = vmatpush.msra.mxu0 0.0
    %1186 = vmatpush.msra.mxu0 0.0
    %1187 = vmatpush.msra.mxu0 0.0
    %1188 = vmatpush.msra.mxu0 0.0
    %1189 = vmatpush.msra.mxu0 0.0
    %1190 = vmatpush.msra.mxu0 0.0
    %1191 = vmatpush.msra.mxu0 %v1168
    %1192 = vmatpush.msra.mxu0 %v1166
    %1193 = vmatmul.f32.gmra.mxu0 %v1172
    %v1194 = vpop.f32.mrf.mxu0
    %v1195 = vadd.f32 0.0, %v1194
    %1196 = vmatmul.f32.gmra.mxu0 %v1175
    %v1197 = vpop.f32.mrf.mxu0
    %v1198 = vadd.f32 0.0, %v1197
    %1199 = vdwg.mxu0
    %v1200 = vmul.f32 %v1195, %v1163
    %v1201 = vmul.f32 %v1198, %v1164
    %v1203 = vsel %vm199, %v1200, 0
    %v1206 = vsel %vm199, %v1201, 0
    %1208 = vmatpush.msra.mxu0 0.0
    %1209 = vmatpush.msra.mxu0 0.0
    %1210 = vmatpush.msra.mxu0 0.0
    %1211 = vmatpush.msra.mxu0 0.0
    %1212 = vmatpush.msra.mxu0 0.0
    %1213 = vmatpush.msra.mxu0 0.0
    %1214 = vmatpush.msra.mxu0 0.0
    %1215 = vmatpush.msra.mxu0 0.0
    %1216 = vmatpush.msra.mxu0 0.0
    %1217 = vmatpush.msra.mxu0 0.0
    %1218 = vmatpush.msra.mxu0 0.0
    %1219 = vmatpush.msra.mxu0 0.0
    %1220 = vmatpush.msra.mxu0 0.0
    %1221 = vmatpush.msra.mxu0 0.0
    %1222 = vmatpush.msra.mxu0 0.0
    %1223 = vmatpush.msra.mxu0 %v776
    %1224 = vmatmul.f32.gmra.mxu0 %v1203
    %v1225 = vpop.f32.mrf.mxu0
    %v1226 = vadd.f32 0.0, %v1225
    %1227 = vmatmul.f32.gmra.mxu0 %v1206
    %v1228 = vpop.f32.mrf.mxu0
    %v1229 = vadd.f32 0.0, %v1228
    %1230 = vdwg.mxu0
    %v1231 = vadd.f32 %v1101, %v1226
    %v1232 = vadd.f32 %v1104, %v1229
    %1233 = vrot.lane.b32.xlu0 %v807, 104
    %v1234 = vpop.permute.xlu0 %1233
    %1235 = vrot.lane.b32.xlu0 %v810, 104
    %v1236 = vpop.permute.xlu0 %1235
    %1237 = vrot.lane.b32.xlu0 %v855, 104
    %v1238 = vpop.permute.xlu0 %1237
    %1239 = vrot.lane.b32.xlu0 %v858, 104
    %v1240 = vpop.permute.xlu0 %1239
    %v1241 = vsel %vm199, %v1234, 0
    %v1243 = vsel %vm199, %v1236, 0
    %v1245 = vsel %vm199, %v1238, 0
    %v1247 = vsel %vm199, %v1240, 0
    %1249 = vmatpush.xpose.msra.mxu0 0.0
    %1250 = vmatpush.xpose.msra.mxu0 0.0
    %1251 = vmatpush.xpose.msra.mxu0 0.0
    %1252 = vmatpush.xpose.msra.mxu0 0.0
    %1253 = vmatpush.xpose.msra.mxu0 0.0
    %1254 = vmatpush.xpose.msra.mxu0 0.0
    %1255 = vmatpush.xpose.msra.mxu0 0.0
    %1256 = vmatpush.xpose.msra.mxu0 0.0
    %1257 = vmatpush.xpose.msra.mxu0 0.0
    %1258 = vmatpush.xpose.msra.mxu0 0.0
    %1259 = vmatpush.xpose.msra.mxu0 0.0
    %1260 = vmatpush.xpose.msra.mxu0 0.0
    %1261 = vmatpush.xpose.msra.mxu0 0.0
    %1262 = vmatpush.xpose.msra.mxu0 0.0
    %1263 = vmatpush.xpose.msra.mxu0 %v1247
    %1264 = vmatpush.xpose.msra.mxu0 %v1245
    %1265 = vmatmul.f32.gmra.mxu0 %v1241
    %v1266 = vpop.f32.mrf.mxu0
    %v1267 = vadd.f32 %v147, %v1266
    %1268 = vmatmul.f32.gmra.mxu0 %v1243
    %v1269 = vpop.f32.mrf.mxu0
    %v1270 = vadd.f32 %v148, %v1269
    %1271 = vdwg.mxu0
    %v1272 = vsel %vm231, %v1267, -inf
    %1273 = vmax.xlane.f32.xlu0 %v1272
    %v1274 = vpop.xlane.xlu0 %1273
    %v1275 = vsel %vm231, %v1270, -inf
    %1276 = vmax.xlane.f32.xlu0 %v1275
    %v1277 = vpop.xlane.xlu0 %1276
    %v1278 = vsub.f32 %v1267, %v1274
    %v1279 = vsub.f32 %v1270, %v1277
    %v1280 = vmul.f32 %v1278, 1.442695
    %v1281 = vpow.pop %v1280
    %v1282 = vmul.f32 %v1279, 1.442695
    %v1283 = vpow.pop %v1282
    %v1284 = vsel %vm231, %v1281, 0.0
    %1285 = vadd.xlane.f32.xlu0 %v1284
    %v1286 = vpop.xlane.xlu0 %1285
    %v1287 = vsel %vm231, %v1283, 0.0
    %1288 = vadd.xlane.f32.xlu0 %v1287
    %v1289 = vpop.xlane.xlu0 %1288
    %v1290 = vrcp.pop %v1286
    %v1291 = vrcp.pop %v1289
    %1292 = vrot.lane.b32.xlu0 %v855, 72
    %v1293 = vpop.permute.xlu0 %1292
    %1294 = vrot.lane.b32.xlu0 %v858, 72
    %v1295 = vpop.permute.xlu0 %1294
    %v1299 = vsel %vm231, %v1281, 0
    %v1302 = vsel %vm231, %v1283, 0
    %1304 = vmatpush.msra.mxu0 0.0
    %1305 = vmatpush.msra.mxu0 0.0
    %1306 = vmatpush.msra.mxu0 0.0
    %1307 = vmatpush.msra.mxu0 0.0
    %1308 = vmatpush.msra.mxu0 0.0
    %1309 = vmatpush.msra.mxu0 0.0
    %1310 = vmatpush.msra.mxu0 0.0
    %1311 = vmatpush.msra.mxu0 0.0
    %1312 = vmatpush.msra.mxu0 0.0
    %1313 = vmatpush.msra.mxu0 0.0
    %1314 = vmatpush.msra.mxu0 0.0
    %1315 = vmatpush.msra.mxu0 0.0
    %1316 = vmatpush.msra.mxu0 0.0
    %1317 = vmatpush.msra.mxu0 0.0
    %1318 = vmatpush.msra.mxu0 %v1295
    %1319 = vmatpush.msra.mxu0 %v1293
    %1320 = vmatmul.f32.gmra.mxu0 %v1299
    %v1321 = vpop.f32.mrf.mxu0
    %v1322 = vadd.f32 0.0, %v1321
    %1323 = vmatmul.f32.gmra.mxu0 %v1302
    %v1324 = vpop.f32.mrf.mxu0
    %v1325 = vadd.f32 0.0, %v1324
    %1326 = vdwg.mxu0
    %v1327 = vmul.f32 %v1322, %v1290
    %v1328 = vmul.f32 %v1325, %v1291
    %v1330 = vsel %vm199, %v1327, 0
    %v1333 = vsel %vm199, %v1328, 0
    %1335 = vmatpush.msra.mxu0 0.0
    %1336 = vmatpush.msra.mxu0 0.0
    %1337 = vmatpush.msra.mxu0 0.0
    %1338 = vmatpush.msra.mxu0 0.0
    %1339 = vmatpush.msra.mxu0 0.0
    %1340 = vmatpush.msra.mxu0 0.0
    %1341 = vmatpush.msra.mxu0 0.0
    %1342 = vmatpush.msra.mxu0 0.0
    %1343 = vmatpush.msra.mxu0 0.0
    %1344 = vmatpush.msra.mxu0 0.0
    %1345 = vmatpush.msra.mxu0 0.0
    %1346 = vmatpush.msra.mxu0 0.0
    %1347 = vmatpush.msra.mxu0 0.0
    %1348 = vmatpush.msra.mxu0 0.0
    %1349 = vmatpush.msra.mxu0 0.0
    %1350 = vmatpush.msra.mxu0 %v777
    %1351 = vmatmul.f32.gmra.mxu0 %v1330
    %v1352 = vpop.f32.mrf.mxu0
    %v1353 = vadd.f32 0.0, %v1352
    %1354 = vmatmul.f32.gmra.mxu0 %v1333
    %v1355 = vpop.f32.mrf.mxu0
    %v1356 = vadd.f32 0.0, %v1355
    %1357 = vdwg.mxu0
    %v1358 = vadd.f32 %v1231, %v1353
    %v1359 = vadd.f32 %v1232, %v1356
    %v1361 = vperm.slane %v779, 0
    %v1363 = vadd.f32 %v1358, %v1361
    %v1364 = vadd.f32 %v1359, %v1361
    %1365 = vst.msk [vmem:[%s23] sm:$0xff] %vm77, %v855
    %1366 = vst.msk [vmem:[%s23 + $0x8] sm:$0xff] %vm77, %v858
    %1367 = vst.msk [vmem:[%s24] sm:$0xff] %vm77, %v916
    %1368 = vst.msk [vmem:[%s24 + $0x8] sm:$0xff] %vm77, %v918
    %v1369 = vadd.f32 %v1363, %v764
    %v1370 = vadd.f32 %v1364, %v765
    %s1371 = scalar_lea.vmem %s12, 1
    %v1372 = vld [vmem:[%s1371] sm:$0x1]
    %s1373 = scalar_lea.vmem %s13, 1
    %v1374 = vld [vmem:[%s1373] sm:$0x1]
    %v1375 = vsel %vm77, %v1369, 0.0
    %1376 = vadd.xlane.f32.xlu0 %v1375
    %v1377 = vpop.xlane.xlu0 %1376
    %v1378 = vsel %vm77, %v1370, 0.0
    %1379 = vadd.xlane.f32.xlu0 %v1378
    %v1380 = vpop.xlane.xlu0 %1379
    %v1381 = vmul.f32 %v1377, %v90
    %v1382 = vmul.f32 %v1380, %v90
    %v1383 = vsub.f32 %v1369, %v1381
    %v1384 = vsub.f32 %v1370, %v1382
    %v1385 = vmul.f32 %v1383, %v1383
    %v1386 = vmul.f32 %v1384, %v1384
    %v1387 = vsel %vm77, %v1385, 0.0
    %1388 = vadd.xlane.f32.xlu0 %v1387
    %v1389 = vpop.xlane.xlu0 %1388
    %v1390 = vsel %vm77, %v1386, 0.0
    %1391 = vadd.xlane.f32.xlu0 %v1390
    %v1392 = vpop.xlane.xlu0 %1391
    %v1393 = vmul.f32 %v1389, %v90
    %v1394 = vmul.f32 %v1392, %v90
    %v1395 = vadd.f32 %v1393, 1e-05
    %v1396 = vadd.f32 %v1394, 1e-05
    %v1397 = vrsqrt.pop %v1395
    %v1398 = vmul.f32 %v1397, %v1395
    %v1399 = vmul.f32 %v1398, %v1397
    %v1400 = vmul.f32 0.5, %v1399
    %v1401 = vsub.f32 1.5, %v1400
    %v1402 = vmul.f32 %v1397, %v1401
    %vm1403 = vweird.f32 %v1395
    %vm1404 = vweird.f32 %v1397
    %vm1405 = vmor %vm1403, %vm1404
    %v1406 = vsel %vm1405, %v1397, %v1402
    %v1407 = vrsqrt.pop %v1396
    %v1408 = vmul.f32 %v1407, %v1396
    %v1409 = vmul.f32 %v1408, %v1407
    %v1410 = vmul.f32 0.5, %v1409
    %v1411 = vsub.f32 1.5, %v1410
    %v1412 = vmul.f32 %v1407, %v1411
    %vm1413 = vweird.f32 %v1396
    %vm1414 = vweird.f32 %v1407
    %vm1415 = vmor %vm1413, %vm1414
    %v1416 = vsel %vm1415, %v1407, %v1412
    %v1417 = vmul.f32 %v1383, %v1406
    %v1418 = vmul.f32 %v1384, %v1416
    %v1420 = vperm.slane %v1372, 0
    %v1422 = vmul.f32 %v1417, %v1420
    %v1423 = vmul.f32 %v1418, %v1420
    %v1425 = vperm.slane %v1374, 0
    %v1427 = vadd.f32 %v1422, %v1425
    %v1428 = vadd.f32 %v1423, %v1425
    %s1429 = scalar_lea.vmem %s8, 64
    %v1430 = vld [vmem:[%s1429] sm:$0xff]
    %v1431 = vld [vmem:[%s1429 + $0x8] sm:$0xff]
    %v1432 = vld [vmem:[%s1429 + $0x10] sm:$0xff]
    %v1433 = vld [vmem:[%s1429 + $0x18] sm:$0xff]
    %s1434 = scalar_lea.vmem %s9, 2
    %v1435 = vld [vmem:[%s1434] sm:$0x1]
    %s1436 = scalar_lea.vmem %s10, 64
    %v1437 = vld [vmem:[%s1436] sm:$0xff]
    %v1438 = vld [vmem:[%s1436 + $0x8] sm:$0xff]
    %v1439 = vld [vmem:[%s1436 + $0x10] sm:$0xff]
    %v1440 = vld [vmem:[%s1436 + $0x18] sm:$0xff]
    %s1441 = scalar_lea.vmem %s11, 2
    %v1442 = vld [vmem:[%s1441] sm:$0x1]
    %v1444 = vperm.slane %v1435, 0
    %v1447 = vsel %vm77, %v1427, 0
    %v1450 = vsel %vm77, %v1428, 0
    %1452 = vmatpush.msra.mxu0 0.0
    %1453 = vmatpush.msra.mxu0 0.0
    %1454 = vmatpush.msra.mxu0 0.0
    %1455 = vmatpush.msra.mxu0 0.0
    %1456 = vmatpush.msra.mxu0 0.0
    %1457 = vmatpush.msra.mxu0 0.0
    %1458 = vmatpush.msra.mxu0 0.0
    %1459 = vmatpush.msra.mxu0 0.0
    %1460 = vmatpush.msra.mxu0 0.0
    %1461 = vmatpush.msra.mxu0 0.0
    %1462 = vmatpush.msra.mxu0 0.0
    %1463 = vmatpush.msra.mxu0 0.0
    %1464 = vmatpush.msra.mxu0 %v1433
    %1465 = vmatpush.msra.mxu0 %v1432
    %1466 = vmatpush.msra.mxu0 %v1431
    %1467 = vmatpush.msra.mxu0 %v1430
    %1468 = vmatmul.f32.gmra.mxu0 %v1447
    %v1469 = vpop.f32.mrf.mxu0
    %v1470 = vadd.f32 %v1444, %v1469
    %1471 = vmatmul.f32.gmra.mxu0 %v1450
    %v1472 = vpop.f32.mrf.mxu0
    %v1473 = vadd.f32 %v1444, %v1472
    %1474 = vdwg.mxu0
    %1479 = vrot.lane.b32.xlu0 %v1430, 96
    %v1480 = vpop.permute.xlu0 %1479
    %1481 = vrot.lane.b32.xlu0 %v1431, 96
    %v1482 = vpop.permute.xlu0 %1481
    %1483 = vrot.lane.b32.xlu0 %v1432, 96
    %v1484 = vpop.permute.xlu0 %1483
    %1485 = vrot.lane.b32.xlu0 %v1433, 96
    %v1486 = vpop.permute.xlu0 %1485
    %1491 = vrot.lane.b32.xlu0 %v1444, 96
    %v1492 = vpop.permute.xlu0 %1491
    %v1495 = vsel %vm77, %v141, 0
    %v1498 = vsel %vm77, %v142, 0
    %v1501 = vsel %vm77, %v143, 0
    %v1504 = vsel %vm77, %v144, 0
    %1506 = vmatpush.msra.mxu0 0.0
    %1507 = vmatpush.msra.mxu0 0.0
    %1508 = vmatpush.msra.mxu0 0.0
    %1509 = vmatpush.msra.mxu0 0.0
    %1510 = vmatpush.msra.mxu0 0.0
    %1511 = vmatpush.msra.mxu0 0.0
    %1512 = vmatpush.msra.mxu0 0.0
    %1513 = vmatpush.msra.mxu0 0.0
    %1514 = vmatpush.msra.mxu0 0.0
    %1515 = vmatpush.msra.mxu0 0.0
    %1516 = vmatpush.msra.mxu0 0.0
    %1517 = vmatpush.msra.mxu0 0.0
    %1518 = vmatpush.msra.mxu0 %v1486
    %1519 = vmatpush.msra.mxu0 %v1484
    %1520 = vmatpush.msra.mxu0 %v1482
    %1521 = vmatpush.msra.mxu0 %v1480
    %1522 = vmatmul.f32.gmra.mxu0 %v1495
    %v1523 = vpop.f32.mrf.mxu0
    %v1524 = vadd.f32 %v1492, %v1523
    %1525 = vmatmul.f32.gmra.mxu0 %v1498
    %v1526 = vpop.f32.mrf.mxu0
    %v1527 = vadd.f32 %v1492, %v1526
    %1528 = vmatmul.f32.gmra.mxu0 %v1501
    %v1529 = vpop.f32.mrf.mxu0
    %v1530 = vadd.f32 %v1492, %v1529
    %1531 = vmatmul.f32.gmra.mxu0 %v1504
    %v1532 = vpop.f32.mrf.mxu0
    %v1533 = vadd.f32 %v1492, %v1532
    %1534 = vdwg.mxu0
    %v1536 = vsel %vm199, %v1470, 0
    %v1539 = vsel %vm199, %v1473, 0
    %v1542 = vsel %vm199, %v1524, 0
    %v1545 = vsel %vm199, %v1527, 0
    %v1548 = vsel %vm199, %v1530, 0
    %v1551 = vsel %vm199, %v1533, 0
    %1553 = vmatpush.xpose.msra.mxu0 0.0
    %1554 = vmatpush.xpose.msra.mxu0 0.0
    %1555 = vmatpush.xpose.msra.mxu0 0.0
    %1556 = vmatpush.xpose.msra.mxu0 0.0
    %1557 = vmatpush.xpose.msra.mxu0 0.0
    %1558 = vmatpush.xpose.msra.mxu0 0.0
    %1559 = vmatpush.xpose.msra.mxu0 0.0
    %1560 = vmatpush.xpose.msra.mxu0 0.0
    %1561 = vmatpush.xpose.msra.mxu0 0.0
    %1562 = vmatpush.xpose.msra.mxu0 0.0
    %1563 = vmatpush.xpose.msra.mxu0 0.0
    %1564 = vmatpush.xpose.msra.mxu0 0.0
    %1565 = vmatpush.xpose.msra.mxu0 %v1551
    %1566 = vmatpush.xpose.msra.mxu0 %v1548
    %1567 = vmatpush.xpose.msra.mxu0 %v1545
    %1568 = vmatpush.xpose.msra.mxu0 %v1542
    %1569 = vmatmul.f32.gmra.mxu0 %v1536
    %v1570 = vpop.f32.mrf.mxu0
    %v1571 = vadd.f32 %v149, %v1570
    %1572 = vmatmul.f32.gmra.mxu0 %v1539
    %v1573 = vpop.f32.mrf.mxu0
    %v1574 = vadd.f32 %v150, %v1573
    %1575 = vdwg.mxu0
    %v1576 = vsel %vm77, %v1571, -inf
    %1577 = vmax.xlane.f32.xlu0 %v1576
    %v1578 = vpop.xlane.xlu0 %1577
    %v1579 = vsel %vm77, %v1574, -inf
    %1580 = vmax.xlane.f32.xlu0 %v1579
    %v1581 = vpop.xlane.xlu0 %1580
    %v1582 = vsub.f32 %v1571, %v1578
    %v1583 = vsub.f32 %v1574, %v1581
    %v1584 = vmul.f32 %v1582, 1.442695
    %v1585 = vpow.pop %v1584
    %v1586 = vmul.f32 %v1583, 1.442695
    %v1587 = vpow.pop %v1586
    %v1588 = vsel %vm77, %v1585, 0.0
    %1589 = vadd.xlane.f32.xlu0 %v1588
    %v1590 = vpop.xlane.xlu0 %1589
    %v1591 = vsel %vm77, %v1587, 0.0
    %1592 = vadd.xlane.f32.xlu0 %v1591
    %v1593 = vpop.xlane.xlu0 %1592
    %v1594 = vrcp.pop %v1590
    %v1595 = vrcp.pop %v1593
    %1596 = vrot.lane.b32.xlu0 %v1524, 96
    %v1597 = vpop.permute.xlu0 %1596
    %1598 = vrot.lane.b32.xlu0 %v1527, 96
    %v1599 = vpop.permute.xlu0 %1598
    %1600 = vrot.lane.b32.xlu0 %v1530, 96
    %v1601 = vpop.permute.xlu0 %1600
    %1602 = vrot.lane.b32.xlu0 %v1533, 96
    %v1603 = vpop.permute.xlu0 %1602
    %v1609 = vsel %vm77, %v1585, 0
    %v1612 = vsel %vm77, %v1587, 0
    %1614 = vmatpush.msra.mxu0 0.0
    %1615 = vmatpush.msra.mxu0 0.0
    %1616 = vmatpush.msra.mxu0 0.0
    %1617 = vmatpush.msra.mxu0 0.0
    %1618 = vmatpush.msra.mxu0 0.0
    %1619 = vmatpush.msra.mxu0 0.0
    %1620 = vmatpush.msra.mxu0 0.0
    %1621 = vmatpush.msra.mxu0 0.0
    %1622 = vmatpush.msra.mxu0 0.0
    %1623 = vmatpush.msra.mxu0 0.0
    %1624 = vmatpush.msra.mxu0 0.0
    %1625 = vmatpush.msra.mxu0 0.0
    %1626 = vmatpush.msra.mxu0 %v1603
    %1627 = vmatpush.msra.mxu0 %v1601
    %1628 = vmatpush.msra.mxu0 %v1599
    %1629 = vmatpush.msra.mxu0 %v1597
    %1630 = vmatmul.f32.gmra.mxu0 %v1609
    %v1631 = vpop.f32.mrf.mxu0
    %v1632 = vadd.f32 0.0, %v1631
    %1633 = vmatmul.f32.gmra.mxu0 %v1612
    %v1634 = vpop.f32.mrf.mxu0
    %v1635 = vadd.f32 0.0, %v1634
    %1636 = vdwg.mxu0
    %v1637 = vmul.f32 %v1632, %v1594
    %v1638 = vmul.f32 %v1635, %v1595
    %1639 = vrot.lane.b32.xlu0 %v1470, 120
    %v1640 = vpop.permute.xlu0 %1639
    %1641 = vrot.lane.b32.xlu0 %v1473, 120
    %v1642 = vpop.permute.xlu0 %1641
    %1643 = vrot.lane.b32.xlu0 %v1524, 120
    %v1644 = vpop.permute.xlu0 %1643
    %1645 = vrot.lane.b32.xlu0 %v1527, 120
    %v1646 = vpop.permute.xlu0 %1645
    %1647 = vrot.lane.b32.xlu0 %v1530, 120
    %v1648 = vpop.permute.xlu0 %1647
    %1649 = vrot.lane.b32.xlu0 %v1533, 120
    %v1650 = vpop.permute.xlu0 %1649
    %v1651 = vsel %vm199, %v1640, 0
    %v1653 = vsel %vm199, %v1642, 0
    %v1655 = vsel %vm199, %v1644, 0
    %v1657 = vsel %vm199, %v1646, 0
    %v1659 = vsel %vm199, %v1648, 0
    %v1661 = vsel %vm199, %v1650, 0
    %1663 = vmatpush.xpose.msra.mxu0 0.0
    %1664 = vmatpush.xpose.msra.mxu0 0.0
    %1665 = vmatpush.xpose.msra.mxu0 0.0
    %1666 = vmatpush.xpose.msra.mxu0 0.0
    %1667 = vmatpush.xpose.msra.mxu0 0.0
    %1668 = vmatpush.xpose.msra.mxu0 0.0
    %1669 = vmatpush.xpose.msra.mxu0 0.0
    %1670 = vmatpush.xpose.msra.mxu0 0.0
    %1671 = vmatpush.xpose.msra.mxu0 0.0
    %1672 = vmatpush.xpose.msra.mxu0 0.0
    %1673 = vmatpush.xpose.msra.mxu0 0.0
    %1674 = vmatpush.xpose.msra.mxu0 0.0
    %1675 = vmatpush.xpose.msra.mxu0 %v1661
    %1676 = vmatpush.xpose.msra.mxu0 %v1659
    %1677 = vmatpush.xpose.msra.mxu0 %v1657
    %1678 = vmatpush.xpose.msra.mxu0 %v1655
    %1679 = vmatmul.f32.gmra.mxu0 %v1651
    %v1680 = vpop.f32.mrf.mxu0
    %v1681 = vadd.f32 %v149, %v1680
    %1682 = vmatmul.f32.gmra.mxu0 %v1653
    %v1683 = vpop.f32.mrf.mxu0
    %v1684 = vadd.f32 %v150, %v1683
    %1685 = vdwg.mxu0
    %v1686 = vsel %vm77, %v1681, -inf
    %1687 = vmax.xlane.f32.xlu0 %v1686
    %v1688 = vpop.xlane.xlu0 %1687
    %v1689 = vsel %vm77, %v1684, -inf
    %1690 = vmax.xlane.f32.xlu0 %v1689
    %v1691 = vpop.xlane.xlu0 %1690
    %v1692 = vsub.f32 %v1681, %v1688
    %v1693 = vsub.f32 %v1684, %v1691
    %v1694 = vmul.f32 %v1692, 1.442695
    %v1695 = vpow.pop %v1694
    %v1696 = vmul.f32 %v1693, 1.442695
    %v1697 = vpow.pop %v1696
    %v1698 = vsel %vm77, %v1695, 0.0
    %1699 = vadd.xlane.f32.xlu0 %v1698
    %v1700 = vpop.xlane.xlu0 %1699
    %v1701 = vsel %vm77, %v1697, 0.0
    %1702 = vadd.xlane.f32.xlu0 %v1701
    %v1703 = vpop.xlane.xlu0 %1702
    %v1704 = vrcp.pop %v1700
    %v1705 = vrcp.pop %v1703
    %1706 = vrot.lane.b32.xlu0 %v1524, 88
    %v1707 = vpop.permute.xlu0 %1706
    %1708 = vrot.lane.b32.xlu0 %v1527, 88
    %v1709 = vpop.permute.xlu0 %1708
    %1710 = vrot.lane.b32.xlu0 %v1530, 88
    %v1711 = vpop.permute.xlu0 %1710
    %1712 = vrot.lane.b32.xlu0 %v1533, 88
    %v1713 = vpop.permute.xlu0 %1712
    %v1719 = vsel %vm77, %v1695, 0
    %v1722 = vsel %vm77, %v1697, 0
    %1724 = vmatpush.msra.mxu0 0.0
    %1725 = vmatpush.msra.mxu0 0.0
    %1726 = vmatpush.msra.mxu0 0.0
    %1727 = vmatpush.msra.mxu0 0.0
    %1728 = vmatpush.msra.mxu0 0.0
    %1729 = vmatpush.msra.mxu0 0.0
    %1730 = vmatpush.msra.mxu0 0.0
    %1731 = vmatpush.msra.mxu0 0.0
    %1732 = vmatpush.msra.mxu0 0.0
    %1733 = vmatpush.msra.mxu0 0.0
    %1734 = vmatpush.msra.mxu0 0.0
    %1735 = vmatpush.msra.mxu0 0.0
    %1736 = vmatpush.msra.mxu0 %v1713
    %1737 = vmatpush.msra.mxu0 %v1711
    %1738 = vmatpush.msra.mxu0 %v1709
    %1739 = vmatpush.msra.mxu0 %v1707
    %1740 = vmatmul.f32.gmra.mxu0 %v1719
    %v1741 = vpop.f32.mrf.mxu0
    %v1742 = vadd.f32 0.0, %v1741
    %1743 = vmatmul.f32.gmra.mxu0 %v1722
    %v1744 = vpop.f32.mrf.mxu0
    %v1745 = vadd.f32 0.0, %v1744
    %1746 = vdwg.mxu0
    %v1747 = vmul.f32 %v1742, %v1704
    %v1748 = vmul.f32 %v1745, %v1705
    %v1750 = vsel %vm199, %v1747, 0
    %v1753 = vsel %vm199, %v1748, 0
    %1755 = vmatpush.msra.mxu0 0.0
    %1756 = vmatpush.msra.mxu0 0.0
    %1757 = vmatpush.msra.mxu0 0.0
    %1758 = vmatpush.msra.mxu0 0.0
    %1759 = vmatpush.msra.mxu0 0.0
    %1760 = vmatpush.msra.mxu0 0.0
    %1761 = vmatpush.msra.mxu0 0.0
    %1762 = vmatpush.msra.mxu0 0.0
    %1763 = vmatpush.msra.mxu0 0.0
    %1764 = vmatpush.msra.mxu0 0.0
    %1765 = vmatpush.msra.mxu0 0.0
    %1766 = vmatpush.msra.mxu0 0.0
    %1767 = vmatpush.msra.mxu0 0.0
    %1768 = vmatpush.msra.mxu0 0.0
    %1769 = vmatpush.msra.mxu0 0.0
    %1770 = vmatpush.msra.mxu0 %v1438
    %1771 = vmatmul.f32.gmra.mxu0 %v1750
    %v1772 = vpop.f32.mrf.mxu0
    %v1773 = vadd.f32 0.0, %v1772
    %1774 = vmatmul.f32.gmra.mxu0 %v1753
    %v1775 = vpop.f32.mrf.mxu0
    %v1776 = vadd.f32 0.0, %v1775
    %1777 = vdwg.mxu0
    %v1779 = vsel %vm199, %v1637, 0
    %v1782 = vsel %vm199, %v1638, 0
    %1784 = vmatpush.msra.mxu0 0.0
    %1785 = vmatpush.msra.mxu0 0.0
    %1786 = vmatpush.msra.mxu0 0.0
    %1787 = vmatpush.msra.mxu0 0.0
    %1788 = vmatpush.msra.mxu0 0.0
    %1789 = vmatpush.msra.mxu0 0.0
    %1790 = vmatpush.msra.mxu0 0.0
    %1791 = vmatpush.msra.mxu0 0.0
    %1792 = vmatpush.msra.mxu0 0.0
    %1793 = vmatpush.msra.mxu0 0.0
    %1794 = vmatpush.msra.mxu0 0.0
    %1795 = vmatpush.msra.mxu0 0.0
    %1796 = vmatpush.msra.mxu0 0.0
    %1797 = vmatpush.msra.mxu0 0.0
    %1798 = vmatpush.msra.mxu0 0.0
    %1799 = vmatpush.msra.mxu0 %v1437
    %1800 = vmatmul.f32.gmra.mxu0 %v1779
    %v1801 = vpop.f32.mrf.mxu0
    %v1802 = vadd.f32 %v1773, %v1801
    %1803 = vmatmul.f32.gmra.mxu0 %v1782
    %v1804 = vpop.f32.mrf.mxu0
    %v1805 = vadd.f32 %v1776, %v1804
    %1806 = vdwg.mxu0
    %1807 = vrot.lane.b32.xlu0 %v1470, 112
    %v1808 = vpop.permute.xlu0 %1807
    %1809 = vrot.lane.b32.xlu0 %v1473, 112
    %v1810 = vpop.permute.xlu0 %1809
    %1811 = vrot.lane.b32.xlu0 %v1524, 112
    %v1812 = vpop.permute.xlu0 %1811
    %1813 = vrot.lane.b32.xlu0 %v1527, 112
    %v1814 = vpop.permute.xlu0 %1813
    %1815 = vrot.lane.b32.xlu0 %v1530, 112
    %v1816 = vpop.permute.xlu0 %1815
    %1817 = vrot.lane.b32.xlu0 %v1533, 112
    %v1818 = vpop.permute.xlu0 %1817
    %v1819 = vsel %vm199, %v1808, 0
    %v1821 = vsel %vm199, %v1810, 0
    %v1823 = vsel %vm199, %v1812, 0
    %v1825 = vsel %vm199, %v1814, 0
    %v1827 = vsel %vm199, %v1816, 0
    %v1829 = vsel %vm199, %v1818, 0
    %1831 = vmatpush.xpose.msra.mxu0 0.0
    %1832 = vmatpush.xpose.msra.mxu0 0.0
    %1833 = vmatpush.xpose.msra.mxu0 0.0
    %1834 = vmatpush.xpose.msra.mxu0 0.0
    %1835 = vmatpush.xpose.msra.mxu0 0.0
    %1836 = vmatpush.xpose.msra.mxu0 0.0
    %1837 = vmatpush.xpose.msra.mxu0 0.0
    %1838 = vmatpush.xpose.msra.mxu0 0.0
    %1839 = vmatpush.xpose.msra.mxu0 0.0
    %1840 = vmatpush.xpose.msra.mxu0 0.0
    %1841 = vmatpush.xpose.msra.mxu0 0.0
    %1842 = vmatpush.xpose.msra.mxu0 0.0
    %1843 = vmatpush.xpose.msra.mxu0 %v1829
    %1844 = vmatpush.xpose.msra.mxu0 %v1827
    %1845 = vmatpush.xpose.msra.mxu0 %v1825
    %1846 = vmatpush.xpose.msra.mxu0 %v1823
    %1847 = vmatmul.f32.gmra.mxu0 %v1819
    %v1848 = vpop.f32.mrf.mxu0
    %v1849 = vadd.f32 %v149, %v1848
    %1850 = vmatmul.f32.gmra.mxu0 %v1821
    %v1851 = vpop.f32.mrf.mxu0
    %v1852 = vadd.f32 %v150, %v1851
    %1853 = vdwg.mxu0
    %v1854 = vsel %vm77, %v1849, -inf
    %1855 = vmax.xlane.f32.xlu0 %v1854
    %v1856 = vpop.xlane.xlu0 %1855
    %v1857 = vsel %vm77, %v1852, -inf
    %1858 = vmax.xlane.f32.xlu0 %v1857
    %v1859 = vpop.xlane.xlu0 %1858
    %v1860 = vsub.f32 %v1849, %v1856
    %v1861 = vsub.f32 %v1852, %v1859
    %v1862 = vmul.f32 %v1860, 1.442695
    %v1863 = vpow.pop %v1862
    %v1864 = vmul.f32 %v1861, 1.442695
    %v1865 = vpow.pop %v1864
    %v1866 = vsel %vm77, %v1863, 0.0
    %1867 = vadd.xlane.f32.xlu0 %v1866
    %v1868 = vpop.xlane.xlu0 %1867
    %v1869 = vsel %vm77, %v1865, 0.0
    %1870 = vadd.xlane.f32.xlu0 %v1869
    %v1871 = vpop.xlane.xlu0 %1870
    %v1872 = vrcp.pop %v1868
    %v1873 = vrcp.pop %v1871
    %1874 = vrot.lane.b32.xlu0 %v1524, 80
    %v1875 = vpop.permute.xlu0 %1874
    %1876 = vrot.lane.b32.xlu0 %v1527, 80
    %v1877 = vpop.permute.xlu0 %1876
    %1878 = vrot.lane.b32.xlu0 %v1530, 80
    %v1879 = vpop.permute.xlu0 %1878
    %1880 = vrot.lane.b32.xlu0 %v1533, 80
    %v1881 = vpop.permute.xlu0 %1880
    %v1887 = vsel %vm77, %v1863, 0
    %v1890 = vsel %vm77, %v1865, 0
    %1892 = vmatpush.msra.mxu0 0.0
    %1893 = vmatpush.msra.mxu0 0.0
    %1894 = vmatpush.msra.mxu0 0.0
    %1895 = vmatpush.msra.mxu0 0.0
    %1896 = vmatpush.msra.mxu0 0.0
    %1897 = vmatpush.msra.mxu0 0.0
    %1898 = vmatpush.msra.mxu0 0.0
    %1899 = vmatpush.msra.mxu0 0.0
    %1900 = vmatpush.msra.mxu0 0.0
    %1901 = vmatpush.msra.mxu0 0.0
    %1902 = vmatpush.msra.mxu0 0.0
    %1903 = vmatpush.msra.mxu0 0.0
    %1904 = vmatpush.msra.mxu0 %v1881
    %1905 = vmatpush.msra.mxu0 %v1879
    %1906 = vmatpush.msra.mxu0 %v1877
    %1907 = vmatpush.msra.mxu0 %v1875
    %1908 = vmatmul.f32.gmra.mxu0 %v1887
    %v1909 = vpop.f32.mrf.mxu0
    %v1910 = vadd.f32 0.0, %v1909
    %1911 = vmatmul.f32.gmra.mxu0 %v1890
    %v1912 = vpop.f32.mrf.mxu0
    %v1913 = vadd.f32 0.0, %v1912
    %1914 = vdwg.mxu0
    %v1915 = vmul.f32 %v1910, %v1872
    %v1916 = vmul.f32 %v1913, %v1873
    %v1918 = vsel %vm199, %v1915, 0
    %v1921 = vsel %vm199, %v1916, 0
    %1923 = vmatpush.msra.mxu0 0.0
    %1924 = vmatpush.msra.mxu0 0.0
    %1925 = vmatpush.msra.mxu0 0.0
    %1926 = vmatpush.msra.mxu0 0.0
    %1927 = vmatpush.msra.mxu0 0.0
    %1928 = vmatpush.msra.mxu0 0.0
    %1929 = vmatpush.msra.mxu0 0.0
    %1930 = vmatpush.msra.mxu0 0.0
    %1931 = vmatpush.msra.mxu0 0.0
    %1932 = vmatpush.msra.mxu0 0.0
    %1933 = vmatpush.msra.mxu0 0.0
    %1934 = vmatpush.msra.mxu0 0.0
    %1935 = vmatpush.msra.mxu0 0.0
    %1936 = vmatpush.msra.mxu0 0.0
    %1937 = vmatpush.msra.mxu0 0.0
    %1938 = vmatpush.msra.mxu0 %v1439
    %1939 = vmatmul.f32.gmra.mxu0 %v1918
    %v1940 = vpop.f32.mrf.mxu0
    %v1941 = vadd.f32 0.0, %v1940
    %1942 = vmatmul.f32.gmra.mxu0 %v1921
    %v1943 = vpop.f32.mrf.mxu0
    %v1944 = vadd.f32 0.0, %v1943
    %1945 = vdwg.mxu0
    %v1946 = vadd.f32 %v1802, %v1941
    %v1947 = vadd.f32 %v1805, %v1944
    %1948 = vrot.lane.b32.xlu0 %v1470, 104
    %v1949 = vpop.permute.xlu0 %1948
    %1950 = vrot.lane.b32.xlu0 %v1473, 104
    %v1951 = vpop.permute.xlu0 %1950
    %1952 = vrot.lane.b32.xlu0 %v1524, 104
    %v1953 = vpop.permute.xlu0 %1952
    %1954 = vrot.lane.b32.xlu0 %v1527, 104
    %v1955 = vpop.permute.xlu0 %1954
    %1956 = vrot.lane.b32.xlu0 %v1530, 104
    %v1957 = vpop.permute.xlu0 %1956
    %1958 = vrot.lane.b32.xlu0 %v1533, 104
    %v1959 = vpop.permute.xlu0 %1958
    %v1960 = vsel %vm199, %v1949, 0
    %v1962 = vsel %vm199, %v1951, 0
    %v1964 = vsel %vm199, %v1953, 0
    %v1966 = vsel %vm199, %v1955, 0
    %v1968 = vsel %vm199, %v1957, 0
    %v1970 = vsel %vm199, %v1959, 0
    %1972 = vmatpush.xpose.msra.mxu0 0.0
    %1973 = vmatpush.xpose.msra.mxu0 0.0
    %1974 = vmatpush.xpose.msra.mxu0 0.0
    %1975 = vmatpush.xpose.msra.mxu0 0.0
    %1976 = vmatpush.xpose.msra.mxu0 0.0
    %1977 = vmatpush.xpose.msra.mxu0 0.0
    %1978 = vmatpush.xpose.msra.mxu0 0.0
    %1979 = vmatpush.xpose.msra.mxu0 0.0
    %1980 = vmatpush.xpose.msra.mxu0 0.0
    %1981 = vmatpush.xpose.msra.mxu0 0.0
    %1982 = vmatpush.xpose.msra.mxu0 0.0
    %1983 = vmatpush.xpose.msra.mxu0 0.0
    %1984 = vmatpush.xpose.msra.mxu0 %v1970
    %1985 = vmatpush.xpose.msra.mxu0 %v1968
    %1986 = vmatpush.xpose.msra.mxu0 %v1966
    %1987 = vmatpush.xpose.msra.mxu0 %v1964
    %1988 = vmatmul.f32.gmra.mxu0 %v1960
    %v1989 = vpop.f32.mrf.mxu0
    %v1990 = vadd.f32 %v149, %v1989
    %1991 = vmatmul.f32.gmra.mxu0 %v1962
    %v1992 = vpop.f32.mrf.mxu0
    %v1993 = vadd.f32 %v150, %v1992
    %1994 = vdwg.mxu0
    %v1995 = vsel %vm77, %v1990, -inf
    %1996 = vmax.xlane.f32.xlu0 %v1995
    %v1997 = vpop.xlane.xlu0 %1996
    %v1998 = vsel %vm77, %v1993, -inf
    %1999 = vmax.xlane.f32.xlu0 %v1998
    %v2000 = vpop.xlane.xlu0 %1999
    %v2001 = vsub.f32 %v1990, %v1997
    %v2002 = vsub.f32 %v1993, %v2000
    %v2003 = vmul.f32 %v2001, 1.442695
    %v2004 = vpow.pop %v2003
    %v2005 = vmul.f32 %v2002, 1.442695
    %v2006 = vpow.pop %v2005
    %v2007 = vsel %vm77, %v2004, 0.0
    %2008 = vadd.xlane.f32.xlu0 %v2007
    %v2009 = vpop.xlane.xlu0 %2008
    %v2010 = vsel %vm77, %v2006, 0.0
    %2011 = vadd.xlane.f32.xlu0 %v2010
    %v2012 = vpop.xlane.xlu0 %2011
    %v2013 = vrcp.pop %v2009
    %v2014 = vrcp.pop %v2012
    %2015 = vrot.lane.b32.xlu0 %v1524, 72
    %v2016 = vpop.permute.xlu0 %2015
    %2017 = vrot.lane.b32.xlu0 %v1527, 72
    %v2018 = vpop.permute.xlu0 %2017
    %2019 = vrot.lane.b32.xlu0 %v1530, 72
    %v2020 = vpop.permute.xlu0 %2019
    %2021 = vrot.lane.b32.xlu0 %v1533, 72
    %v2022 = vpop.permute.xlu0 %2021
    %v2028 = vsel %vm77, %v2004, 0
    %v2031 = vsel %vm77, %v2006, 0
    %2033 = vmatpush.msra.mxu0 0.0
    %2034 = vmatpush.msra.mxu0 0.0
    %2035 = vmatpush.msra.mxu0 0.0
    %2036 = vmatpush.msra.mxu0 0.0
    %2037 = vmatpush.msra.mxu0 0.0
    %2038 = vmatpush.msra.mxu0 0.0
    %2039 = vmatpush.msra.mxu0 0.0
    %2040 = vmatpush.msra.mxu0 0.0
    %2041 = vmatpush.msra.mxu0 0.0
    %2042 = vmatpush.msra.mxu0 0.0
    %2043 = vmatpush.msra.mxu0 0.0
    %2044 = vmatpush.msra.mxu0 0.0
    %2045 = vmatpush.msra.mxu0 %v2022
    %2046 = vmatpush.msra.mxu0 %v2020
    %2047 = vmatpush.msra.mxu0 %v2018
    %2048 = vmatpush.msra.mxu0 %v2016
    %2049 = vmatmul.f32.gmra.mxu0 %v2028
    %v2050 = vpop.f32.mrf.mxu0
    %v2051 = vadd.f32 0.0, %v2050
    %2052 = vmatmul.f32.gmra.mxu0 %v2031
    %v2053 = vpop.f32.mrf.mxu0
    %v2054 = vadd.f32 0.0, %v2053
    %2055 = vdwg.mxu0
    %v2056 = vmul.f32 %v2051, %v2013
    %v2057 = vmul.f32 %v2054, %v2014
    %v2059 = vsel %vm199, %v2056, 0
    %v2062 = vsel %vm199, %v2057, 0
    %2064 = vmatpush.msra.mxu0 0.0
    %2065 = vmatpush.msra.mxu0 0.0
    %2066 = vmatpush.msra.mxu0 0.0
    %2067 = vmatpush.msra.mxu0 0.0
    %2068 = vmatpush.msra.mxu0 0.0
    %2069 = vmatpush.msra.mxu0 0.0
    %2070 = vmatpush.msra.mxu0 0.0
    %2071 = vmatpush.msra.mxu0 0.0
    %2072 = vmatpush.msra.mxu0 0.0
    %2073 = vmatpush.msra.mxu0 0.0
    %2074 = vmatpush.msra.mxu0 0.0
    %2075 = vmatpush.msra.mxu0 0.0
    %2076 = vmatpush.msra.mxu0 0.0
    %2077 = vmatpush.msra.mxu0 0.0
    %2078 = vmatpush.msra.mxu0 0.0
    %2079 = vmatpush.msra.mxu0 %v1440
    %2080 = vmatmul.f32.gmra.mxu0 %v2059
    %v2081 = vpop.f32.mrf.mxu0
    %v2082 = vadd.f32 0.0, %v2081
    %2083 = vmatmul.f32.gmra.mxu0 %v2062
    %v2084 = vpop.f32.mrf.mxu0
    %v2085 = vadd.f32 0.0, %v2084
    %2086 = vdwg.mxu0
    %v2087 = vadd.f32 %v1946, %v2082
    %v2088 = vadd.f32 %v1947, %v2085
    %v2090 = vperm.slane %v1442, 0
    %v2092 = vadd.f32 %v2087, %v2090
    %v2093 = vadd.f32 %v2088, %v2090
    %2094 = vst.msk [vmem:[%s25] sm:$0xff] %vm77, %v1524
    %2095 = vst.msk [vmem:[%s25 + $0x8] sm:$0xff] %vm77, %v1527
    %2096 = vst.msk [vmem:[%s25 + $0x10] sm:$0xff] %vm77, %v1530
    %2097 = vst.msk [vmem:[%s25 + $0x18] sm:$0xff] %vm77, %v1533
    %2098 = vst.msk [vmem:[%s26] sm:$0xff] %vm77, %v1597
    %2099 = vst.msk [vmem:[%s26 + $0x8] sm:$0xff] %vm77, %v1599
    %2100 = vst.msk [vmem:[%s26 + $0x10] sm:$0xff] %vm77, %v1601
    %2101 = vst.msk [vmem:[%s26 + $0x18] sm:$0xff] %vm77, %v1603
    %v2102 = vadd.f32 %v2092, %v1427
    %v2103 = vadd.f32 %v2093, %v1428
    %s2104 = scalar_lea.vmem %s12, 2
    %v2105 = vld [vmem:[%s2104] sm:$0x1]
    %s2106 = scalar_lea.vmem %s13, 2
    %v2107 = vld [vmem:[%s2106] sm:$0x1]
    %v2108 = vsel %vm77, %v2102, 0.0
    %2109 = vadd.xlane.f32.xlu0 %v2108
    %v2110 = vpop.xlane.xlu0 %2109
    %v2111 = vsel %vm77, %v2103, 0.0
    %2112 = vadd.xlane.f32.xlu0 %v2111
    %v2113 = vpop.xlane.xlu0 %2112
    %v2114 = vmul.f32 %v2110, %v90
    %v2115 = vmul.f32 %v2113, %v90
    %v2116 = vsub.f32 %v2102, %v2114
    %v2117 = vsub.f32 %v2103, %v2115
    %v2118 = vmul.f32 %v2116, %v2116
    %v2119 = vmul.f32 %v2117, %v2117
    %v2120 = vsel %vm77, %v2118, 0.0
    %2121 = vadd.xlane.f32.xlu0 %v2120
    %v2122 = vpop.xlane.xlu0 %2121
    %v2123 = vsel %vm77, %v2119, 0.0
    %2124 = vadd.xlane.f32.xlu0 %v2123
    %v2125 = vpop.xlane.xlu0 %2124
    %v2126 = vmul.f32 %v2122, %v90
    %v2127 = vmul.f32 %v2125, %v90
    %v2128 = vadd.f32 %v2126, 1e-05
    %v2129 = vadd.f32 %v2127, 1e-05
    %v2130 = vrsqrt.pop %v2128
    %v2131 = vmul.f32 %v2130, %v2128
    %v2132 = vmul.f32 %v2131, %v2130
    %v2133 = vmul.f32 0.5, %v2132
    %v2134 = vsub.f32 1.5, %v2133
    %v2135 = vmul.f32 %v2130, %v2134
    %vm2136 = vweird.f32 %v2128
    %vm2137 = vweird.f32 %v2130
    %vm2138 = vmor %vm2136, %vm2137
    %v2139 = vsel %vm2138, %v2130, %v2135
    %v2140 = vrsqrt.pop %v2129
    %v2141 = vmul.f32 %v2140, %v2129
    %v2142 = vmul.f32 %v2141, %v2140
    %v2143 = vmul.f32 0.5, %v2142
    %v2144 = vsub.f32 1.5, %v2143
    %v2145 = vmul.f32 %v2140, %v2144
    %vm2146 = vweird.f32 %v2129
    %vm2147 = vweird.f32 %v2140
    %vm2148 = vmor %vm2146, %vm2147
    %v2149 = vsel %vm2148, %v2140, %v2145
    %v2150 = vmul.f32 %v2116, %v2139
    %v2151 = vmul.f32 %v2117, %v2149
    %v2153 = vperm.slane %v2105, 0
    %v2155 = vmul.f32 %v2150, %v2153
    %v2156 = vmul.f32 %v2151, %v2153
    %v2158 = vperm.slane %v2107, 0
    %v2160 = vadd.f32 %v2155, %v2158
    %v2161 = vadd.f32 %v2156, %v2158
    %v2162 = vld [vmem:[%s14] sm:$0xff]
    %v2163 = vld [vmem:[%s14 + $0x8] sm:$0xff]
    %v2164 = vld [vmem:[%s14 + $0x10] sm:$0xff]
    %v2165 = vld [vmem:[%s14 + $0x18] sm:$0xff]
    %v2166 = vld [vmem:[%s15] sm:$0x1]
    %v2168 = vperm.slane %v2166, 0
    %v2171 = vsel %vm77, %v2160, 0
    %v2174 = vsel %vm77, %v2161, 0
    %2176 = vmatpush.msra.mxu0 0.0
    %2177 = vmatpush.msra.mxu0 0.0
    %2178 = vmatpush.msra.mxu0 0.0
    %2179 = vmatpush.msra.mxu0 0.0
    %2180 = vmatpush.msra.mxu0 0.0
    %2181 = vmatpush.msra.mxu0 0.0
    %2182 = vmatpush.msra.mxu0 0.0
    %2183 = vmatpush.msra.mxu0 0.0
    %2184 = vmatpush.msra.mxu0 0.0
    %2185 = vmatpush.msra.mxu0 0.0
    %2186 = vmatpush.msra.mxu0 0.0
    %2187 = vmatpush.msra.mxu0 0.0
    %2188 = vmatpush.msra.mxu0 %v2165
    %2189 = vmatpush.msra.mxu0 %v2164
    %2190 = vmatpush.msra.mxu0 %v2163
    %2191 = vmatpush.msra.mxu0 %v2162
    %2192 = vmatmul.f32.gmra.mxu0 %v2171
    %v2193 = vpop.f32.mrf.mxu0
    %v2194 = vadd.f32 %v2168, %v2193
    %2195 = vmatmul.f32.gmra.mxu0 %v2174
    %v2196 = vpop.f32.mrf.mxu0
    %v2197 = vadd.f32 %v2168, %v2196
    %2198 = vdwg.mxu0
    %v2199 = vmul.f32 %v2194, 0.5
    %v2200 = vmul.f32 %v2197, 0.5
    %v2201 = vmul.f32 %v2194, %v2194
    %v2202 = vmul.f32 %v2197, %v2197
    %v2203 = vmul.f32 %v2201, %v2194
    %v2204 = vmul.f32 %v2202, %v2197
    %v2205 = vmul.f32 %v2203, 0.044715
    %v2206 = vmul.f32 %v2204, 0.044715
    %v2207 = vadd.f32 %v2194, %v2205
    %v2208 = vadd.f32 %v2197, %v2206
    %v2209 = vmul.f32 %v2207, 0.7978846
    %v2210 = vmul.f32 %v2208, 0.7978846
    %v2211 = vtanh.pop %v2209
    %v2212 = vtanh.pop %v2210
    %v2213 = vadd.f32 %v2211, 1.0
    %v2214 = vadd.f32 %v2212, 1.0
    %v2215 = vmul.f32 %v2199, %v2213
    %v2216 = vmul.f32 %v2200, %v2214
    %v2217 = vld [vmem:[%s16] sm:$0xff]
    %v2218 = vld [vmem:[%s16 + $0x8] sm:$0xff]
    %v2219 = vld [vmem:[%s16 + $0x10] sm:$0xff]
    %v2220 = vld [vmem:[%s16 + $0x18] sm:$0xff]
    %v2221 = vld [vmem:[%s16 + $0x20] sm:$0xff]
    %v2222 = vld [vmem:[%s16 + $0x28] sm:$0xff]
    %v2223 = vld [vmem:[%s16 + $0x30] sm:$0xff]
    %v2224 = vld [vmem:[%s16 + $0x38] sm:$0xff]
    %v2225 = vld [vmem:[%s17] sm:$0x1]
    %v2227 = vperm.slane %v2225, 0
    %vm2229 = vcmask 523264
    %v2231 = vsel %vm2229, %v2215, 0
    %v2234 = vsel %vm2229, %v2216, 0
    %2236 = vmatpush.msra.mxu0 0.0
    %2237 = vmatpush.msra.mxu0 0.0
    %2238 = vmatpush.msra.mxu0 0.0
    %2239 = vmatpush.msra.mxu0 0.0
    %2240 = vmatpush.msra.mxu0 0.0
    %2241 = vmatpush.msra.mxu0 0.0
    %2242 = vmatpush.msra.mxu0 0.0
    %2243 = vmatpush.msra.mxu0 0.0
    %2244 = vmatpush.msra.mxu0 %v2224
    %2245 = vmatpush.msra.mxu0 %v2223
    %2246 = vmatpush.msra.mxu0 %v2222
    %2247 = vmatpush.msra.mxu0 %v2221
    %2248 = vmatpush.msra.mxu0 %v2220
    %2249 = vmatpush.msra.mxu0 %v2219
    %2250 = vmatpush.msra.mxu0 %v2218
    %2251 = vmatpush.msra.mxu0 %v2217
    %2252 = vmatmul.f32.gmra.mxu0 %v2231
    %v2253 = vpop.f32.mrf.mxu0
    %v2254 = vadd.f32 %v2227, %v2253
    %2255 = vmatmul.f32.gmra.mxu0 %v2234
    %v2256 = vpop.f32.mrf.mxu0
    %v2257 = vadd.f32 %v2227, %v2256
    %2258 = vdwg.mxu0
    %v2259 = vadd.f32 %v2254, %v2160
    %v2260 = vadd.f32 %v2257, %v2161
    %v2261 = vld [vmem:[%s18] sm:$0x1]
    %v2262 = vld [vmem:[%s19] sm:$0x1]
    %v2263 = vsel %vm77, %v2259, 0.0
    %2264 = vadd.xlane.f32.xlu0 %v2263
    %v2265 = vpop.xlane.xlu0 %2264
    %v2266 = vsel %vm77, %v2260, 0.0
    %2267 = vadd.xlane.f32.xlu0 %v2266
    %v2268 = vpop.xlane.xlu0 %2267
    %v2269 = vmul.f32 %v2265, %v90
    %v2270 = vmul.f32 %v2268, %v90
    %v2271 = vsub.f32 %v2259, %v2269
    %v2272 = vsub.f32 %v2260, %v2270
    %v2273 = vmul.f32 %v2271, %v2271
    %v2274 = vmul.f32 %v2272, %v2272
    %v2275 = vsel %vm77, %v2273, 0.0
    %2276 = vadd.xlane.f32.xlu0 %v2275
    %v2277 = vpop.xlane.xlu0 %2276
    %v2278 = vsel %vm77, %v2274, 0.0
    %2279 = vadd.xlane.f32.xlu0 %v2278
    %v2280 = vpop.xlane.xlu0 %2279
    %v2281 = vmul.f32 %v2277, %v90
    %v2282 = vmul.f32 %v2280, %v90
    %v2283 = vadd.f32 %v2281, 1e-05
    %v2284 = vadd.f32 %v2282, 1e-05
    %v2285 = vrsqrt.pop %v2283
    %v2286 = vmul.f32 %v2285, %v2283
    %v2287 = vmul.f32 %v2286, %v2285
    %v2288 = vmul.f32 0.5, %v2287
    %v2289 = vsub.f32 1.5, %v2288
    %v2290 = vmul.f32 %v2285, %v2289
    %vm2291 = vweird.f32 %v2283
    %vm2292 = vweird.f32 %v2285
    %vm2293 = vmor %vm2291, %vm2292
    %v2294 = vsel %vm2293, %v2285, %v2290
    %v2295 = vrsqrt.pop %v2284
    %v2296 = vmul.f32 %v2295, %v2284
    %v2297 = vmul.f32 %v2296, %v2295
    %v2298 = vmul.f32 0.5, %v2297
    %v2299 = vsub.f32 1.5, %v2298
    %v2300 = vmul.f32 %v2295, %v2299
    %vm2301 = vweird.f32 %v2284
    %vm2302 = vweird.f32 %v2295
    %vm2303 = vmor %vm2301, %vm2302
    %v2304 = vsel %vm2303, %v2295, %v2300
    %v2305 = vmul.f32 %v2271, %v2294
    %v2306 = vmul.f32 %v2272, %v2304
    %v2308 = vperm.slane %v2261, 0
    %v2310 = vmul.f32 %v2305, %v2308
    %v2311 = vmul.f32 %v2306, %v2308
    %v2313 = vperm.slane %v2262, 0
    %v2315 = vadd.f32 %v2310, %v2313
    %v2316 = vadd.f32 %v2311, %v2313
    %s2317 = scalar_lea.vmem %s8, 96
    %v2318 = vld [vmem:[%s2317] sm:$0xff]
    %v2319 = vld [vmem:[%s2317 + $0x8] sm:$0xff]
    %v2320 = vld [vmem:[%s2317 + $0x10] sm:$0xff]
    %v2321 = vld [vmem:[%s2317 + $0x18] sm:$0xff]
    %s2322 = scalar_lea.vmem %s9, 3
    %v2323 = vld [vmem:[%s2322] sm:$0x1]
    %s2324 = scalar_lea.vmem %s10, 96
    %v2325 = vld [vmem:[%s2324] sm:$0xff]
    %v2326 = vld [vmem:[%s2324 + $0x8] sm:$0xff]
    %v2327 = vld [vmem:[%s2324 + $0x10] sm:$0xff]
    %v2328 = vld [vmem:[%s2324 + $0x18] sm:$0xff]
    %s2329 = scalar_lea.vmem %s11, 3
    %v2330 = vld [vmem:[%s2329] sm:$0x1]
    %v2332 = vperm.slane %v2323, 0
    %v2335 = vsel %vm77, %v2315, 0
    %v2338 = vsel %vm77, %v2316, 0
    %2340 = vmatpush.msra.mxu0 0.0
    %2341 = vmatpush.msra.mxu0 0.0
    %2342 = vmatpush.msra.mxu0 0.0
    %2343 = vmatpush.msra.mxu0 0.0
    %2344 = vmatpush.msra.mxu0 0.0
    %2345 = vmatpush.msra.mxu0 0.0
    %2346 = vmatpush.msra.mxu0 0.0
    %2347 = vmatpush.msra.mxu0 0.0
    %2348 = vmatpush.msra.mxu0 0.0
    %2349 = vmatpush.msra.mxu0 0.0
    %2350 = vmatpush.msra.mxu0 0.0
    %2351 = vmatpush.msra.mxu0 0.0
    %2352 = vmatpush.msra.mxu0 %v2321
    %2353 = vmatpush.msra.mxu0 %v2320
    %2354 = vmatpush.msra.mxu0 %v2319
    %2355 = vmatpush.msra.mxu0 %v2318
    %2356 = vmatmul.f32.gmra.mxu0 %v2335
    %v2357 = vpop.f32.mrf.mxu0
    %v2358 = vadd.f32 %v2332, %v2357
    %2359 = vmatmul.f32.gmra.mxu0 %v2338
    %v2360 = vpop.f32.mrf.mxu0
    %v2361 = vadd.f32 %v2332, %v2360
    %2362 = vdwg.mxu0
    %2365 = vrot.lane.b32.xlu0 %v2358, 96
    %v2366 = vpop.permute.xlu0 %2365
    %2367 = vrot.lane.b32.xlu0 %v2361, 96
    %v2368 = vpop.permute.xlu0 %2367
    %v2369 = vsel %vm199, %v2358, 0
    %v2371 = vsel %vm199, %v2361, 0
    %v2373 = vsel %vm199, %v2366, 0
    %v2375 = vsel %vm199, %v2368, 0
    %2377 = vmatpush.xpose.msra.mxu0 0.0
    %2378 = vmatpush.xpose.msra.mxu0 0.0
    %2379 = vmatpush.xpose.msra.mxu0 0.0
    %2380 = vmatpush.xpose.msra.mxu0 0.0
    %2381 = vmatpush.xpose.msra.mxu0 0.0
    %2382 = vmatpush.xpose.msra.mxu0 0.0
    %2383 = vmatpush.xpose.msra.mxu0 0.0
    %2384 = vmatpush.xpose.msra.mxu0 0.0
    %2385 = vmatpush.xpose.msra.mxu0 0.0
    %2386 = vmatpush.xpose.msra.mxu0 0.0
    %2387 = vmatpush.xpose.msra.mxu0 0.0
    %2388 = vmatpush.xpose.msra.mxu0 0.0
    %2389 = vmatpush.xpose.msra.mxu0 0.0
    %2390 = vmatpush.xpose.msra.mxu0 0.0
    %2391 = vmatpush.xpose.msra.mxu0 %v2375
    %2392 = vmatpush.xpose.msra.mxu0 %v2373
    %2393 = vmatmul.f32.gmra.mxu0 %v2369
    %v2394 = vpop.f32.mrf.mxu0
    %v2395 = vadd.f32 %v145, %v2394
    %2396 = vmatmul.f32.gmra.mxu0 %v2371
    %v2397 = vpop.f32.mrf.mxu0
    %v2398 = vadd.f32 %v146, %v2397
    %2399 = vdwg.mxu0
    %v2400 = vsel %vm231, %v2395, -inf
    %2401 = vmax.xlane.f32.xlu0 %v2400
    %v2402 = vpop.xlane.xlu0 %2401
    %v2403 = vsel %vm231, %v2398, -inf
    %2404 = vmax.xlane.f32.xlu0 %v2403
    %v2405 = vpop.xlane.xlu0 %2404
    %v2406 = vsub.f32 %v2395, %v2402
    %v2407 = vsub.f32 %v2398, %v2405
    %v2408 = vmul.f32 %v2406, 1.442695
    %v2409 = vpow.pop %v2408
    %v2410 = vmul.f32 %v2407, 1.442695
    %v2411 = vpow.pop %v2410
    %v2412 = vsel %vm231, %v2409, 0.0
    %2413 = vadd.xlane.f32.xlu0 %v2412
    %v2414 = vpop.xlane.xlu0 %2413
    %v2415 = vsel %vm231, %v2411, 0.0
    %2416 = vadd.xlane.f32.xlu0 %v2415
    %v2417 = vpop.xlane.xlu0 %2416
    %v2418 = vrcp.pop %v2414
    %v2419 = vrcp.pop %v2417
    %2420 = vrot.lane.b32.xlu0 %v2358, 64
    %v2421 = vpop.permute.xlu0 %2420
    %2422 = vrot.lane.b32.xlu0 %v2361, 64
    %v2423 = vpop.permute.xlu0 %2422
    %v2427 = vsel %vm231, %v2409, 0
    %v2430 = vsel %vm231, %v2411, 0
    %2432 = vmatpush.msra.mxu0 0.0
    %2433 = vmatpush.msra.mxu0 0.0
    %2434 = vmatpush.msra.mxu0 0.0
    %2435 = vmatpush.msra.mxu0 0.0
    %2436 = vmatpush.msra.mxu0 0.0
    %2437 = vmatpush.msra.mxu0 0.0
    %2438 = vmatpush.msra.mxu0 0.0
    %2439 = vmatpush.msra.mxu0 0.0
    %2440 = vmatpush.msra.mxu0 0.0
    %2441 = vmatpush.msra.mxu0 0.0
    %2442 = vmatpush.msra.mxu0 0.0
    %2443 = vmatpush.msra.mxu0 0.0
    %2444 = vmatpush.msra.mxu0 0.0
    %2445 = vmatpush.msra.mxu0 0.0
    %2446 = vmatpush.msra.mxu0 %v2423
    %2447 = vmatpush.msra.mxu0 %v2421
    %2448 = vmatmul.f32.gmra.mxu0 %v2427
    %v2449 = vpop.f32.mrf.mxu0
    %v2450 = vadd.f32 0.0, %v2449
    %2451 = vmatmul.f32.gmra.mxu0 %v2430
    %v2452 = vpop.f32.mrf.mxu0
    %v2453 = vadd.f32 0.0, %v2452
    %2454 = vdwg.mxu0
    %v2455 = vmul.f32 %v2450, %v2418
    %v2456 = vmul.f32 %v2453, %v2419
    %2457 = vrot.lane.b32.xlu0 %v2358, 120
    %v2458 = vpop.permute.xlu0 %2457
    %2459 = vrot.lane.b32.xlu0 %v2361, 120
    %v2460 = vpop.permute.xlu0 %2459
    %2461 = vrot.lane.b32.xlu0 %v2358, 88
    %v2462 = vpop.permute.xlu0 %2461
    %2463 = vrot.lane.b32.xlu0 %v2361, 88
    %v2464 = vpop.permute.xlu0 %2463
    %v2465 = vsel %vm199, %v2458, 0
    %v2467 = vsel %vm199, %v2460, 0
    %v2469 = vsel %vm199, %v2462, 0
    %v2471 = vsel %vm199, %v2464, 0
    %2473 = vmatpush.xpose.msra.mxu0 0.0
    %2474 = vmatpush.xpose.msra.mxu0 0.0
    %2475 = vmatpush.xpose.msra.mxu0 0.0
    %2476 = vmatpush.xpose.msra.mxu0 0.0
    %2477 = vmatpush.xpose.msra.mxu0 0.0
    %2478 = vmatpush.xpose.msra.mxu0 0.0
    %2479 = vmatpush.xpose.msra.mxu0 0.0
    %2480 = vmatpush.xpose.msra.mxu0 0.0
    %2481 = vmatpush.xpose.msra.mxu0 0.0
    %2482 = vmatpush.xpose.msra.mxu0 0.0
    %2483 = vmatpush.xpose.msra.mxu0 0.0
    %2484 = vmatpush.xpose.msra.mxu0 0.0
    %2485 = vmatpush.xpose.msra.mxu0 0.0
    %2486 = vmatpush.xpose.msra.mxu0 0.0
    %2487 = vmatpush.xpose.msra.mxu0 %v2471
    %2488 = vmatpush.xpose.msra.mxu0 %v2469
    %2489 = vmatmul.f32.gmra.mxu0 %v2465
    %v2490 = vpop.f32.mrf.mxu0
    %v2491 = vadd.f32 %v145, %v2490
    %2492 = vmatmul.f32.gmra.mxu0 %v2467
    %v2493 = vpop.f32.mrf.mxu0
    %v2494 = vadd.f32 %v146, %v2493
    %2495 = vdwg.mxu0
    %v2496 = vsel %vm231, %v2491, -inf
    %2497 = vmax.xlane.f32.xlu0 %v2496
    %v2498 = vpop.xlane.xlu0 %2497
    %v2499 = vsel %vm231, %v2494, -inf
    %2500 = vmax.xlane.f32.xlu0 %v2499
    %v2501 = vpop.xlane.xlu0 %2500
    %v2502 = vsub.f32 %v2491, %v2498
    %v2503 = vsub.f32 %v2494, %v2501
    %v2504 = vmul.f32 %v2502, 1.442695
    %v2505 = vpow.pop %v2504
    %v2506 = vmul.f32 %v2503, 1.442695
    %v2507 = vpow.pop %v2506
    %v2508 = vsel %vm231, %v2505, 0.0
    %2509 = vadd.xlane.f32.xlu0 %v2508
    %v2510 = vpop.xlane.xlu0 %2509
    %v2511 = vsel %vm231, %v2507, 0.0
    %2512 = vadd.xlane.f32.xlu0 %v2511
    %v2513 = vpop.xlane.xlu0 %2512
    %v2514 = vrcp.pop %v2510
    %v2515 = vrcp.pop %v2513
    %2516 = vrot.lane.b32.xlu0 %v2358, 56
    %v2517 = vpop.permute.xlu0 %2516
    %2518 = vrot.lane.b32.xlu0 %v2361, 56
    %v2519 = vpop.permute.xlu0 %2518
    %v2523 = vsel %vm231, %v2505, 0
    %v2526 = vsel %vm231, %v2507, 0
    %2528 = vmatpush.msra.mxu0 0.0
    %2529 = vmatpush.msra.mxu0 0.0
    %2530 = vmatpush.msra.mxu0 0.0
    %2531 = vmatpush.msra.mxu0 0.0
    %2532 = vmatpush.msra.mxu0 0.0
    %2533 = vmatpush.msra.mxu0 0.0
    %2534 = vmatpush.msra.mxu0 0.0
    %2535 = vmatpush.msra.mxu0 0.0
    %2536 = vmatpush.msra.mxu0 0.0
    %2537 = vmatpush.msra.mxu0 0.0
    %2538 = vmatpush.msra.mxu0 0.0
    %2539 = vmatpush.msra.mxu0 0.0
    %2540 = vmatpush.msra.mxu0 0.0
    %2541 = vmatpush.msra.mxu0 0.0
    %2542 = vmatpush.msra.mxu0 %v2519
    %2543 = vmatpush.msra.mxu0 %v2517
    %2544 = vmatmul.f32.gmra.mxu0 %v2523
    %v2545 = vpop.f32.mrf.mxu0
    %v2546 = vadd.f32 0.0, %v2545
    %2547 = vmatmul.f32.gmra.mxu0 %v2526
    %v2548 = vpop.f32.mrf.mxu0
    %v2549 = vadd.f32 0.0, %v2548
    %2550 = vdwg.mxu0
    %v2551 = vmul.f32 %v2546, %v2514
    %v2552 = vmul.f32 %v2549, %v2515
    %v2554 = vsel %vm199, %v2551, 0
    %v2557 = vsel %vm199, %v2552, 0
    %2559 = vmatpush.msra.mxu0 0.0
    %2560 = vmatpush.msra.mxu0 0.0
    %2561 = vmatpush.msra.mxu0 0.0
    %2562 = vmatpush.msra.mxu0 0.0
    %2563 = vmatpush.msra.mxu0 0.0
    %2564 = vmatpush.msra.mxu0 0.0
    %2565 = vmatpush.msra.mxu0 0.0
    %2566 = vmatpush.msra.mxu0 0.0
    %2567 = vmatpush.msra.mxu0 0.0
    %2568 = vmatpush.msra.mxu0 0.0
    %2569 = vmatpush.msra.mxu0 0.0
    %2570 = vmatpush.msra.mxu0 0.0
    %2571 = vmatpush.msra.mxu0 0.0
    %2572 = vmatpush.msra.mxu0 0.0
    %2573 = vmatpush.msra.mxu0 0.0
    %2574 = vmatpush.msra.mxu0 %v2326
    %2575 = vmatmul.f32.gmra.mxu0 %v2554
    %v2576 = vpop.f32.mrf.mxu0
    %v2577 = vadd.f32 0.0, %v2576
    %2578 = vmatmul.f32.gmra.mxu0 %v2557
    %v2579 = vpop.f32.mrf.mxu0
    %v2580 = vadd.f32 0.0, %v2579
    %2581 = vdwg.mxu0
    %v2583 = vsel %vm199, %v2455, 0
    %v2586 = vsel %vm199, %v2456, 0
    %2588 = vmatpush.msra.mxu0 0.0
    %2589 = vmatpush.msra.mxu0 0.0
    %2590 = vmatpush.msra.mxu0 0.0
    %2591 = vmatpush.msra.mxu0 0.0
    %2592 = vmatpush.msra.mxu0 0.0
    %2593 = vmatpush.msra.mxu0 0.0
    %2594 = vmatpush.msra.mxu0 0.0
    %2595 = vmatpush.msra.mxu0 0.0
    %2596 = vmatpush.msra.mxu0 0.0
    %2597 = vmatpush.msra.mxu0 0.0
    %2598 = vmatpush.msra.mxu0 0.0
    %2599 = vmatpush.msra.mxu0 0.0
    %2600 = vmatpush.msra.mxu0 0.0
    %2601 = vmatpush.msra.mxu0 0.0
    %2602 = vmatpush.msra.mxu0 0.0
    %2603 = vmatpush.msra.mxu0 %v2325
    %2604 = vmatmul.f32.gmra.mxu0 %v2583
    %v2605 = vpop.f32.mrf.mxu0
    %v2606 = vadd.f32 %v2577, %v2605
    %2607 = vmatmul.f32.gmra.mxu0 %v2586
    %v2608 = vpop.f32.mrf.mxu0
    %v2609 = vadd.f32 %v2580, %v2608
    %2610 = vdwg.mxu0
    %2611 = vrot.lane.b32.xlu0 %v2358, 112
    %v2612 = vpop.permute.xlu0 %2611
    %2613 = vrot.lane.b32.xlu0 %v2361, 112
    %v2614 = vpop.permute.xlu0 %2613
    %2615 = vrot.lane.b32.xlu0 %v2358, 80
    %v2616 = vpop.permute.xlu0 %2615
    %2617 = vrot.lane.b32.xlu0 %v2361, 80
    %v2618 = vpop.permute.xlu0 %2617
    %v2619 = vsel %vm199, %v2612, 0
    %v2621 = vsel %vm199, %v2614, 0
    %v2623 = vsel %vm199, %v2616, 0
    %v2625 = vsel %vm199, %v2618, 0
    %2627 = vmatpush.xpose.msra.mxu0 0.0
    %2628 = vmatpush.xpose.msra.mxu0 0.0
    %2629 = vmatpush.xpose.msra.mxu0 0.0
    %2630 = vmatpush.xpose.msra.mxu0 0.0
    %2631 = vmatpush.xpose.msra.mxu0 0.0
    %2632 = vmatpush.xpose.msra.mxu0 0.0
    %2633 = vmatpush.xpose.msra.mxu0 0.0
    %2634 = vmatpush.xpose.msra.mxu0 0.0
    %2635 = vmatpush.xpose.msra.mxu0 0.0
    %2636 = vmatpush.xpose.msra.mxu0 0.0
    %2637 = vmatpush.xpose.msra.mxu0 0.0
    %2638 = vmatpush.xpose.msra.mxu0 0.0
    %2639 = vmatpush.xpose.msra.mxu0 0.0
    %2640 = vmatpush.xpose.msra.mxu0 0.0
    %2641 = vmatpush.xpose.msra.mxu0 %v2625
    %2642 = vmatpush.xpose.msra.mxu0 %v2623
    %2643 = vmatmul.f32.gmra.mxu0 %v2619
    %v2644 = vpop.f32.mrf.mxu0
    %v2645 = vadd.f32 %v145, %v2644
    %2646 = vmatmul.f32.gmra.mxu0 %v2621
    %v2647 = vpop.f32.mrf.mxu0
    %v2648 = vadd.f32 %v146, %v2647
    %2649 = vdwg.mxu0
    %v2650 = vsel %vm231, %v2645, -inf
    %2651 = vmax.xlane.f32.xlu0 %v2650
    %v2652 = vpop.xlane.xlu0 %2651
    %v2653 = vsel %vm231, %v2648, -inf
    %2654 = vmax.xlane.f32.xlu0 %v2653
    %v2655 = vpop.xlane.xlu0 %2654
    %v2656 = vsub.f32 %v2645, %v2652
    %v2657 = vsub.f32 %v2648, %v2655
    %v2658 = vmul.f32 %v2656, 1.442695
    %v2659 = vpow.pop %v2658
    %v2660 = vmul.f32 %v2657, 1.442695
    %v2661 = vpow.pop %v2660
    %v2662 = vsel %vm231, %v2659, 0.0
    %2663 = vadd.xlane.f32.xlu0 %v2662
    %v2664 = vpop.xlane.xlu0 %2663
    %v2665 = vsel %vm231, %v2661, 0.0
    %2666 = vadd.xlane.f32.xlu0 %v2665
    %v2667 = vpop.xlane.xlu0 %2666
    %v2668 = vrcp.pop %v2664
    %v2669 = vrcp.pop %v2667
    %2670 = vrot.lane.b32.xlu0 %v2358, 48
    %v2671 = vpop.permute.xlu0 %2670
    %2672 = vrot.lane.b32.xlu0 %v2361, 48
    %v2673 = vpop.permute.xlu0 %2672
    %v2677 = vsel %vm231, %v2659, 0
    %v2680 = vsel %vm231, %v2661, 0
    %2682 = vmatpush.msra.mxu0 0.0
    %2683 = vmatpush.msra.mxu0 0.0
    %2684 = vmatpush.msra.mxu0 0.0
    %2685 = vmatpush.msra.mxu0 0.0
    %2686 = vmatpush.msra.mxu0 0.0
    %2687 = vmatpush.msra.mxu0 0.0
    %2688 = vmatpush.msra.mxu0 0.0
    %2689 = vmatpush.msra.mxu0 0.0
    %2690 = vmatpush.msra.mxu0 0.0
    %2691 = vmatpush.msra.mxu0 0.0
    %2692 = vmatpush.msra.mxu0 0.0
    %2693 = vmatpush.msra.mxu0 0.0
    %2694 = vmatpush.msra.mxu0 0.0
    %2695 = vmatpush.msra.mxu0 0.0
    %2696 = vmatpush.msra.mxu0 %v2673
    %2697 = vmatpush.msra.mxu0 %v2671
    %2698 = vmatmul.f32.gmra.mxu0 %v2677
    %v2699 = vpop.f32.mrf.mxu0
    %v2700 = vadd.f32 0.0, %v2699
    %2701 = vmatmul.f32.gmra.mxu0 %v2680
    %v2702 = vpop.f32.mrf.mxu0
    %v2703 = vadd.f32 0.0, %v2702
    %2704 = vdwg.mxu0
    %v2705 = vmul.f32 %v2700, %v2668
    %v2706 = vmul.f32 %v2703, %v2669
    %v2708 = vsel %vm199, %v2705, 0
    %v2711 = vsel %vm199, %v2706, 0
    %2713 = vmatpush.msra.mxu0 0.0
    %2714 = vmatpush.msra.mxu0 0.0
    %2715 = vmatpush.msra.mxu0 0.0
    %2716 = vmatpush.msra.mxu0 0.0
    %2717 = vmatpush.msra.mxu0 0.0
    %2718 = vmatpush.msra.mxu0 0.0
    %2719 = vmatpush.msra.mxu0 0.0
    %2720 = vmatpush.msra.mxu0 0.0
    %2721 = vmatpush.msra.mxu0 0.0
    %2722 = vmatpush.msra.mxu0 0.0
    %2723 = vmatpush.msra.mxu0 0.0
    %2724 = vmatpush.msra.mxu0 0.0
    %2725 = vmatpush.msra.mxu0 0.0
    %2726 = vmatpush.msra.mxu0 0.0
    %2727 = vmatpush.msra.mxu0 0.0
    %2728 = vmatpush.msra.mxu0 %v2327
    %2729 = vmatmul.f32.gmra.mxu0 %v2708
    %v2730 = vpop.f32.mrf.mxu0
    %v2731 = vadd.f32 0.0, %v2730
    %2732 = vmatmul.f32.gmra.mxu0 %v2711
    %v2733 = vpop.f32.mrf.mxu0
    %v2734 = vadd.f32 0.0, %v2733
    %2735 = vdwg.mxu0
    %v2736 = vadd.f32 %v2606, %v2731
    %v2737 = vadd.f32 %v2609, %v2734
    %2738 = vrot.lane.b32.xlu0 %v2358, 104
    %v2739 = vpop.permute.xlu0 %2738
    %2740 = vrot.lane.b32.xlu0 %v2361, 104
    %v2741 = vpop.permute.xlu0 %2740
    %2742 = vrot.lane.b32.xlu0 %v2358, 72
    %v2743 = vpop.permute.xlu0 %2742
    %2744 = vrot.lane.b32.xlu0 %v2361, 72
    %v2745 = vpop.permute.xlu0 %2744
    %v2746 = vsel %vm199, %v2739, 0
    %v2748 = vsel %vm199, %v2741, 0
    %v2750 = vsel %vm199, %v2743, 0
    %v2752 = vsel %vm199, %v2745, 0
    %2754 = vmatpush.xpose.msra.mxu0 0.0
    %2755 = vmatpush.xpose.msra.mxu0 0.0
    %2756 = vmatpush.xpose.msra.mxu0 0.0
    %2757 = vmatpush.xpose.msra.mxu0 0.0
    %2758 = vmatpush.xpose.msra.mxu0 0.0
    %2759 = vmatpush.xpose.msra.mxu0 0.0
    %2760 = vmatpush.xpose.msra.mxu0 0.0
    %2761 = vmatpush.xpose.msra.mxu0 0.0
    %2762 = vmatpush.xpose.msra.mxu0 0.0
    %2763 = vmatpush.xpose.msra.mxu0 0.0
    %2764 = vmatpush.xpose.msra.mxu0 0.0
    %2765 = vmatpush.xpose.msra.mxu0 0.0
    %2766 = vmatpush.xpose.msra.mxu0 0.0
    %2767 = vmatpush.xpose.msra.mxu0 0.0
    %2768 = vmatpush.xpose.msra.mxu0 %v2752
    %2769 = vmatpush.xpose.msra.mxu0 %v2750
    %2770 = vmatmul.f32.gmra.mxu0 %v2746
    %v2771 = vpop.f32.mrf.mxu0
    %v2772 = vadd.f32 %v145, %v2771
    %2773 = vmatmul.f32.gmra.mxu0 %v2748
    %v2774 = vpop.f32.mrf.mxu0
    %v2775 = vadd.f32 %v146, %v2774
    %2776 = vdwg.mxu0
    %v2777 = vsel %vm231, %v2772, -inf
    %2778 = vmax.xlane.f32.xlu0 %v2777
    %v2779 = vpop.xlane.xlu0 %2778
    %v2780 = vsel %vm231, %v2775, -inf
    %2781 = vmax.xlane.f32.xlu0 %v2780
    %v2782 = vpop.xlane.xlu0 %2781
    %v2783 = vsub.f32 %v2772, %v2779
    %v2784 = vsub.f32 %v2775, %v2782
    %v2785 = vmul.f32 %v2783, 1.442695
    %v2786 = vpow.pop %v2785
    %v2787 = vmul.f32 %v2784, 1.442695
    %v2788 = vpow.pop %v2787
    %v2789 = vsel %vm231, %v2786, 0.0
    %2790 = vadd.xlane.f32.xlu0 %v2789
    %v2791 = vpop.xlane.xlu0 %2790
    %v2792 = vsel %vm231, %v2788, 0.0
    %2793 = vadd.xlane.f32.xlu0 %v2792
    %v2794 = vpop.xlane.xlu0 %2793
    %v2795 = vrcp.pop %v2791
    %v2796 = vrcp.pop %v2794
    %2797 = vrot.lane.b32.xlu0 %v2358, 40
    %v2798 = vpop.permute.xlu0 %2797
    %2799 = vrot.lane.b32.xlu0 %v2361, 40
    %v2800 = vpop.permute.xlu0 %2799
    %v2804 = vsel %vm231, %v2786, 0
    %v2807 = vsel %vm231, %v2788, 0
    %2809 = vmatpush.msra.mxu0 0.0
    %2810 = vmatpush.msra.mxu0 0.0
    %2811 = vmatpush.msra.mxu0 0.0
    %2812 = vmatpush.msra.mxu0 0.0
    %2813 = vmatpush.msra.mxu0 0.0
    %2814 = vmatpush.msra.mxu0 0.0
    %2815 = vmatpush.msra.mxu0 0.0
    %2816 = vmatpush.msra.mxu0 0.0
    %2817 = vmatpush.msra.mxu0 0.0
    %2818 = vmatpush.msra.mxu0 0.0
    %2819 = vmatpush.msra.mxu0 0.0
    %2820 = vmatpush.msra.mxu0 0.0
    %2821 = vmatpush.msra.mxu0 0.0
    %2822 = vmatpush.msra.mxu0 0.0
    %2823 = vmatpush.msra.mxu0 %v2800
    %2824 = vmatpush.msra.mxu0 %v2798
    %2825 = vmatmul.f32.gmra.mxu0 %v2804
    %v2826 = vpop.f32.mrf.mxu0
    %v2827 = vadd.f32 0.0, %v2826
    %2828 = vmatmul.f32.gmra.mxu0 %v2807
    %v2829 = vpop.f32.mrf.mxu0
    %v2830 = vadd.f32 0.0, %v2829
    %2831 = vdwg.mxu0
    %v2832 = vmul.f32 %v2827, %v2795
    %v2833 = vmul.f32 %v2830, %v2796
    %v2835 = vsel %vm199, %v2832, 0
    %v2838 = vsel %vm199, %v2833, 0
    %2840 = vmatpush.msra.mxu0 0.0
    %2841 = vmatpush.msra.mxu0 0.0
    %2842 = vmatpush.msra.mxu0 0.0
    %2843 = vmatpush.msra.mxu0 0.0
    %2844 = vmatpush.msra.mxu0 0.0
    %2845 = vmatpush.msra.mxu0 0.0
    %2846 = vmatpush.msra.mxu0 0.0
    %2847 = vmatpush.msra.mxu0 0.0
    %2848 = vmatpush.msra.mxu0 0.0
    %2849 = vmatpush.msra.mxu0 0.0
    %2850 = vmatpush.msra.mxu0 0.0
    %2851 = vmatpush.msra.mxu0 0.0
    %2852 = vmatpush.msra.mxu0 0.0
    %2853 = vmatpush.msra.mxu0 0.0
    %2854 = vmatpush.msra.mxu0 0.0
    %2855 = vmatpush.msra.mxu0 %v2328
    %2856 = vmatmul.f32.gmra.mxu0 %v2835
    %v2857 = vpop.f32.mrf.mxu0
    %v2858 = vadd.f32 0.0, %v2857
    %2859 = vmatmul.f32.gmra.mxu0 %v2838
    %v2860 = vpop.f32.mrf.mxu0
    %v2861 = vadd.f32 0.0, %v2860
    %2862 = vdwg.mxu0
    %v2863 = vadd.f32 %v2736, %v2858
    %v2864 = vadd.f32 %v2737, %v2861
    %v2866 = vperm.slane %v2330, 0
    %v2868 = vadd.f32 %v2863, %v2866
    %v2869 = vadd.f32 %v2864, %v2866
    %s2872 = scalar_lea.vmem %s21, 16
    %2873 = vst.msk [vmem:[%s2872] sm:$0xff] %vm77, %v2366
    %2874 = vst.msk [vmem:[%s2872 + $0x8] sm:$0xff] %vm77, %v2368
    %s2875 = scalar_lea.vmem %s22, 16
    %2876 = vst.msk [vmem:[%s2875] sm:$0xff] %vm77, %v2421
    %2877 = vst.msk [vmem:[%s2875 + $0x8] sm:$0xff] %vm77, %v2423
    %v2878 = vadd.f32 %v2868, %v2315
    %v2879 = vadd.f32 %v2869, %v2316
    %s2880 = scalar_lea.vmem %s12, 3
    %v2881 = vld [vmem:[%s2880] sm:$0x1]
    %s2882 = scalar_lea.vmem %s13, 3
    %v2883 = vld [vmem:[%s2882] sm:$0x1]
    %v2884 = vsel %vm77, %v2878, 0.0
    %2885 = vadd.xlane.f32.xlu0 %v2884
    %v2886 = vpop.xlane.xlu0 %2885
    %v2887 = vsel %vm77, %v2879, 0.0
    %2888 = vadd.xlane.f32.xlu0 %v2887
    %v2889 = vpop.xlane.xlu0 %2888
    %v2890 = vmul.f32 %v2886, %v90
    %v2891 = vmul.f32 %v2889, %v90
    %v2892 = vsub.f32 %v2878, %v2890
    %v2893 = vsub.f32 %v2879, %v2891
    %v2894 = vmul.f32 %v2892, %v2892
    %v2895 = vmul.f32 %v2893, %v2893
    %v2896 = vsel %vm77, %v2894, 0.0
    %2897 = vadd.xlane.f32.xlu0 %v2896
    %v2898 = vpop.xlane.xlu0 %2897
    %v2899 = vsel %vm77, %v2895, 0.0
    %2900 = vadd.xlane.f32.xlu0 %v2899
    %v2901 = vpop.xlane.xlu0 %2900
    %v2902 = vmul.f32 %v2898, %v90
    %v2903 = vmul.f32 %v2901, %v90
    %v2904 = vadd.f32 %v2902, 1e-05
    %v2905 = vadd.f32 %v2903, 1e-05
    %v2906 = vrsqrt.pop %v2904
    %v2907 = vmul.f32 %v2906, %v2904
    %v2908 = vmul.f32 %v2907, %v2906
    %v2909 = vmul.f32 0.5, %v2908
    %v2910 = vsub.f32 1.5, %v2909
    %v2911 = vmul.f32 %v2906, %v2910
    %vm2912 = vweird.f32 %v2904
    %vm2913 = vweird.f32 %v2906
    %vm2914 = vmor %vm2912, %vm2913
    %v2915 = vsel %vm2914, %v2906, %v2911
    %v2916 = vrsqrt.pop %v2905
    %v2917 = vmul.f32 %v2916, %v2905
    %v2918 = vmul.f32 %v2917, %v2916
    %v2919 = vmul.f32 0.5, %v2918
    %v2920 = vsub.f32 1.5, %v2919
    %v2921 = vmul.f32 %v2916, %v2920
    %vm2922 = vweird.f32 %v2905
    %vm2923 = vweird.f32 %v2916
    %vm2924 = vmor %vm2922, %vm2923
    %v2925 = vsel %vm2924, %v2916, %v2921
    %v2926 = vmul.f32 %v2892, %v2915
    %v2927 = vmul.f32 %v2893, %v2925
    %v2929 = vperm.slane %v2881, 0
    %v2931 = vmul.f32 %v2926, %v2929
    %v2932 = vmul.f32 %v2927, %v2929
    %v2934 = vperm.slane %v2883, 0
    %v2936 = vadd.f32 %v2931, %v2934
    %v2937 = vadd.f32 %v2932, %v2934
    %s2938 = scalar_lea.vmem %s8, 128
    %v2939 = vld [vmem:[%s2938] sm:$0xff]
    %v2940 = vld [vmem:[%s2938 + $0x8] sm:$0xff]
    %v2941 = vld [vmem:[%s2938 + $0x10] sm:$0xff]
    %v2942 = vld [vmem:[%s2938 + $0x18] sm:$0xff]
    %s2943 = scalar_lea.vmem %s9, 4
    %v2944 = vld [vmem:[%s2943] sm:$0x1]
    %s2945 = scalar_lea.vmem %s10, 128
    %v2946 = vld [vmem:[%s2945] sm:$0xff]
    %v2947 = vld [vmem:[%s2945 + $0x8] sm:$0xff]
    %v2948 = vld [vmem:[%s2945 + $0x10] sm:$0xff]
    %v2949 = vld [vmem:[%s2945 + $0x18] sm:$0xff]
    %s2950 = scalar_lea.vmem %s11, 4
    %v2951 = vld [vmem:[%s2950] sm:$0x1]
    %v2953 = vperm.slane %v2944, 0
    %v2956 = vsel %vm77, %v2936, 0
    %v2959 = vsel %vm77, %v2937, 0
    %2961 = vmatpush.msra.mxu0 0.0
    %2962 = vmatpush.msra.mxu0 0.0
    %2963 = vmatpush.msra.mxu0 0.0
    %2964 = vmatpush.msra.mxu0 0.0
    %2965 = vmatpush.msra.mxu0 0.0
    %2966 = vmatpush.msra.mxu0 0.0
    %2967 = vmatpush.msra.mxu0 0.0
    %2968 = vmatpush.msra.mxu0 0.0
    %2969 = vmatpush.msra.mxu0 0.0
    %2970 = vmatpush.msra.mxu0 0.0
    %2971 = vmatpush.msra.mxu0 0.0
    %2972 = vmatpush.msra.mxu0 0.0
    %2973 = vmatpush.msra.mxu0 %v2942
    %2974 = vmatpush.msra.mxu0 %v2941
    %2975 = vmatpush.msra.mxu0 %v2940
    %2976 = vmatpush.msra.mxu0 %v2939
    %2977 = vmatmul.f32.gmra.mxu0 %v2956
    %v2978 = vpop.f32.mrf.mxu0
    %v2979 = vadd.f32 %v2953, %v2978
    %2980 = vmatmul.f32.gmra.mxu0 %v2959
    %v2981 = vpop.f32.mrf.mxu0
    %v2982 = vadd.f32 %v2953, %v2981
    %2983 = vdwg.mxu0
    %2988 = vrot.lane.b32.xlu0 %v2939, 96
    %v2989 = vpop.permute.xlu0 %2988
    %2990 = vrot.lane.b32.xlu0 %v2940, 96
    %v2991 = vpop.permute.xlu0 %2990
    %2992 = vrot.lane.b32.xlu0 %v2941, 96
    %v2993 = vpop.permute.xlu0 %2992
    %2994 = vrot.lane.b32.xlu0 %v2942, 96
    %v2995 = vpop.permute.xlu0 %2994
    %3000 = vrot.lane.b32.xlu0 %v2953, 96
    %v3001 = vpop.permute.xlu0 %3000
    %3003 = vmatpush.msra.mxu0 0.0
    %3004 = vmatpush.msra.mxu0 0.0
    %3005 = vmatpush.msra.mxu0 0.0
    %3006 = vmatpush.msra.mxu0 0.0
    %3007 = vmatpush.msra.mxu0 0.0
    %3008 = vmatpush.msra.mxu0 0.0
    %3009 = vmatpush.msra.mxu0 0.0
    %3010 = vmatpush.msra.mxu0 0.0
    %3011 = vmatpush.msra.mxu0 0.0
    %3012 = vmatpush.msra.mxu0 0.0
    %3013 = vmatpush.msra.mxu0 0.0
    %3014 = vmatpush.msra.mxu0 0.0
    %3015 = vmatpush.msra.mxu0 %v2995
    %3016 = vmatpush.msra.mxu0 %v2993
    %3017 = vmatpush.msra.mxu0 %v2991
    %3018 = vmatpush.msra.mxu0 %v2989
    %3019 = vmatmul.f32.gmra.mxu0 %v832
    %v3020 = vpop.f32.mrf.mxu0
    %v3021 = vadd.f32 %v3001, %v3020
    %3022 = vmatmul.f32.gmra.mxu0 %v835
    %v3023 = vpop.f32.mrf.mxu0
    %v3024 = vadd.f32 %v3001, %v3023
    %3025 = vdwg.mxu0
    %v3027 = vsel %vm199, %v2979, 0
    %v3030 = vsel %vm199, %v2982, 0
    %v3033 = vsel %vm199, %v3021, 0
    %v3036 = vsel %vm199, %v3024, 0
    %3038 = vmatpush.xpose.msra.mxu0 0.0
    %3039 = vmatpush.xpose.msra.mxu0 0.0
    %3040 = vmatpush.xpose.msra.mxu0 0.0
    %3041 = vmatpush.xpose.msra.mxu0 0.0
    %3042 = vmatpush.xpose.msra.mxu0 0.0
    %3043 = vmatpush.xpose.msra.mxu0 0.0
    %3044 = vmatpush.xpose.msra.mxu0 0.0
    %3045 = vmatpush.xpose.msra.mxu0 0.0
    %3046 = vmatpush.xpose.msra.mxu0 0.0
    %3047 = vmatpush.xpose.msra.mxu0 0.0
    %3048 = vmatpush.xpose.msra.mxu0 0.0
    %3049 = vmatpush.xpose.msra.mxu0 0.0
    %3050 = vmatpush.xpose.msra.mxu0 0.0
    %3051 = vmatpush.xpose.msra.mxu0 0.0
    %3052 = vmatpush.xpose.msra.mxu0 %v3036
    %3053 = vmatpush.xpose.msra.mxu0 %v3033
    %3054 = vmatmul.f32.gmra.mxu0 %v3027
    %v3055 = vpop.f32.mrf.mxu0
    %v3056 = vadd.f32 %v147, %v3055
    %3057 = vmatmul.f32.gmra.mxu0 %v3030
    %v3058 = vpop.f32.mrf.mxu0
    %v3059 = vadd.f32 %v148, %v3058
    %3060 = vdwg.mxu0
    %v3061 = vsel %vm231, %v3056, -inf
    %3062 = vmax.xlane.f32.xlu0 %v3061
    %v3063 = vpop.xlane.xlu0 %3062
    %v3064 = vsel %vm231, %v3059, -inf
    %3065 = vmax.xlane.f32.xlu0 %v3064
    %v3066 = vpop.xlane.xlu0 %3065
    %v3067 = vsub.f32 %v3056, %v3063
    %v3068 = vsub.f32 %v3059, %v3066
    %v3069 = vmul.f32 %v3067, 1.442695
    %v3070 = vpow.pop %v3069
    %v3071 = vmul.f32 %v3068, 1.442695
    %v3072 = vpow.pop %v3071
    %v3073 = vsel %vm231, %v3070, 0.0
    %3074 = vadd.xlane.f32.xlu0 %v3073
    %v3075 = vpop.xlane.xlu0 %3074
    %v3076 = vsel %vm231, %v3072, 0.0
    %3077 = vadd.xlane.f32.xlu0 %v3076
    %v3078 = vpop.xlane.xlu0 %3077
    %v3079 = vrcp.pop %v3075
    %v3080 = vrcp.pop %v3078
    %3081 = vrot.lane.b32.xlu0 %v3021, 96
    %v3082 = vpop.permute.xlu0 %3081
    %3083 = vrot.lane.b32.xlu0 %v3024, 96
    %v3084 = vpop.permute.xlu0 %3083
    %v3088 = vsel %vm231, %v3070, 0
    %v3091 = vsel %vm231, %v3072, 0
    %3093 = vmatpush.msra.mxu0 0.0
    %3094 = vmatpush.msra.mxu0 0.0
    %3095 = vmatpush.msra.mxu0 0.0
    %3096 = vmatpush.msra.mxu0 0.0
    %3097 = vmatpush.msra.mxu0 0.0
    %3098 = vmatpush.msra.mxu0 0.0
    %3099 = vmatpush.msra.mxu0 0.0
    %3100 = vmatpush.msra.mxu0 0.0
    %3101 = vmatpush.msra.mxu0 0.0
    %3102 = vmatpush.msra.mxu0 0.0
    %3103 = vmatpush.msra.mxu0 0.0
    %3104 = vmatpush.msra.mxu0 0.0
    %3105 = vmatpush.msra.mxu0 0.0
    %3106 = vmatpush.msra.mxu0 0.0
    %3107 = vmatpush.msra.mxu0 %v3084
    %3108 = vmatpush.msra.mxu0 %v3082
    %3109 = vmatmul.f32.gmra.mxu0 %v3088
    %v3110 = vpop.f32.mrf.mxu0
    %v3111 = vadd.f32 0.0, %v3110
    %3112 = vmatmul.f32.gmra.mxu0 %v3091
    %v3113 = vpop.f32.mrf.mxu0
    %v3114 = vadd.f32 0.0, %v3113
    %3115 = vdwg.mxu0
    %v3116 = vmul.f32 %v3111, %v3079
    %v3117 = vmul.f32 %v3114, %v3080
    %3118 = vrot.lane.b32.xlu0 %v2979, 120
    %v3119 = vpop.permute.xlu0 %3118
    %3120 = vrot.lane.b32.xlu0 %v2982, 120
    %v3121 = vpop.permute.xlu0 %3120
    %3122 = vrot.lane.b32.xlu0 %v3021, 120
    %v3123 = vpop.permute.xlu0 %3122
    %3124 = vrot.lane.b32.xlu0 %v3024, 120
    %v3125 = vpop.permute.xlu0 %3124
    %v3126 = vsel %vm199, %v3119, 0
    %v3128 = vsel %vm199, %v3121, 0
    %v3130 = vsel %vm199, %v3123, 0
    %v3132 = vsel %vm199, %v3125, 0
    %3134 = vmatpush.xpose.msra.mxu0 0.0
    %3135 = vmatpush.xpose.msra.mxu0 0.0
    %3136 = vmatpush.xpose.msra.mxu0 0.0
    %3137 = vmatpush.xpose.msra.mxu0 0.0
    %3138 = vmatpush.xpose.msra.mxu0 0.0
    %3139 = vmatpush.xpose.msra.mxu0 0.0
    %3140 = vmatpush.xpose.msra.mxu0 0.0
    %3141 = vmatpush.xpose.msra.mxu0 0.0
    %3142 = vmatpush.xpose.msra.mxu0 0.0
    %3143 = vmatpush.xpose.msra.mxu0 0.0
    %3144 = vmatpush.xpose.msra.mxu0 0.0
    %3145 = vmatpush.xpose.msra.mxu0 0.0
    %3146 = vmatpush.xpose.msra.mxu0 0.0
    %3147 = vmatpush.xpose.msra.mxu0 0.0
    %3148 = vmatpush.xpose.msra.mxu0 %v3132
    %3149 = vmatpush.xpose.msra.mxu0 %v3130
    %3150 = vmatmul.f32.gmra.mxu0 %v3126
    %v3151 = vpop.f32.mrf.mxu0
    %v3152 = vadd.f32 %v147, %v3151
    %3153 = vmatmul.f32.gmra.mxu0 %v3128
    %v3154 = vpop.f32.mrf.mxu0
    %v3155 = vadd.f32 %v148, %v3154
    %3156 = vdwg.mxu0
    %v3157 = vsel %vm231, %v3152, -inf
    %3158 = vmax.xlane.f32.xlu0 %v3157
    %v3159 = vpop.xlane.xlu0 %3158
    %v3160 = vsel %vm231, %v3155, -inf
    %3161 = vmax.xlane.f32.xlu0 %v3160
    %v3162 = vpop.xlane.xlu0 %3161
    %v3163 = vsub.f32 %v3152, %v3159
    %v3164 = vsub.f32 %v3155, %v3162
    %v3165 = vmul.f32 %v3163, 1.442695
    %v3166 = vpow.pop %v3165
    %v3167 = vmul.f32 %v3164, 1.442695
    %v3168 = vpow.pop %v3167
    %v3169 = vsel %vm231, %v3166, 0.0
    %3170 = vadd.xlane.f32.xlu0 %v3169
    %v3171 = vpop.xlane.xlu0 %3170
    %v3172 = vsel %vm231, %v3168, 0.0
    %3173 = vadd.xlane.f32.xlu0 %v3172
    %v3174 = vpop.xlane.xlu0 %3173
    %v3175 = vrcp.pop %v3171
    %v3176 = vrcp.pop %v3174
    %3177 = vrot.lane.b32.xlu0 %v3021, 88
    %v3178 = vpop.permute.xlu0 %3177
    %3179 = vrot.lane.b32.xlu0 %v3024, 88
    %v3180 = vpop.permute.xlu0 %3179
    %v3184 = vsel %vm231, %v3166, 0
    %v3187 = vsel %vm231, %v3168, 0
    %3189 = vmatpush.msra.mxu0 0.0
    %3190 = vmatpush.msra.mxu0 0.0
    %3191 = vmatpush.msra.mxu0 0.0
    %3192 = vmatpush.msra.mxu0 0.0
    %3193 = vmatpush.msra.mxu0 0.0
    %3194 = vmatpush.msra.mxu0 0.0
    %3195 = vmatpush.msra.mxu0 0.0
    %3196 = vmatpush.msra.mxu0 0.0
    %3197 = vmatpush.msra.mxu0 0.0
    %3198 = vmatpush.msra.mxu0 0.0
    %3199 = vmatpush.msra.mxu0 0.0
    %3200 = vmatpush.msra.mxu0 0.0
    %3201 = vmatpush.msra.mxu0 0.0
    %3202 = vmatpush.msra.mxu0 0.0
    %3203 = vmatpush.msra.mxu0 %v3180
    %3204 = vmatpush.msra.mxu0 %v3178
    %3205 = vmatmul.f32.gmra.mxu0 %v3184
    %v3206 = vpop.f32.mrf.mxu0
    %v3207 = vadd.f32 0.0, %v3206
    %3208 = vmatmul.f32.gmra.mxu0 %v3187
    %v3209 = vpop.f32.mrf.mxu0
    %v3210 = vadd.f32 0.0, %v3209
    %3211 = vdwg.mxu0
    %v3212 = vmul.f32 %v3207, %v3175
    %v3213 = vmul.f32 %v3210, %v3176
    %v3215 = vsel %vm199, %v3212, 0
    %v3218 = vsel %vm199, %v3213, 0
    %3220 = vmatpush.msra.mxu0 0.0
    %3221 = vmatpush.msra.mxu0 0.0
    %3222 = vmatpush.msra.mxu0 0.0
    %3223 = vmatpush.msra.mxu0 0.0
    %3224 = vmatpush.msra.mxu0 0.0
    %3225 = vmatpush.msra.mxu0 0.0
    %3226 = vmatpush.msra.mxu0 0.0
    %3227 = vmatpush.msra.mxu0 0.0
    %3228 = vmatpush.msra.mxu0 0.0
    %3229 = vmatpush.msra.mxu0 0.0
    %3230 = vmatpush.msra.mxu0 0.0
    %3231 = vmatpush.msra.mxu0 0.0
    %3232 = vmatpush.msra.mxu0 0.0
    %3233 = vmatpush.msra.mxu0 0.0
    %3234 = vmatpush.msra.mxu0 0.0
    %3235 = vmatpush.msra.mxu0 %v2947
    %3236 = vmatmul.f32.gmra.mxu0 %v3215
    %v3237 = vpop.f32.mrf.mxu0
    %v3238 = vadd.f32 0.0, %v3237
    %3239 = vmatmul.f32.gmra.mxu0 %v3218
    %v3240 = vpop.f32.mrf.mxu0
    %v3241 = vadd.f32 0.0, %v3240
    %3242 = vdwg.mxu0
    %v3244 = vsel %vm199, %v3116, 0
    %v3247 = vsel %vm199, %v3117, 0
    %3249 = vmatpush.msra.mxu0 0.0
    %3250 = vmatpush.msra.mxu0 0.0
    %3251 = vmatpush.msra.mxu0 0.0
    %3252 = vmatpush.msra.mxu0 0.0
    %3253 = vmatpush.msra.mxu0 0.0
    %3254 = vmatpush.msra.mxu0 0.0
    %3255 = vmatpush.msra.mxu0 0.0
    %3256 = vmatpush.msra.mxu0 0.0
    %3257 = vmatpush.msra.mxu0 0.0
    %3258 = vmatpush.msra.mxu0 0.0
    %3259 = vmatpush.msra.mxu0 0.0
    %3260 = vmatpush.msra.mxu0 0.0
    %3261 = vmatpush.msra.mxu0 0.0
    %3262 = vmatpush.msra.mxu0 0.0
    %3263 = vmatpush.msra.mxu0 0.0
    %3264 = vmatpush.msra.mxu0 %v2946
    %3265 = vmatmul.f32.gmra.mxu0 %v3244
    %v3266 = vpop.f32.mrf.mxu0
    %v3267 = vadd.f32 %v3238, %v3266
    %3268 = vmatmul.f32.gmra.mxu0 %v3247
    %v3269 = vpop.f32.mrf.mxu0
    %v3270 = vadd.f32 %v3241, %v3269
    %3271 = vdwg.mxu0
    %3272 = vrot.lane.b32.xlu0 %v2979, 112
    %v3273 = vpop.permute.xlu0 %3272
    %3274 = vrot.lane.b32.xlu0 %v2982, 112
    %v3275 = vpop.permute.xlu0 %3274
    %3276 = vrot.lane.b32.xlu0 %v3021, 112
    %v3277 = vpop.permute.xlu0 %3276
    %3278 = vrot.lane.b32.xlu0 %v3024, 112
    %v3279 = vpop.permute.xlu0 %3278
    %v3280 = vsel %vm199, %v3273, 0
    %v3282 = vsel %vm199, %v3275, 0
    %v3284 = vsel %vm199, %v3277, 0
    %v3286 = vsel %vm199, %v3279, 0
    %3288 = vmatpush.xpose.msra.mxu0 0.0
    %3289 = vmatpush.xpose.msra.mxu0 0.0
    %3290 = vmatpush.xpose.msra.mxu0 0.0
    %3291 = vmatpush.xpose.msra.mxu0 0.0
    %3292 = vmatpush.xpose.msra.mxu0 0.0
    %3293 = vmatpush.xpose.msra.mxu0 0.0
    %3294 = vmatpush.xpose.msra.mxu0 0.0
    %3295 = vmatpush.xpose.msra.mxu0 0.0
    %3296 = vmatpush.xpose.msra.mxu0 0.0
    %3297 = vmatpush.xpose.msra.mxu0 0.0
    %3298 = vmatpush.xpose.msra.mxu0 0.0
    %3299 = vmatpush.xpose.msra.mxu0 0.0
    %3300 = vmatpush.xpose.msra.mxu0 0.0
    %3301 = vmatpush.xpose.msra.mxu0 0.0
    %3302 = vmatpush.xpose.msra.mxu0 %v3286
    %3303 = vmatpush.xpose.msra.mxu0 %v3284
    %3304 = vmatmul.f32.gmra.mxu0 %v3280
    %v3305 = vpop.f32.mrf.mxu0
    %v3306 = vadd.f32 %v147, %v3305
    %3307 = vmatmul.f32.gmra.mxu0 %v3282
    %v3308 = vpop.f32.mrf.mxu0
    %v3309 = vadd.f32 %v148, %v3308
    %3310 = vdwg.mxu0
    %v3311 = vsel %vm231, %v3306, -inf
    %3312 = vmax.xlane.f32.xlu0 %v3311
    %v3313 = vpop.xlane.xlu0 %3312
    %v3314 = vsel %vm231, %v3309, -inf
    %3315 = vmax.xlane.f32.xlu0 %v3314
    %v3316 = vpop.xlane.xlu0 %3315
    %v3317 = vsub.f32 %v3306, %v3313
    %v3318 = vsub.f32 %v3309, %v3316
    %v3319 = vmul.f32 %v3317, 1.442695
    %v3320 = vpow.pop %v3319
    %v3321 = vmul.f32 %v3318, 1.442695
    %v3322 = vpow.pop %v3321
    %v3323 = vsel %vm231, %v3320, 0.0
    %3324 = vadd.xlane.f32.xlu0 %v3323
    %v3325 = vpop.xlane.xlu0 %3324
    %v3326 = vsel %vm231, %v3322, 0.0
    %3327 = vadd.xlane.f32.xlu0 %v3326
    %v3328 = vpop.xlane.xlu0 %3327
    %v3329 = vrcp.pop %v3325
    %v3330 = vrcp.pop %v3328
    %3331 = vrot.lane.b32.xlu0 %v3021, 80
    %v3332 = vpop.permute.xlu0 %3331
    %3333 = vrot.lane.b32.xlu0 %v3024, 80
    %v3334 = vpop.permute.xlu0 %3333
    %v3338 = vsel %vm231, %v3320, 0
    %v3341 = vsel %vm231, %v3322, 0
    %3343 = vmatpush.msra.mxu0 0.0
    %3344 = vmatpush.msra.mxu0 0.0
    %3345 = vmatpush.msra.mxu0 0.0
    %3346 = vmatpush.msra.mxu0 0.0
    %3347 = vmatpush.msra.mxu0 0.0
    %3348 = vmatpush.msra.mxu0 0.0
    %3349 = vmatpush.msra.mxu0 0.0
    %3350 = vmatpush.msra.mxu0 0.0
    %3351 = vmatpush.msra.mxu0 0.0
    %3352 = vmatpush.msra.mxu0 0.0
    %3353 = vmatpush.msra.mxu0 0.0
    %3354 = vmatpush.msra.mxu0 0.0
    %3355 = vmatpush.msra.mxu0 0.0
    %3356 = vmatpush.msra.mxu0 0.0
    %3357 = vmatpush.msra.mxu0 %v3334
    %3358 = vmatpush.msra.mxu0 %v3332
    %3359 = vmatmul.f32.gmra.mxu0 %v3338
    %v3360 = vpop.f32.mrf.mxu0
    %v3361 = vadd.f32 0.0, %v3360
    %3362 = vmatmul.f32.gmra.mxu0 %v3341
    %v3363 = vpop.f32.mrf.mxu0
    %v3364 = vadd.f32 0.0, %v3363
    %3365 = vdwg.mxu0
    %v3366 = vmul.f32 %v3361, %v3329
    %v3367 = vmul.f32 %v3364, %v3330
    %v3369 = vsel %vm199, %v3366, 0
    %v3372 = vsel %vm199, %v3367, 0
    %3374 = vmatpush.msra.mxu0 0.0
    %3375 = vmatpush.msra.mxu0 0.0
    %3376 = vmatpush.msra.mxu0 0.0
    %3377 = vmatpush.msra.mxu0 0.0
    %3378 = vmatpush.msra.mxu0 0.0
    %3379 = vmatpush.msra.mxu0 0.0
    %3380 = vmatpush.msra.mxu0 0.0
    %3381 = vmatpush.msra.mxu0 0.0
    %3382 = vmatpush.msra.mxu0 0.0
    %3383 = vmatpush.msra.mxu0 0.0
    %3384 = vmatpush.msra.mxu0 0.0
    %3385 = vmatpush.msra.mxu0 0.0
    %3386 = vmatpush.msra.mxu0 0.0
    %3387 = vmatpush.msra.mxu0 0.0
    %3388 = vmatpush.msra.mxu0 0.0
    %3389 = vmatpush.msra.mxu0 %v2948
    %3390 = vmatmul.f32.gmra.mxu0 %v3369
    %v3391 = vpop.f32.mrf.mxu0
    %v3392 = vadd.f32 0.0, %v3391
    %3393 = vmatmul.f32.gmra.mxu0 %v3372
    %v3394 = vpop.f32.mrf.mxu0
    %v3395 = vadd.f32 0.0, %v3394
    %3396 = vdwg.mxu0
    %v3397 = vadd.f32 %v3267, %v3392
    %v3398 = vadd.f32 %v3270, %v3395
    %3399 = vrot.lane.b32.xlu0 %v2979, 104
    %v3400 = vpop.permute.xlu0 %3399
    %3401 = vrot.lane.b32.xlu0 %v2982, 104
    %v3402 = vpop.permute.xlu0 %3401
    %3403 = vrot.lane.b32.xlu0 %v3021, 104
    %v3404 = vpop.permute.xlu0 %3403
    %3405 = vrot.lane.b32.xlu0 %v3024, 104
    %v3406 = vpop.permute.xlu0 %3405
    %v3407 = vsel %vm199, %v3400, 0
    %v3409 = vsel %vm199, %v3402, 0
    %v3411 = vsel %vm199, %v3404, 0
    %v3413 = vsel %vm199, %v3406, 0
    %3415 = vmatpush.xpose.msra.mxu0 0.0
    %3416 = vmatpush.xpose.msra.mxu0 0.0
    %3417 = vmatpush.xpose.msra.mxu0 0.0
    %3418 = vmatpush.xpose.msra.mxu0 0.0
    %3419 = vmatpush.xpose.msra.mxu0 0.0
    %3420 = vmatpush.xpose.msra.mxu0 0.0
    %3421 = vmatpush.xpose.msra.mxu0 0.0
    %3422 = vmatpush.xpose.msra.mxu0 0.0
    %3423 = vmatpush.xpose.msra.mxu0 0.0
    %3424 = vmatpush.xpose.msra.mxu0 0.0
    %3425 = vmatpush.xpose.msra.mxu0 0.0
    %3426 = vmatpush.xpose.msra.mxu0 0.0
    %3427 = vmatpush.xpose.msra.mxu0 0.0
    %3428 = vmatpush.xpose.msra.mxu0 0.0
    %3429 = vmatpush.xpose.msra.mxu0 %v3413
    %3430 = vmatpush.xpose.msra.mxu0 %v3411
    %3431 = vmatmul.f32.gmra.mxu0 %v3407
    %v3432 = vpop.f32.mrf.mxu0
    %v3433 = vadd.f32 %v147, %v3432
    %3434 = vmatmul.f32.gmra.mxu0 %v3409
    %v3435 = vpop.f32.mrf.mxu0
    %v3436 = vadd.f32 %v148, %v3435
    %3437 = vdwg.mxu0
    %v3438 = vsel %vm231, %v3433, -inf
    %3439 = vmax.xlane.f32.xlu0 %v3438
    %v3440 = vpop.xlane.xlu0 %3439
    %v3441 = vsel %vm231, %v3436, -inf
    %3442 = vmax.xlane.f32.xlu0 %v3441
    %v3443 = vpop.xlane.xlu0 %3442
    %v3444 = vsub.f32 %v3433, %v3440
    %v3445 = vsub.f32 %v3436, %v3443
    %v3446 = vmul.f32 %v3444, 1.442695
    %v3447 = vpow.pop %v3446
    %v3448 = vmul.f32 %v3445, 1.442695
    %v3449 = vpow.pop %v3448
    %v3450 = vsel %vm231, %v3447, 0.0
    %3451 = vadd.xlane.f32.xlu0 %v3450
    %v3452 = vpop.xlane.xlu0 %3451
    %v3453 = vsel %vm231, %v3449, 0.0
    %3454 = vadd.xlane.f32.xlu0 %v3453
    %v3455 = vpop.xlane.xlu0 %3454
    %v3456 = vrcp.pop %v3452
    %v3457 = vrcp.pop %v3455
    %3458 = vrot.lane.b32.xlu0 %v3021, 72
    %v3459 = vpop.permute.xlu0 %3458
    %3460 = vrot.lane.b32.xlu0 %v3024, 72
    %v3461 = vpop.permute.xlu0 %3460
    %v3465 = vsel %vm231, %v3447, 0
    %v3468 = vsel %vm231, %v3449, 0
    %3470 = vmatpush.msra.mxu0 0.0
    %3471 = vmatpush.msra.mxu0 0.0
    %3472 = vmatpush.msra.mxu0 0.0
    %3473 = vmatpush.msra.mxu0 0.0
    %3474 = vmatpush.msra.mxu0 0.0
    %3475 = vmatpush.msra.mxu0 0.0
    %3476 = vmatpush.msra.mxu0 0.0
    %3477 = vmatpush.msra.mxu0 0.0
    %3478 = vmatpush.msra.mxu0 0.0
    %3479 = vmatpush.msra.mxu0 0.0
    %3480 = vmatpush.msra.mxu0 0.0
    %3481 = vmatpush.msra.mxu0 0.0
    %3482 = vmatpush.msra.mxu0 0.0
    %3483 = vmatpush.msra.mxu0 0.0
    %3484 = vmatpush.msra.mxu0 %v3461
    %3485 = vmatpush.msra.mxu0 %v3459
    %3486 = vmatmul.f32.gmra.mxu0 %v3465
    %v3487 = vpop.f32.mrf.mxu0
    %v3488 = vadd.f32 0.0, %v3487
    %3489 = vmatmul.f32.gmra.mxu0 %v3468
    %v3490 = vpop.f32.mrf.mxu0
    %v3491 = vadd.f32 0.0, %v3490
    %3492 = vdwg.mxu0
    %v3493 = vmul.f32 %v3488, %v3456
    %v3494 = vmul.f32 %v3491, %v3457
    %v3496 = vsel %vm199, %v3493, 0
    %v3499 = vsel %vm199, %v3494, 0
    %3501 = vmatpush.msra.mxu0 0.0
    %3502 = vmatpush.msra.mxu0 0.0
    %3503 = vmatpush.msra.mxu0 0.0
    %3504 = vmatpush.msra.mxu0 0.0
    %3505 = vmatpush.msra.mxu0 0.0
    %3506 = vmatpush.msra.mxu0 0.0
    %3507 = vmatpush.msra.mxu0 0.0
    %3508 = vmatpush.msra.mxu0 0.0
    %3509 = vmatpush.msra.mxu0 0.0
    %3510 = vmatpush.msra.mxu0 0.0
    %3511 = vmatpush.msra.mxu0 0.0
    %3512 = vmatpush.msra.mxu0 0.0
    %3513 = vmatpush.msra.mxu0 0.0
    %3514 = vmatpush.msra.mxu0 0.0
    %3515 = vmatpush.msra.mxu0 0.0
    %3516 = vmatpush.msra.mxu0 %v2949
    %3517 = vmatmul.f32.gmra.mxu0 %v3496
    %v3518 = vpop.f32.mrf.mxu0
    %v3519 = vadd.f32 0.0, %v3518
    %3520 = vmatmul.f32.gmra.mxu0 %v3499
    %v3521 = vpop.f32.mrf.mxu0
    %v3522 = vadd.f32 0.0, %v3521
    %3523 = vdwg.mxu0
    %v3524 = vadd.f32 %v3397, %v3519
    %v3525 = vadd.f32 %v3398, %v3522
    %v3527 = vperm.slane %v2951, 0
    %v3529 = vadd.f32 %v3524, %v3527
    %v3530 = vadd.f32 %v3525, %v3527
    %s3531 = scalar_lea.vmem %s23, 16
    %3532 = vst.msk [vmem:[%s3531] sm:$0xff] %vm77, %v3021
    %3533 = vst.msk [vmem:[%s3531 + $0x8] sm:$0xff] %vm77, %v3024
    %s3534 = scalar_lea.vmem %s24, 16
    %3535 = vst.msk [vmem:[%s3534] sm:$0xff] %vm77, %v3082
    %3536 = vst.msk [vmem:[%s3534 + $0x8] sm:$0xff] %vm77, %v3084
    %v3537 = vadd.f32 %v3529, %v2936
    %v3538 = vadd.f32 %v3530, %v2937
    %s3539 = scalar_lea.vmem %s12, 4
    %v3540 = vld [vmem:[%s3539] sm:$0x1]
    %s3541 = scalar_lea.vmem %s13, 4
    %v3542 = vld [vmem:[%s3541] sm:$0x1]
    %v3543 = vsel %vm77, %v3537, 0.0
    %3544 = vadd.xlane.f32.xlu0 %v3543
    %v3545 = vpop.xlane.xlu0 %3544
    %v3546 = vsel %vm77, %v3538, 0.0
    %3547 = vadd.xlane.f32.xlu0 %v3546
    %v3548 = vpop.xlane.xlu0 %3547
    %v3549 = vmul.f32 %v3545, %v90
    %v3550 = vmul.f32 %v3548, %v90
    %v3551 = vsub.f32 %v3537, %v3549
    %v3552 = vsub.f32 %v3538, %v3550
    %v3553 = vmul.f32 %v3551, %v3551
    %v3554 = vmul.f32 %v3552, %v3552
    %v3555 = vsel %vm77, %v3553, 0.0
    %3556 = vadd.xlane.f32.xlu0 %v3555
    %v3557 = vpop.xlane.xlu0 %3556
    %v3558 = vsel %vm77, %v3554, 0.0
    %3559 = vadd.xlane.f32.xlu0 %v3558
    %v3560 = vpop.xlane.xlu0 %3559
    %v3561 = vmul.f32 %v3557, %v90
    %v3562 = vmul.f32 %v3560, %v90
    %v3563 = vadd.f32 %v3561, 1e-05
    %v3564 = vadd.f32 %v3562, 1e-05
    %v3565 = vrsqrt.pop %v3563
    %v3566 = vmul.f32 %v3565, %v3563
    %v3567 = vmul.f32 %v3566, %v3565
    %v3568 = vmul.f32 0.5, %v3567
    %v3569 = vsub.f32 1.5, %v3568
    %v3570 = vmul.f32 %v3565, %v3569
    %vm3571 = vweird.f32 %v3563
    %vm3572 = vweird.f32 %v3565
    %vm3573 = vmor %vm3571, %vm3572
    %v3574 = vsel %vm3573, %v3565, %v3570
    %v3575 = vrsqrt.pop %v3564
    %v3576 = vmul.f32 %v3575, %v3564
    %v3577 = vmul.f32 %v3576, %v3575
    %v3578 = vmul.f32 0.5, %v3577
    %v3579 = vsub.f32 1.5, %v3578
    %v3580 = vmul.f32 %v3575, %v3579
    %vm3581 = vweird.f32 %v3564
    %vm3582 = vweird.f32 %v3575
    %vm3583 = vmor %vm3581, %vm3582
    %v3584 = vsel %vm3583, %v3575, %v3580
    %v3585 = vmul.f32 %v3551, %v3574
    %v3586 = vmul.f32 %v3552, %v3584
    %v3588 = vperm.slane %v3540, 0
    %v3590 = vmul.f32 %v3585, %v3588
    %v3591 = vmul.f32 %v3586, %v3588
    %v3593 = vperm.slane %v3542, 0
    %v3595 = vadd.f32 %v3590, %v3593
    %v3596 = vadd.f32 %v3591, %v3593
    %s3597 = scalar_lea.vmem %s8, 160
    %v3598 = vld [vmem:[%s3597] sm:$0xff]
    %v3599 = vld [vmem:[%s3597 + $0x8] sm:$0xff]
    %v3600 = vld [vmem:[%s3597 + $0x10] sm:$0xff]
    %v3601 = vld [vmem:[%s3597 + $0x18] sm:$0xff]
    %s3602 = scalar_lea.vmem %s9, 5
    %v3603 = vld [vmem:[%s3602] sm:$0x1]
    %s3604 = scalar_lea.vmem %s10, 160
    %v3605 = vld [vmem:[%s3604] sm:$0xff]
    %v3606 = vld [vmem:[%s3604 + $0x8] sm:$0xff]
    %v3607 = vld [vmem:[%s3604 + $0x10] sm:$0xff]
    %v3608 = vld [vmem:[%s3604 + $0x18] sm:$0xff]
    %s3609 = scalar_lea.vmem %s11, 5
    %v3610 = vld [vmem:[%s3609] sm:$0x1]
    %v3612 = vperm.slane %v3603, 0
    %v3615 = vsel %vm77, %v3595, 0
    %v3618 = vsel %vm77, %v3596, 0
    %3620 = vmatpush.msra.mxu0 0.0
    %3621 = vmatpush.msra.mxu0 0.0
    %3622 = vmatpush.msra.mxu0 0.0
    %3623 = vmatpush.msra.mxu0 0.0
    %3624 = vmatpush.msra.mxu0 0.0
    %3625 = vmatpush.msra.mxu0 0.0
    %3626 = vmatpush.msra.mxu0 0.0
    %3627 = vmatpush.msra.mxu0 0.0
    %3628 = vmatpush.msra.mxu0 0.0
    %3629 = vmatpush.msra.mxu0 0.0
    %3630 = vmatpush.msra.mxu0 0.0
    %3631 = vmatpush.msra.mxu0 0.0
    %3632 = vmatpush.msra.mxu0 %v3601
    %3633 = vmatpush.msra.mxu0 %v3600
    %3634 = vmatpush.msra.mxu0 %v3599
    %3635 = vmatpush.msra.mxu0 %v3598
    %3636 = vmatmul.f32.gmra.mxu0 %v3615
    %v3637 = vpop.f32.mrf.mxu0
    %v3638 = vadd.f32 %v3612, %v3637
    %3639 = vmatmul.f32.gmra.mxu0 %v3618
    %v3640 = vpop.f32.mrf.mxu0
    %v3641 = vadd.f32 %v3612, %v3640
    %3642 = vdwg.mxu0
    %3647 = vrot.lane.b32.xlu0 %v3598, 96
    %v3648 = vpop.permute.xlu0 %3647
    %3649 = vrot.lane.b32.xlu0 %v3599, 96
    %v3650 = vpop.permute.xlu0 %3649
    %3651 = vrot.lane.b32.xlu0 %v3600, 96
    %v3652 = vpop.permute.xlu0 %3651
    %3653 = vrot.lane.b32.xlu0 %v3601, 96
    %v3654 = vpop.permute.xlu0 %3653
    %3659 = vrot.lane.b32.xlu0 %v3612, 96
    %v3660 = vpop.permute.xlu0 %3659
    %3662 = vmatpush.msra.mxu0 0.0
    %3663 = vmatpush.msra.mxu0 0.0
    %3664 = vmatpush.msra.mxu0 0.0
    %3665 = vmatpush.msra.mxu0 0.0
    %3666 = vmatpush.msra.mxu0 0.0
    %3667 = vmatpush.msra.mxu0 0.0
    %3668 = vmatpush.msra.mxu0 0.0
    %3669 = vmatpush.msra.mxu0 0.0
    %3670 = vmatpush.msra.mxu0 0.0
    %3671 = vmatpush.msra.mxu0 0.0
    %3672 = vmatpush.msra.mxu0 0.0
    %3673 = vmatpush.msra.mxu0 0.0
    %3674 = vmatpush.msra.mxu0 %v3654
    %3675 = vmatpush.msra.mxu0 %v3652
    %3676 = vmatpush.msra.mxu0 %v3650
    %3677 = vmatpush.msra.mxu0 %v3648
    %3678 = vmatmul.f32.gmra.mxu0 %v1495
    %v3679 = vpop.f32.mrf.mxu0
    %v3680 = vadd.f32 %v3660, %v3679
    %3681 = vmatmul.f32.gmra.mxu0 %v1498
    %v3682 = vpop.f32.mrf.mxu0
    %v3683 = vadd.f32 %v3660, %v3682
    %3684 = vmatmul.f32.gmra.mxu0 %v1501
    %v3685 = vpop.f32.mrf.mxu0
    %v3686 = vadd.f32 %v3660, %v3685
    %3687 = vmatmul.f32.gmra.mxu0 %v1504
    %v3688 = vpop.f32.mrf.mxu0
    %v3689 = vadd.f32 %v3660, %v3688
    %3690 = vdwg.mxu0
    %v3692 = vsel %vm199, %v3638, 0
    %v3695 = vsel %vm199, %v3641, 0
    %v3698 = vsel %vm199, %v3680, 0
    %v3701 = vsel %vm199, %v3683, 0
    %v3704 = vsel %vm199, %v3686, 0
    %v3707 = vsel %vm199, %v3689, 0
    %3709 = vmatpush.xpose.msra.mxu0 0.0
    %3710 = vmatpush.xpose.msra.mxu0 0.0
    %3711 = vmatpush.xpose.msra.mxu0 0.0
    %3712 = vmatpush.xpose.msra.mxu0 0.0
    %3713 = vmatpush.xpose.msra.mxu0 0.0
    %3714 = vmatpush.xpose.msra.mxu0 0.0
    %3715 = vmatpush.xpose.msra.mxu0 0.0
    %3716 = vmatpush.xpose.msra.mxu0 0.0
    %3717 = vmatpush.xpose.msra.mxu0 0.0
    %3718 = vmatpush.xpose.msra.mxu0 0.0
    %3719 = vmatpush.xpose.msra.mxu0 0.0
    %3720 = vmatpush.xpose.msra.mxu0 0.0
    %3721 = vmatpush.xpose.msra.mxu0 %v3707
    %3722 = vmatpush.xpose.msra.mxu0 %v3704
    %3723 = vmatpush.xpose.msra.mxu0 %v3701
    %3724 = vmatpush.xpose.msra.mxu0 %v3698
    %3725 = vmatmul.f32.gmra.mxu0 %v3692
    %v3726 = vpop.f32.mrf.mxu0
    %v3727 = vadd.f32 %v149, %v3726
    %3728 = vmatmul.f32.gmra.mxu0 %v3695
    %v3729 = vpop.f32.mrf.mxu0
    %v3730 = vadd.f32 %v150, %v3729
    %3731 = vdwg.mxu0
    %v3732 = vsel %vm77, %v3727, -inf
    %3733 = vmax.xlane.f32.xlu0 %v3732
    %v3734 = vpop.xlane.xlu0 %3733
    %v3735 = vsel %vm77, %v3730, -inf
    %3736 = vmax.xlane.f32.xlu0 %v3735
    %v3737 = vpop.xlane.xlu0 %3736
    %v3738 = vsub.f32 %v3727, %v3734
    %v3739 = vsub.f32 %v3730, %v3737
    %v3740 = vmul.f32 %v3738, 1.442695
    %v3741 = vpow.pop %v3740
    %v3742 = vmul.f32 %v3739, 1.442695
    %v3743 = vpow.pop %v3742
    %v3744 = vsel %vm77, %v3741, 0.0
    %3745 = vadd.xlane.f32.xlu0 %v3744
    %v3746 = vpop.xlane.xlu0 %3745
    %v3747 = vsel %vm77, %v3743, 0.0
    %3748 = vadd.xlane.f32.xlu0 %v3747
    %v3749 = vpop.xlane.xlu0 %3748
    %v3750 = vrcp.pop %v3746
    %v3751 = vrcp.pop %v3749
    %3752 = vrot.lane.b32.xlu0 %v3680, 96
    %v3753 = vpop.permute.xlu0 %3752
    %3754 = vrot.lane.b32.xlu0 %v3683, 96
    %v3755 = vpop.permute.xlu0 %3754
    %3756 = vrot.lane.b32.xlu0 %v3686, 96
    %v3757 = vpop.permute.xlu0 %3756
    %3758 = vrot.lane.b32.xlu0 %v3689, 96
    %v3759 = vpop.permute.xlu0 %3758
    %v3765 = vsel %vm77, %v3741, 0
    %v3768 = vsel %vm77, %v3743, 0
    %3770 = vmatpush.msra.mxu0 0.0
    %3771 = vmatpush.msra.mxu0 0.0
    %3772 = vmatpush.msra.mxu0 0.0
    %3773 = vmatpush.msra.mxu0 0.0
    %3774 = vmatpush.msra.mxu0 0.0
    %3775 = vmatpush.msra.mxu0 0.0
    %3776 = vmatpush.msra.mxu0 0.0
    %3777 = vmatpush.msra.mxu0 0.0
    %3778 = vmatpush.msra.mxu0 0.0
    %3779 = vmatpush.msra.mxu0 0.0
    %3780 = vmatpush.msra.mxu0 0.0
    %3781 = vmatpush.msra.mxu0 0.0
    %3782 = vmatpush.msra.mxu0 %v3759
    %3783 = vmatpush.msra.mxu0 %v3757
    %3784 = vmatpush.msra.mxu0 %v3755
    %3785 = vmatpush.msra.mxu0 %v3753
    %3786 = vmatmul.f32.gmra.mxu0 %v3765
    %v3787 = vpop.f32.mrf.mxu0
    %v3788 = vadd.f32 0.0, %v3787
    %3789 = vmatmul.f32.gmra.mxu0 %v3768
    %v3790 = vpop.f32.mrf.mxu0
    %v3791 = vadd.f32 0.0, %v3790
    %3792 = vdwg.mxu0
    %v3793 = vmul.f32 %v3788, %v3750
    %v3794 = vmul.f32 %v3791, %v3751
    %3795 = vrot.lane.b32.xlu0 %v3638, 120
    %v3796 = vpop.permute.xlu0 %3795
    %3797 = vrot.lane.b32.xlu0 %v3641, 120
    %v3798 = vpop.permute.xlu0 %3797
    %3799 = vrot.lane.b32.xlu0 %v3680, 120
    %v3800 = vpop.permute.xlu0 %3799
    %3801 = vrot.lane.b32.xlu0 %v3683, 120
    %v3802 = vpop.permute.xlu0 %3801
    %3803 = vrot.lane.b32.xlu0 %v3686, 120
    %v3804 = vpop.permute.xlu0 %3803
    %3805 = vrot.lane.b32.xlu0 %v3689, 120
    %v3806 = vpop.permute.xlu0 %3805
    %v3807 = vsel %vm199, %v3796, 0
    %v3809 = vsel %vm199, %v3798, 0
    %v3811 = vsel %vm199, %v3800, 0
    %v3813 = vsel %vm199, %v3802, 0
    %v3815 = vsel %vm199, %v3804, 0
    %v3817 = vsel %vm199, %v3806, 0
    %3819 = vmatpush.xpose.msra.mxu0 0.0
    %3820 = vmatpush.xpose.msra.mxu0 0.0
    %3821 = vmatpush.xpose.msra.mxu0 0.0
    %3822 = vmatpush.xpose.msra.mxu0 0.0
    %3823 = vmatpush.xpose.msra.mxu0 0.0
    %3824 = vmatpush.xpose.msra.mxu0 0.0
    %3825 = vmatpush.xpose.msra.mxu0 0.0
    %3826 = vmatpush.xpose.msra.mxu0 0.0
    %3827 = vmatpush.xpose.msra.mxu0 0.0
    %3828 = vmatpush.xpose.msra.mxu0 0.0
    %3829 = vmatpush.xpose.msra.mxu0 0.0
    %3830 = vmatpush.xpose.msra.mxu0 0.0
    %3831 = vmatpush.xpose.msra.mxu0 %v3817
    %3832 = vmatpush.xpose.msra.mxu0 %v3815
    %3833 = vmatpush.xpose.msra.mxu0 %v3813
    %3834 = vmatpush.xpose.msra.mxu0 %v3811
    %3835 = vmatmul.f32.gmra.mxu0 %v3807
    %v3836 = vpop.f32.mrf.mxu0
    %v3837 = vadd.f32 %v149, %v3836
    %3838 = vmatmul.f32.gmra.mxu0 %v3809
    %v3839 = vpop.f32.mrf.mxu0
    %v3840 = vadd.f32 %v150, %v3839
    %3841 = vdwg.mxu0
    %v3842 = vsel %vm77, %v3837, -inf
    %3843 = vmax.xlane.f32.xlu0 %v3842
    %v3844 = vpop.xlane.xlu0 %3843
    %v3845 = vsel %vm77, %v3840, -inf
    %3846 = vmax.xlane.f32.xlu0 %v3845
    %v3847 = vpop.xlane.xlu0 %3846
    %v3848 = vsub.f32 %v3837, %v3844
    %v3849 = vsub.f32 %v3840, %v3847
    %v3850 = vmul.f32 %v3848, 1.442695
    %v3851 = vpow.pop %v3850
    %v3852 = vmul.f32 %v3849, 1.442695
    %v3853 = vpow.pop %v3852
    %v3854 = vsel %vm77, %v3851, 0.0
    %3855 = vadd.xlane.f32.xlu0 %v3854
    %v3856 = vpop.xlane.xlu0 %3855
    %v3857 = vsel %vm77, %v3853, 0.0
    %3858 = vadd.xlane.f32.xlu0 %v3857
    %v3859 = vpop.xlane.xlu0 %3858
    %v3860 = vrcp.pop %v3856
    %v3861 = vrcp.pop %v3859
    %3862 = vrot.lane.b32.xlu0 %v3680, 88
    %v3863 = vpop.permute.xlu0 %3862
    %3864 = vrot.lane.b32.xlu0 %v3683, 88
    %v3865 = vpop.permute.xlu0 %3864
    %3866 = vrot.lane.b32.xlu0 %v3686, 88
    %v3867 = vpop.permute.xlu0 %3866
    %3868 = vrot.lane.b32.xlu0 %v3689, 88
    %v3869 = vpop.permute.xlu0 %3868
    %v3875 = vsel %vm77, %v3851, 0
    %v3878 = vsel %vm77, %v3853, 0
    %3880 = vmatpush.msra.mxu0 0.0
    %3881 = vmatpush.msra.mxu0 0.0
    %3882 = vmatpush.msra.mxu0 0.0
    %3883 = vmatpush.msra.mxu0 0.0
    %3884 = vmatpush.msra.mxu0 0.0
    %3885 = vmatpush.msra.mxu0 0.0
    %3886 = vmatpush.msra.mxu0 0.0
    %3887 = vmatpush.msra.mxu0 0.0
    %3888 = vmatpush.msra.mxu0 0.0
    %3889 = vmatpush.msra.mxu0 0.0
    %3890 = vmatpush.msra.mxu0 0.0
    %3891 = vmatpush.msra.mxu0 0.0
    %3892 = vmatpush.msra.mxu0 %v3869
    %3893 = vmatpush.msra.mxu0 %v3867
    %3894 = vmatpush.msra.mxu0 %v3865
    %3895 = vmatpush.msra.mxu0 %v3863
    %3896 = vmatmul.f32.gmra.mxu0 %v3875
    %v3897 = vpop.f32.mrf.mxu0
    %v3898 = vadd.f32 0.0, %v3897
    %3899 = vmatmul.f32.gmra.mxu0 %v3878
    %v3900 = vpop.f32.mrf.mxu0
    %v3901 = vadd.f32 0.0, %v3900
    %3902 = vdwg.mxu0
    %v3903 = vmul.f32 %v3898, %v3860
    %v3904 = vmul.f32 %v3901, %v3861
    %v3906 = vsel %vm199, %v3903, 0
    %v3909 = vsel %vm199, %v3904, 0
    %3911 = vmatpush.msra.mxu0 0.0
    %3912 = vmatpush.msra.mxu0 0.0
    %3913 = vmatpush.msra.mxu0 0.0
    %3914 = vmatpush.msra.mxu0 0.0
    %3915 = vmatpush.msra.mxu0 0.0
    %3916 = vmatpush.msra.mxu0 0.0
    %3917 = vmatpush.msra.mxu0 0.0
    %3918 = vmatpush.msra.mxu0 0.0
    %3919 = vmatpush.msra.mxu0 0.0
    %3920 = vmatpush.msra.mxu0 0.0
    %3921 = vmatpush.msra.mxu0 0.0
    %3922 = vmatpush.msra.mxu0 0.0
    %3923 = vmatpush.msra.mxu0 0.0
    %3924 = vmatpush.msra.mxu0 0.0
    %3925 = vmatpush.msra.mxu0 0.0
    %3926 = vmatpush.msra.mxu0 %v3606
    %3927 = vmatmul.f32.gmra.mxu0 %v3906
    %v3928 = vpop.f32.mrf.mxu0
    %v3929 = vadd.f32 0.0, %v3928
    %3930 = vmatmul.f32.gmra.mxu0 %v3909
    %v3931 = vpop.f32.mrf.mxu0
    %v3932 = vadd.f32 0.0, %v3931
    %3933 = vdwg.mxu0
    %v3935 = vsel %vm199, %v3793, 0
    %v3938 = vsel %vm199, %v3794, 0
    %3940 = vmatpush.msra.mxu0 0.0
    %3941 = vmatpush.msra.mxu0 0.0
    %3942 = vmatpush.msra.mxu0 0.0
    %3943 = vmatpush.msra.mxu0 0.0
    %3944 = vmatpush.msra.mxu0 0.0
    %3945 = vmatpush.msra.mxu0 0.0
    %3946 = vmatpush.msra.mxu0 0.0
    %3947 = vmatpush.msra.mxu0 0.0
    %3948 = vmatpush.msra.mxu0 0.0
    %3949 = vmatpush.msra.mxu0 0.0
    %3950 = vmatpush.msra.mxu0 0.0
    %3951 = vmatpush.msra.mxu0 0.0
    %3952 = vmatpush.msra.mxu0 0.0
    %3953 = vmatpush.msra.mxu0 0.0
    %3954 = vmatpush.msra.mxu0 0.0
    %3955 = vmatpush.msra.mxu0 %v3605
    %3956 = vmatmul.f32.gmra.mxu0 %v3935
    %v3957 = vpop.f32.mrf.mxu0
    %v3958 = vadd.f32 %v3929, %v3957
    %3959 = vmatmul.f32.gmra.mxu0 %v3938
    %v3960 = vpop.f32.mrf.mxu0
    %v3961 = vadd.f32 %v3932, %v3960
    %3962 = vdwg.mxu0
    %3963 = vrot.lane.b32.xlu0 %v3638, 112
    %v3964 = vpop.permute.xlu0 %3963
    %3965 = vrot.lane.b32.xlu0 %v3641, 112
    %v3966 = vpop.permute.xlu0 %3965
    %3967 = vrot.lane.b32.xlu0 %v3680, 112
    %v3968 = vpop.permute.xlu0 %3967
    %3969 = vrot.lane.b32.xlu0 %v3683, 112
    %v3970 = vpop.permute.xlu0 %3969
    %3971 = vrot.lane.b32.xlu0 %v3686, 112
    %v3972 = vpop.permute.xlu0 %3971
    %3973 = vrot.lane.b32.xlu0 %v3689, 112
    %v3974 = vpop.permute.xlu0 %3973
    %v3975 = vsel %vm199, %v3964, 0
    %v3977 = vsel %vm199, %v3966, 0
    %v3979 = vsel %vm199, %v3968, 0
    %v3981 = vsel %vm199, %v3970, 0
    %v3983 = vsel %vm199, %v3972, 0
    %v3985 = vsel %vm199, %v3974, 0
    %3987 = vmatpush.xpose.msra.mxu0 0.0
    %3988 = vmatpush.xpose.msra.mxu0 0.0
    %3989 = vmatpush.xpose.msra.mxu0 0.0
    %3990 = vmatpush.xpose.msra.mxu0 0.0
    %3991 = vmatpush.xpose.msra.mxu0 0.0
    %3992 = vmatpush.xpose.msra.mxu0 0.0
    %3993 = vmatpush.xpose.msra.mxu0 0.0
    %3994 = vmatpush.xpose.msra.mxu0 0.0
    %3995 = vmatpush.xpose.msra.mxu0 0.0
    %3996 = vmatpush.xpose.msra.mxu0 0.0
    %3997 = vmatpush.xpose.msra.mxu0 0.0
    %3998 = vmatpush.xpose.msra.mxu0 0.0
    %3999 = vmatpush.xpose.msra.mxu0 %v3985
    %4000 = vmatpush.xpose.msra.mxu0 %v3983
    %4001 = vmatpush.xpose.msra.mxu0 %v3981
    %4002 = vmatpush.xpose.msra.mxu0 %v3979
    %4003 = vmatmul.f32.gmra.mxu0 %v3975
    %v4004 = vpop.f32.mrf.mxu0
    %v4005 = vadd.f32 %v149, %v4004
    %4006 = vmatmul.f32.gmra.mxu0 %v3977
    %v4007 = vpop.f32.mrf.mxu0
    %v4008 = vadd.f32 %v150, %v4007
    %4009 = vdwg.mxu0
    %v4010 = vsel %vm77, %v4005, -inf
    %4011 = vmax.xlane.f32.xlu0 %v4010
    %v4012 = vpop.xlane.xlu0 %4011
    %v4013 = vsel %vm77, %v4008, -inf
    %4014 = vmax.xlane.f32.xlu0 %v4013
    %v4015 = vpop.xlane.xlu0 %4014
    %v4016 = vsub.f32 %v4005, %v4012
    %v4017 = vsub.f32 %v4008, %v4015
    %v4018 = vmul.f32 %v4016, 1.442695
    %v4019 = vpow.pop %v4018
    %v4020 = vmul.f32 %v4017, 1.442695
    %v4021 = vpow.pop %v4020
    %v4022 = vsel %vm77, %v4019, 0.0
    %4023 = vadd.xlane.f32.xlu0 %v4022
    %v4024 = vpop.xlane.xlu0 %4023
    %v4025 = vsel %vm77, %v4021, 0.0
    %4026 = vadd.xlane.f32.xlu0 %v4025
    %v4027 = vpop.xlane.xlu0 %4026
    %v4028 = vrcp.pop %v4024
    %v4029 = vrcp.pop %v4027
    %4030 = vrot.lane.b32.xlu0 %v3680, 80
    %v4031 = vpop.permute.xlu0 %4030
    %4032 = vrot.lane.b32.xlu0 %v3683, 80
    %v4033 = vpop.permute.xlu0 %4032
    %4034 = vrot.lane.b32.xlu0 %v3686, 80
    %v4035 = vpop.permute.xlu0 %4034
    %4036 = vrot.lane.b32.xlu0 %v3689, 80
    %v4037 = vpop.permute.xlu0 %4036
    %v4043 = vsel %vm77, %v4019, 0
    %v4046 = vsel %vm77, %v4021, 0
    %4048 = vmatpush.msra.mxu0 0.0
    %4049 = vmatpush.msra.mxu0 0.0
    %4050 = vmatpush.msra.mxu0 0.0
    %4051 = vmatpush.msra.mxu0 0.0
    %4052 = vmatpush.msra.mxu0 0.0
    %4053 = vmatpush.msra.mxu0 0.0
    %4054 = vmatpush.msra.mxu0 0.0
    %4055 = vmatpush.msra.mxu0 0.0
    %4056 = vmatpush.msra.mxu0 0.0
    %4057 = vmatpush.msra.mxu0 0.0
    %4058 = vmatpush.msra.mxu0 0.0
    %4059 = vmatpush.msra.mxu0 0.0
    %4060 = vmatpush.msra.mxu0 %v4037
    %4061 = vmatpush.msra.mxu0 %v4035
    %4062 = vmatpush.msra.mxu0 %v4033
    %4063 = vmatpush.msra.mxu0 %v4031
    %4064 = vmatmul.f32.gmra.mxu0 %v4043
    %v4065 = vpop.f32.mrf.mxu0
    %v4066 = vadd.f32 0.0, %v4065
    %4067 = vmatmul.f32.gmra.mxu0 %v4046
    %v4068 = vpop.f32.mrf.mxu0
    %v4069 = vadd.f32 0.0, %v4068
    %4070 = vdwg.mxu0
    %v4071 = vmul.f32 %v4066, %v4028
    %v4072 = vmul.f32 %v4069, %v4029
    %v4074 = vsel %vm199, %v4071, 0
    %v4077 = vsel %vm199, %v4072, 0
    %4079 = vmatpush.msra.mxu0 0.0
    %4080 = vmatpush.msra.mxu0 0.0
    %4081 = vmatpush.msra.mxu0 0.0
    %4082 = vmatpush.msra.mxu0 0.0
    %4083 = vmatpush.msra.mxu0 0.0
    %4084 = vmatpush.msra.mxu0 0.0
    %4085 = vmatpush.msra.mxu0 0.0
    %4086 = vmatpush.msra.mxu0 0.0
    %4087 = vmatpush.msra.mxu0 0.0
    %4088 = vmatpush.msra.mxu0 0.0
    %4089 = vmatpush.msra.mxu0 0.0
    %4090 = vmatpush.msra.mxu0 0.0
    %4091 = vmatpush.msra.mxu0 0.0
    %4092 = vmatpush.msra.mxu0 0.0
    %4093 = vmatpush.msra.mxu0 0.0
    %4094 = vmatpush.msra.mxu0 %v3607
    %4095 = vmatmul.f32.gmra.mxu0 %v4074
    %v4096 = vpop.f32.mrf.mxu0
    %v4097 = vadd.f32 0.0, %v4096
    %4098 = vmatmul.f32.gmra.mxu0 %v4077
    %v4099 = vpop.f32.mrf.mxu0
    %v4100 = vadd.f32 0.0, %v4099
    %4101 = vdwg.mxu0
    %v4102 = vadd.f32 %v3958, %v4097
    %v4103 = vadd.f32 %v3961, %v4100
    %4104 = vrot.lane.b32.xlu0 %v3638, 104
    %v4105 = vpop.permute.xlu0 %4104
    %4106 = vrot.lane.b32.xlu0 %v3641, 104
    %v4107 = vpop.permute.xlu0 %4106
    %4108 = vrot.lane.b32.xlu0 %v3680, 104
    %v4109 = vpop.permute.xlu0 %4108
    %4110 = vrot.lane.b32.xlu0 %v3683, 104
    %v4111 = vpop.permute.xlu0 %4110
    %4112 = vrot.lane.b32.xlu0 %v3686, 104
    %v4113 = vpop.permute.xlu0 %4112
    %4114 = vrot.lane.b32.xlu0 %v3689, 104
    %v4115 = vpop.permute.xlu0 %4114
    %v4116 = vsel %vm199, %v4105, 0
    %v4118 = vsel %vm199, %v4107, 0
    %v4120 = vsel %vm199, %v4109, 0
    %v4122 = vsel %vm199, %v4111, 0
    %v4124 = vsel %vm199, %v4113, 0
    %v4126 = vsel %vm199, %v4115, 0
    %4128 = vmatpush.xpose.msra.mxu0 0.0
    %4129 = vmatpush.xpose.msra.mxu0 0.0
    %4130 = vmatpush.xpose.msra.mxu0 0.0
    %4131 = vmatpush.xpose.msra.mxu0 0.0
    %4132 = vmatpush.xpose.msra.mxu0 0.0
    %4133 = vmatpush.xpose.msra.mxu0 0.0
    %4134 = vmatpush.xpose.msra.mxu0 0.0
    %4135 = vmatpush.xpose.msra.mxu0 0.0
    %4136 = vmatpush.xpose.msra.mxu0 0.0
    %4137 = vmatpush.xpose.msra.mxu0 0.0
    %4138 = vmatpush.xpose.msra.mxu0 0.0
    %4139 = vmatpush.xpose.msra.mxu0 0.0
    %4140 = vmatpush.xpose.msra.mxu0 %v4126
    %4141 = vmatpush.xpose.msra.mxu0 %v4124
    %4142 = vmatpush.xpose.msra.mxu0 %v4122
    %4143 = vmatpush.xpose.msra.mxu0 %v4120
    %4144 = vmatmul.f32.gmra.mxu0 %v4116
    %v4145 = vpop.f32.mrf.mxu0
    %v4146 = vadd.f32 %v149, %v4145
    %4147 = vmatmul.f32.gmra.mxu0 %v4118
    %v4148 = vpop.f32.mrf.mxu0
    %v4149 = vadd.f32 %v150, %v4148
    %4150 = vdwg.mxu0
    %v4151 = vsel %vm77, %v4146, -inf
    %4152 = vmax.xlane.f32.xlu0 %v4151
    %v4153 = vpop.xlane.xlu0 %4152
    %v4154 = vsel %vm77, %v4149, -inf
    %4155 = vmax.xlane.f32.xlu0 %v4154
    %v4156 = vpop.xlane.xlu0 %4155
    %v4157 = vsub.f32 %v4146, %v4153
    %v4158 = vsub.f32 %v4149, %v4156
    %v4159 = vmul.f32 %v4157, 1.442695
    %v4160 = vpow.pop %v4159
    %v4161 = vmul.f32 %v4158, 1.442695
    %v4162 = vpow.pop %v4161
    %v4163 = vsel %vm77, %v4160, 0.0
    %4164 = vadd.xlane.f32.xlu0 %v4163
    %v4165 = vpop.xlane.xlu0 %4164
    %v4166 = vsel %vm77, %v4162, 0.0
    %4167 = vadd.xlane.f32.xlu0 %v4166
    %v4168 = vpop.xlane.xlu0 %4167
    %v4169 = vrcp.pop %v4165
    %v4170 = vrcp.pop %v4168
    %4171 = vrot.lane.b32.xlu0 %v3680, 72
    %v4172 = vpop.permute.xlu0 %4171
    %4173 = vrot.lane.b32.xlu0 %v3683, 72
    %v4174 = vpop.permute.xlu0 %4173
    %4175 = vrot.lane.b32.xlu0 %v3686, 72
    %v4176 = vpop.permute.xlu0 %4175
    %4177 = vrot.lane.b32.xlu0 %v3689, 72
    %v4178 = vpop.permute.xlu0 %4177
    %v4184 = vsel %vm77, %v4160, 0
    %v4187 = vsel %vm77, %v4162, 0
    %4189 = vmatpush.msra.mxu0 0.0
    %4190 = vmatpush.msra.mxu0 0.0
    %4191 = vmatpush.msra.mxu0 0.0
    %4192 = vmatpush.msra.mxu0 0.0
    %4193 = vmatpush.msra.mxu0 0.0
    %4194 = vmatpush.msra.mxu0 0.0
    %4195 = vmatpush.msra.mxu0 0.0
    %4196 = vmatpush.msra.mxu0 0.0
    %4197 = vmatpush.msra.mxu0 0.0
    %4198 = vmatpush.msra.mxu0 0.0
    %4199 = vmatpush.msra.mxu0 0.0
    %4200 = vmatpush.msra.mxu0 0.0
    %4201 = vmatpush.msra.mxu0 %v4178
    %4202 = vmatpush.msra.mxu0 %v4176
    %4203 = vmatpush.msra.mxu0 %v4174
    %4204 = vmatpush.msra.mxu0 %v4172
    %4205 = vmatmul.f32.gmra.mxu0 %v4184
    %v4206 = vpop.f32.mrf.mxu0
    %v4207 = vadd.f32 0.0, %v4206
    %4208 = vmatmul.f32.gmra.mxu0 %v4187
    %v4209 = vpop.f32.mrf.mxu0
    %v4210 = vadd.f32 0.0, %v4209
    %4211 = vdwg.mxu0
    %v4212 = vmul.f32 %v4207, %v4169
    %v4213 = vmul.f32 %v4210, %v4170
    %v4215 = vsel %vm199, %v4212, 0
    %v4218 = vsel %vm199, %v4213, 0
    %4220 = vmatpush.msra.mxu0 0.0
    %4221 = vmatpush.msra.mxu0 0.0
    %4222 = vmatpush.msra.mxu0 0.0
    %4223 = vmatpush.msra.mxu0 0.0
    %4224 = vmatpush.msra.mxu0 0.0
    %4225 = vmatpush.msra.mxu0 0.0
    %4226 = vmatpush.msra.mxu0 0.0
    %4227 = vmatpush.msra.mxu0 0.0
    %4228 = vmatpush.msra.mxu0 0.0
    %4229 = vmatpush.msra.mxu0 0.0
    %4230 = vmatpush.msra.mxu0 0.0
    %4231 = vmatpush.msra.mxu0 0.0
    %4232 = vmatpush.msra.mxu0 0.0
    %4233 = vmatpush.msra.mxu0 0.0
    %4234 = vmatpush.msra.mxu0 0.0
    %4235 = vmatpush.msra.mxu0 %v3608
    %4236 = vmatmul.f32.gmra.mxu0 %v4215
    %v4237 = vpop.f32.mrf.mxu0
    %v4238 = vadd.f32 0.0, %v4237
    %4239 = vmatmul.f32.gmra.mxu0 %v4218
    %v4240 = vpop.f32.mrf.mxu0
    %v4241 = vadd.f32 0.0, %v4240
    %4242 = vdwg.mxu0
    %v4243 = vadd.f32 %v4102, %v4238
    %v4244 = vadd.f32 %v4103, %v4241
    %v4246 = vperm.slane %v3610, 0
    %v4248 = vadd.f32 %v4243, %v4246
    %v4249 = vadd.f32 %v4244, %v4246
    %s4250 = scalar_lea.vmem %s25, 32
    %4251 = vst.msk [vmem:[%s4250] sm:$0xff] %vm77, %v3680
    %4252 = vst.msk [vmem:[%s4250 + $0x8] sm:$0xff] %vm77, %v3683
    %4253 = vst.msk [vmem:[%s4250 + $0x10] sm:$0xff] %vm77, %v3686
    %4254 = vst.msk [vmem:[%s4250 + $0x18] sm:$0xff] %vm77, %v3689
    %s4255 = scalar_lea.vmem %s26, 32
    %4256 = vst.msk [vmem:[%s4255] sm:$0xff] %vm77, %v3753
    %4257 = vst.msk [vmem:[%s4255 + $0x8] sm:$0xff] %vm77, %v3755
    %4258 = vst.msk [vmem:[%s4255 + $0x10] sm:$0xff] %vm77, %v3757
    %4259 = vst.msk [vmem:[%s4255 + $0x18] sm:$0xff] %vm77, %v3759
    %v4260 = vadd.f32 %v4248, %v3595
    %v4261 = vadd.f32 %v4249, %v3596
    %s4262 = scalar_lea.vmem %s12, 5
    %v4263 = vld [vmem:[%s4262] sm:$0x1]
    %s4264 = scalar_lea.vmem %s13, 5
    %v4265 = vld [vmem:[%s4264] sm:$0x1]
    %v4266 = vsel %vm77, %v4260, 0.0
    %4267 = vadd.xlane.f32.xlu0 %v4266
    %v4268 = vpop.xlane.xlu0 %4267
    %v4269 = vsel %vm77, %v4261, 0.0
    %4270 = vadd.xlane.f32.xlu0 %v4269
    %v4271 = vpop.xlane.xlu0 %4270
    %v4272 = vmul.f32 %v4268, %v90
    %v4273 = vmul.f32 %v4271, %v90
    %v4274 = vsub.f32 %v4260, %v4272
    %v4275 = vsub.f32 %v4261, %v4273
    %v4276 = vmul.f32 %v4274, %v4274
    %v4277 = vmul.f32 %v4275, %v4275
    %v4278 = vsel %vm77, %v4276, 0.0
    %4279 = vadd.xlane.f32.xlu0 %v4278
    %v4280 = vpop.xlane.xlu0 %4279
    %v4281 = vsel %vm77, %v4277, 0.0
    %4282 = vadd.xlane.f32.xlu0 %v4281
    %v4283 = vpop.xlane.xlu0 %4282
    %v4284 = vmul.f32 %v4280, %v90
    %v4285 = vmul.f32 %v4283, %v90
    %v4286 = vadd.f32 %v4284, 1e-05
    %v4287 = vadd.f32 %v4285, 1e-05
    %v4288 = vrsqrt.pop %v4286
    %v4289 = vmul.f32 %v4288, %v4286
    %v4290 = vmul.f32 %v4289, %v4288
    %v4291 = vmul.f32 0.5, %v4290
    %v4292 = vsub.f32 1.5, %v4291
    %v4293 = vmul.f32 %v4288, %v4292
    %vm4294 = vweird.f32 %v4286
    %vm4295 = vweird.f32 %v4288
    %vm4296 = vmor %vm4294, %vm4295
    %v4297 = vsel %vm4296, %v4288, %v4293
    %v4298 = vrsqrt.pop %v4287
    %v4299 = vmul.f32 %v4298, %v4287
    %v4300 = vmul.f32 %v4299, %v4298
    %v4301 = vmul.f32 0.5, %v4300
    %v4302 = vsub.f32 1.5, %v4301
    %v4303 = vmul.f32 %v4298, %v4302
    %vm4304 = vweird.f32 %v4287
    %vm4305 = vweird.f32 %v4298
    %vm4306 = vmor %vm4304, %vm4305
    %v4307 = vsel %vm4306, %v4298, %v4303
    %v4308 = vmul.f32 %v4274, %v4297
    %v4309 = vmul.f32 %v4275, %v4307
    %v4311 = vperm.slane %v4263, 0
    %v4313 = vmul.f32 %v4308, %v4311
    %v4314 = vmul.f32 %v4309, %v4311
    %v4316 = vperm.slane %v4265, 0
    %v4318 = vadd.f32 %v4313, %v4316
    %v4319 = vadd.f32 %v4314, %v4316
    %s4320 = scalar_lea.vmem %s14, 32
    %v4321 = vld [vmem:[%s4320] sm:$0xff]
    %v4322 = vld [vmem:[%s4320 + $0x8] sm:$0xff]
    %v4323 = vld [vmem:[%s4320 + $0x10] sm:$0xff]
    %v4324 = vld [vmem:[%s4320 + $0x18] sm:$0xff]
    %s4325 = scalar_lea.vmem %s15, 1
    %v4326 = vld [vmem:[%s4325] sm:$0x1]
    %v4328 = vperm.slane %v4326, 0
    %v4331 = vsel %vm77, %v4318, 0
    %v4334 = vsel %vm77, %v4319, 0
    %4336 = vmatpush.msra.mxu0 0.0
    %4337 = vmatpush.msra.mxu0 0.0
    %4338 = vmatpush.msra.mxu0 0.0
    %4339 = vmatpush.msra.mxu0 0.0
    %4340 = vmatpush.msra.mxu0 0.0
    %4341 = vmatpush.msra.mxu0 0.0
    %4342 = vmatpush.msra.mxu0 0.0
    %4343 = vmatpush.msra.mxu0 0.0
    %4344 = vmatpush.msra.mxu0 0.0
    %4345 = vmatpush.msra.mxu0 0.0
    %4346 = vmatpush.msra.mxu0 0.0
    %4347 = vmatpush.msra.mxu0 0.0
    %4348 = vmatpush.msra.mxu0 %v4324
    %4349 = vmatpush.msra.mxu0 %v4323
    %4350 = vmatpush.msra.mxu0 %v4322
    %4351 = vmatpush.msra.mxu0 %v4321
    %4352 = vmatmul.f32.gmra.mxu0 %v4331
    %v4353 = vpop.f32.mrf.mxu0
    %v4354 = vadd.f32 %v4328, %v4353
    %4355 = vmatmul.f32.gmra.mxu0 %v4334
    %v4356 = vpop.f32.mrf.mxu0
    %v4357 = vadd.f32 %v4328, %v4356
    %4358 = vdwg.mxu0
    %v4359 = vmul.f32 %v4354, 0.5
    %v4360 = vmul.f32 %v4357, 0.5
    %v4361 = vmul.f32 %v4354, %v4354
    %v4362 = vmul.f32 %v4357, %v4357
    %v4363 = vmul.f32 %v4361, %v4354
    %v4364 = vmul.f32 %v4362, %v4357
    %v4365 = vmul.f32 %v4363, 0.044715
    %v4366 = vmul.f32 %v4364, 0.044715
    %v4367 = vadd.f32 %v4354, %v4365
    %v4368 = vadd.f32 %v4357, %v4366
    %v4369 = vmul.f32 %v4367, 0.7978846
    %v4370 = vmul.f32 %v4368, 0.7978846
    %v4371 = vtanh.pop %v4369
    %v4372 = vtanh.pop %v4370
    %v4373 = vadd.f32 %v4371, 1.0
    %v4374 = vadd.f32 %v4372, 1.0
    %v4375 = vmul.f32 %v4359, %v4373
    %v4376 = vmul.f32 %v4360, %v4374
    %s4377 = scalar_lea.vmem %s16, 64
    %v4378 = vld [vmem:[%s4377] sm:$0xff]
    %v4379 = vld [vmem:[%s4377 + $0x8] sm:$0xff]
    %v4380 = vld [vmem:[%s4377 + $0x10] sm:$0xff]
    %v4381 = vld [vmem:[%s4377 + $0x18] sm:$0xff]
    %v4382 = vld [vmem:[%s4377 + $0x20] sm:$0xff]
    %v4383 = vld [vmem:[%s4377 + $0x28] sm:$0xff]
    %v4384 = vld [vmem:[%s4377 + $0x30] sm:$0xff]
    %v4385 = vld [vmem:[%s4377 + $0x38] sm:$0xff]
    %s4386 = scalar_lea.vmem %s17, 1
    %v4387 = vld [vmem:[%s4386] sm:$0x1]
    %v4389 = vperm.slane %v4387, 0
    %v4392 = vsel %vm2229, %v4375, 0
    %v4395 = vsel %vm2229, %v4376, 0
    %4397 = vmatpush.msra.mxu0 0.0
    %4398 = vmatpush.msra.mxu0 0.0
    %4399 = vmatpush.msra.mxu0 0.0
    %4400 = vmatpush.msra.mxu0 0.0
    %4401 = vmatpush.msra.mxu0 0.0
    %4402 = vmatpush.msra.mxu0 0.0
    %4403 = vmatpush.msra.mxu0 0.0
    %4404 = vmatpush.msra.mxu0 0.0
    %4405 = vmatpush.msra.mxu0 %v4385
    %4406 = vmatpush.msra.mxu0 %v4384
    %4407 = vmatpush.msra.mxu0 %v4383
    %4408 = vmatpush.msra.mxu0 %v4382
    %4409 = vmatpush.msra.mxu0 %v4381
    %4410 = vmatpush.msra.mxu0 %v4380
    %4411 = vmatpush.msra.mxu0 %v4379
    %4412 = vmatpush.msra.mxu0 %v4378
    %4413 = vmatmul.f32.gmra.mxu0 %v4392
    %v4414 = vpop.f32.mrf.mxu0
    %v4415 = vadd.f32 %v4389, %v4414
    %4416 = vmatmul.f32.gmra.mxu0 %v4395
    %v4417 = vpop.f32.mrf.mxu0
    %v4418 = vadd.f32 %v4389, %v4417
    %4419 = vdwg.mxu0
    %v4420 = vadd.f32 %v4415, %v4318
    %v4421 = vadd.f32 %v4418, %v4319
    %s4422 = scalar_lea.vmem %s18, 1
    %v4423 = vld [vmem:[%s4422] sm:$0x1]
    %s4424 = scalar_lea.vmem %s19, 1
    %v4425 = vld [vmem:[%s4424] sm:$0x1]
    %v4426 = vsel %vm77, %v4420, 0.0
    %4427 = vadd.xlane.f32.xlu0 %v4426
    %v4428 = vpop.xlane.xlu0 %4427
    %v4429 = vsel %vm77, %v4421, 0.0
    %4430 = vadd.xlane.f32.xlu0 %v4429
    %v4431 = vpop.xlane.xlu0 %4430
    %v4432 = vmul.f32 %v4428, %v90
    %v4433 = vmul.f32 %v4431, %v90
    %v4434 = vsub.f32 %v4420, %v4432
    %v4435 = vsub.f32 %v4421, %v4433
    %v4436 = vmul.f32 %v4434, %v4434
    %v4437 = vmul.f32 %v4435, %v4435
    %v4438 = vsel %vm77, %v4436, 0.0
    %4439 = vadd.xlane.f32.xlu0 %v4438
    %v4440 = vpop.xlane.xlu0 %4439
    %v4441 = vsel %vm77, %v4437, 0.0
    %4442 = vadd.xlane.f32.xlu0 %v4441
    %v4443 = vpop.xlane.xlu0 %4442
    %v4444 = vmul.f32 %v4440, %v90
    %v4445 = vmul.f32 %v4443, %v90
    %v4446 = vadd.f32 %v4444, 1e-05
    %v4447 = vadd.f32 %v4445, 1e-05
    %v4448 = vrsqrt.pop %v4446
    %v4449 = vmul.f32 %v4448, %v4446
    %v4450 = vmul.f32 %v4449, %v4448
    %v4451 = vmul.f32 0.5, %v4450
    %v4452 = vsub.f32 1.5, %v4451
    %v4453 = vmul.f32 %v4448, %v4452
    %vm4454 = vweird.f32 %v4446
    %vm4455 = vweird.f32 %v4448
    %vm4456 = vmor %vm4454, %vm4455
    %v4457 = vsel %vm4456, %v4448, %v4453
    %v4458 = vrsqrt.pop %v4447
    %v4459 = vmul.f32 %v4458, %v4447
    %v4460 = vmul.f32 %v4459, %v4458
    %v4461 = vmul.f32 0.5, %v4460
    %v4462 = vsub.f32 1.5, %v4461
    %v4463 = vmul.f32 %v4458, %v4462
    %vm4464 = vweird.f32 %v4447
    %vm4465 = vweird.f32 %v4458
    %vm4466 = vmor %vm4464, %vm4465
    %v4467 = vsel %vm4466, %v4458, %v4463
    %v4468 = vmul.f32 %v4434, %v4457
    %v4469 = vmul.f32 %v4435, %v4467
    %v4471 = vperm.slane %v4423, 0
    %v4473 = vmul.f32 %v4468, %v4471
    %v4474 = vmul.f32 %v4469, %v4471
    %v4476 = vperm.slane %v4425, 0
    %v4478 = vadd.f32 %v4473, %v4476
    %v4479 = vadd.f32 %v4474, %v4476
    %4480 = vst.msk [vmem:[#allocation2] sm:$0xff] %vm77, %v4478
    %4481 = vst.msk [vmem:[#allocation2 + $0x8] sm:$0xff] %vm77, %v4479
    // Predicated region
    $region82: #{fact_bart_decoder_forward.1} parent=1 // pred_check
      _
    $region83: #{fact_bart_decoder_forward.1} parent=1 // pred_check_branch
      %4483 = sbr.rel (0) target = $region85
    $region84: #{fact_bart_decoder_forward.1} parent=1 // pred_region
      %4485 = vsyncadd [#allocation3], 0
      %s4486 = sshll.u32 [#allocation2], 4
      %s4487 = int_to_ptr.vmem [resolvable:$true] %s4486
      %s4488 = sshll.u32 %s20, 4
      %s4489 = int_to_ptr.hbm [resolvable:$true] %s4488
      %4494 = dma.vmem_to_hbm [thread:$0]  %s4487, 256, %s4489, [#allocation3], 128, 128, 8
    $region85: #{fact_bart_decoder_forward.1} parent=1 // pred_fallthru
      _
    // Predicated region
    $region86: #{fact_bart_decoder_forward.1} parent=1 // pred_check
      _
    $region87: #{fact_bart_decoder_forward.1} parent=1 // pred_check_branch
      %4496 = sbr.rel (0) target = $region89
    $region88: #{fact_bart_decoder_forward.1} parent=1 // pred_region
      _
    $region89: #{fact_bart_decoder_forward.1} parent=1 // pred_fallthru
      _
    // Predicated region
    $region90: #{fact_bart_decoder_forward.1} parent=1 // pred_check
      _
    $region91: #{fact_bart_decoder_forward.1} parent=1 // pred_check_branch
      %4498 = sbr.rel (0) target = $region93
    $region92: #{fact_bart_decoder_forward.1} parent=1 // pred_region
      _
    $region93: #{fact_bart_decoder_forward.1} parent=1 // pred_fallthru
      _
    // Predicated region
    $region94: #{fact_bart_decoder_forward.1} parent=1 // pred_check
      _
    $region95: #{fact_bart_decoder_forward.1} parent=1 // pred_check_branch
      %4500 = sbr.rel (0) target = $region97
    $region96: #{fact_bart_decoder_forward.1} parent=1 // pred_region
      _
    $region97: #{fact_bart_decoder_forward.1} parent=1 // pred_fallthru
      _
    // Predicated region
    $region98: #{fact_bart_decoder_forward.1} parent=1 // pred_check
      _
    $region99: #{fact_bart_decoder_forward.1} parent=1 // pred_check_branch
      %4502 = sbr.rel (0) target = $region101
    $region100: #{fact_bart_decoder_forward.1} parent=1 // pred_region
      _
    $region101: #{fact_bart_decoder_forward.1} parent=1 // pred_fallthru
      _
    // Predicated region
    $region102: #{fact_bart_decoder_forward.1} parent=1 // pred_check
      _
    $region103: #{fact_bart_decoder_forward.1} parent=1 // pred_check_branch
      %4504 = sbr.rel (0) target = $region105
    $region104: #{fact_bart_decoder_forward.1} parent=1 // pred_region
      _
    $region105: #{fact_bart_decoder_forward.1} parent=1 // pred_fallthru
      _
    // Predicated region
    $region106: #{fact_bart_decoder_forward.1} parent=1 // pred_check
      _
    $region107: #{fact_bart_decoder_forward.1} parent=1 // pred_check_branch
      %4506 = sbr.rel (0) target = $region109
    $region108: #{fact_bart_decoder_forward.1} parent=1 // pred_region
      _
    $region109: #{fact_bart_decoder_forward.1} parent=1 // pred_fallthru
      _
    // Predicated region
    $region110: #{fact_bart_decoder_forward.1} parent=1 // pred_check
      _
    $region111: #{fact_bart_decoder_forward.1} parent=1 // pred_check_branch
      %4508 = sbr.rel (0) target = $region113
    $region112: #{fact_bart_decoder_forward.1} parent=1 // pred_region
      %4510 = dma.done [#allocation3], 256
    $region113: #{fact_bart_decoder_forward.1} parent=1 // pred_fallthru
      _
    // Predicated region
    $region114: #{fact_bart_decoder_forward.1} parent=1 // pred_check
      _
    $region115: #{fact_bart_decoder_forward.1} parent=1 // pred_check_branch
      %4512 = sbr.rel (0) target = $region117
    $region116: #{fact_bart_decoder_forward.1} parent=1 // pred_region
      _
    $region117: #{fact_bart_decoder_forward.1} parent=1 // pred_fallthru
      _
    // Predicated region
    $region118: #{fact_bart_decoder_forward.1} parent=1 // pred_check
      _
    $region119: #{fact_bart_decoder_forward.1} parent=1 // pred_check_branch
      %4514 = sbr.rel (0) target = $region121
    $region120: #{fact_bart_decoder_forward.1} parent=1 // pred_region
      _
    $region121: #{fact_bart_decoder_forward.1} parent=1 // pred_fallthru
      _
    // Predicated region
    $region122: #{fact_bart_decoder_forward.1} parent=1 // pred_check
      _
    $region123: #{fact_bart_decoder_forward.1} parent=1 // pred_check_branch
      %4516 = sbr.rel (0) target = $region125
    $region124: #{fact_bart_decoder_forward.1} parent=1 // pred_region
      _
    $region125: #{fact_bart_decoder_forward.1} parent=1 // pred_fallthru
      _
    // Predicated region
    $region126: #{fact_bart_decoder_forward.1} parent=1 // pred_check
      _
    $region127: #{fact_bart_decoder_forward.1} parent=1 // pred_check_branch
      %4518 = sbr.rel (0) target = $region129
    $region128: #{fact_bart_decoder_forward.1} parent=1 // pred_region
      _
    $region129: #{fact_bart_decoder_forward.1} parent=1 // pred_fallthru
      _
    // Predicated region
    $region130: #{fact_bart_decoder_forward.1} parent=1 // pred_check
      _
    $region131: #{fact_bart_decoder_forward.1} parent=1 // pred_check_branch
      %4520 = sbr.rel (0) target = $region133
    $region132: #{fact_bart_decoder_forward.1} parent=1 // pred_region
      _
    $region133: #{fact_bart_decoder_forward.1} parent=1 // pred_fallthru
      _
    // Predicated region
    $region134: #{fact_bart_decoder_forward.1} parent=1 // pred_check
      _
    $region135: #{fact_bart_decoder_forward.1} parent=1 // pred_check_branch
      %4522 = sbr.rel (0) target = $region137
    $region136: #{fact_bart_decoder_forward.1} parent=1 // pred_region
      _
    $region137: #{fact_bart_decoder_forward.1} parent=1 // pred_fallthru
      _
    %4523 = vsyncpa [#allocation3], 1

</llo_original>
